<compile_context>
chip_gen: v7x
topology: tpu7x:2x2x1
jax: 0.10.0
libtpu: 0.0.40
codegen_flags: <defaults>
</compile_context>

<pallas_src>
import functools

import jax
import jax.numpy as jnp
from jax.experimental import pallas as pl
from jax.experimental.pallas import tpu as pltpu


# ---------------------------------------------------------------------------
# Per-generation VMEM budgets / tiling constants
# ---------------------------------------------------------------------------
def _vmem_capacity_bytes():
    try:
        return int(pltpu.get_tpu_info().vmem_capacity_bytes)
    except Exception:
        return 64 * 1024 * 1024            # conservative default (v7x-sized)


_VMEM_CAP = _vmem_capacity_bytes()
if _VMEM_CAP >= 100 * 1024 * 1024:          # v5e / v6e: 128 MiB physical VMEM
    _VMEM_LIMIT = 100 * 1024 * 1024
    _XW_RESIDENT_MAX = 40 * 1024 * 1024     # safe even if the input is double-buffered
else:                                       # v7x: 64 MiB physical VMEM (or unknown)
    _VMEM_LIMIT = 48 * 1024 * 1024
    _XW_RESIDENT_MAX = 18 * 1024 * 1024

TM_AGG = 256           # aggregation row tile (XW-resident path)
TM_AGG_STREAM = 512    # larger row tile when XW must be k-slab streamed (fewer re-fetches)
TK_MAX = 2048          # max reduction tile over A_hat columns


def _round_up(x, m):
    return (x + m - 1) // m * m


def _pick_tile(n, candidates):
    for c in candidates:
        if n % c == 0:
            return c
    return n


# ---------------------------------------------------------------------------
# Kernel 1: row-tiled  XW = X @ W   (bf16 in, f32 MXU accumulate, bf16 out)
# ---------------------------------------------------------------------------
def _xw_kernel(x_ref, w_ref, o_ref):
    o_ref[...] = jnp.dot(
        x_ref[...], w_ref[...], preferred_element_type=jnp.float32
    ).astype(o_ref.dtype)


def matmul_rows(x, w, *, tm):
    n_pad, f_in = x.shape
    f_out = w.shape[1]
    return pl.pallas_call(
        _xw_kernel,
        out_shape=jax.ShapeDtypeStruct((n_pad, f_out), jnp.bfloat16),
        grid_spec=pltpu.PrefetchScalarGridSpec(
            num_scalar_prefetch=0,
            grid=(n_pad // tm,),
            in_specs=[
                pl.BlockSpec((tm, f_in), lambda i: (i, 0)),
                pl.BlockSpec((f_in, f_out), lambda i: (0, 0)),   # weight resident
            ],
            out_specs=pl.BlockSpec((tm, f_out), lambda i: (i, 0)),
        ),
        compiler_params=pltpu.CompilerParams(
            dimension_semantics=("parallel",),
            vmem_limit_bytes=_VMEM_LIMIT,
        ),
    )(x, w)


# ---------------------------------------------------------------------------
# Kernel 2: row-tiled  XW2 = relu(h * scale + shift) @ W2
#           (BatchNorm folded into scale/shift outside the kernel)
# ---------------------------------------------------------------------------
def _bn_relu_xw_kernel(h_ref, scale_ref, shift_ref, w_ref, o_ref):
    h = h_ref[...].astype(jnp.float32)
    h = jnp.maximum(h * scale_ref[...] + shift_ref[...], 0.0)
    o_ref[...] = jnp.dot(
        h.astype(jnp.bfloat16), w_ref[...], preferred_element_type=jnp.float32
    ).astype(o_ref.dtype)


def bn_relu_matmul_rows(h, scale, shift, w, *, tm):
    n_pad, f_in = h.shape
    f_out = w.shape[1]
    vec_spec = pl.BlockSpec((1, f_in), lambda i: (0, 0))
    return pl.pallas_call(
        _bn_relu_xw_kernel,
        out_shape=jax.ShapeDtypeStruct((n_pad, f_out), jnp.bfloat16),
        grid_spec=pltpu.PrefetchScalarGridSpec(
            num_scalar_prefetch=0,
            grid=(n_pad // tm,),
            in_specs=[
                pl.BlockSpec((tm, f_in), lambda i: (i, 0)),
                vec_spec, vec_spec,
                pl.BlockSpec((f_in, f_out), lambda i: (0, 0)),
            ],
            out_specs=pl.BlockSpec((tm, f_out), lambda i: (i, 0)),
        ),
        compiler_params=pltpu.CompilerParams(
            dimension_semantics=("parallel",),
            vmem_limit_bytes=_VMEM_LIMIT,
        ),
    )(h, scale, shift, w)


# ---------------------------------------------------------------------------
# Kernel 3: tiled aggregation  H = A_hat @ XW + b   (+ optional BN partial stats)
#   grid = (rows "parallel", reduction "arbitrary"); f32 accumulator scratch.
#   XW is either fully VMEM-resident (constant index_map -> one DMA) or k-slab
#   streamed when it does not fit the per-generation budget.
# ---------------------------------------------------------------------------
def _agg_kernel(a_ref, xw_ref, b_ref, *rest, n_valid, with_stats, tk, xw_resident):
    if with_stats:
        o_ref, psum_ref, psumsq_ref, acc_ref = rest
    else:
        o_ref, acc_ref = rest

    # NOTE: all program_id / num_programs calls stay at the kernel top level
    # (never inside pl.when closures) so interpret-mode lowering works too.
    m_idx = pl.program_id(0)
    k_idx = pl.program_id(1)
    last_k = pl.num_programs(1) - 1

    @pl.when(k_idx == 0)
    def _():
        acc_ref[...] = jnp.zeros_like(acc_ref)

    if xw_resident:
        xw_blk = xw_ref[pl.ds(k_idx * tk, tk), :]
    else:
        xw_blk = xw_ref[...]

    acc_ref[...] += jnp.dot(a_ref[...], xw_blk, preferred_element_type=jnp.float32)

    @pl.when(k_idx == last_k)
    def _():
        tm, f = acc_ref.shape
        h = acc_ref[...] + b_ref[...]
        o_ref[...] = h.astype(o_ref.dtype)
        if with_stats:
            # Padded rows (only present in the last row tile) equal the bias vector;
            # mask them out of the batch statistics with a cheap (tm, 1) compare.
            rows = m_idx * tm + jax.lax.broadcasted_iota(jnp.int32, (tm, 1), 0)
            hm = jnp.where(rows < n_valid, h, 0.0)
            s = jnp.sum(hm, axis=0, keepdims=True)        # per-feature partial sum
            s2 = jnp.sum(hm * hm, axis=0, keepdims=True)  # per-feature partial sum of squares
            lane = jax.lax.broadcasted_iota(jnp.int32, (8, f), 0)
            psum_ref[...] = jnp.where(lane == 0, s, 0.0)
            psumsq_ref[...] = jnp.where(lane == 0, s2, 0.0)


def gcn_aggregate(a_hat, xw, bias, *, n_valid, with_stats, out_dtype):
    n_pad = a_hat.shape[0]
    f_pad = xw.shape[1]

    xw_bytes = n_pad * f_pad * 2                       # bf16
    xw_resident = xw_bytes <= _XW_RESIDENT_MAX

    tm = _pick_tile(n_pad, (TM_AGG,) if xw_resident else (TM_AGG_STREAM, TM_AGG))
    tk = _pick_tile(n_pad, (TK_MAX, 1024, 512, 256))
    grid_m, grid_k = n_pad // tm, n_pad // tk

    if xw_resident:
        # Full-array block with a constant index_map: DMA'd once, stays in VMEM
        # for the whole (m, k) grid -> no per-row-tile re-streaming of XW.
        xw_spec = pl.BlockSpec((n_pad, f_pad), lambda m, k: (0, 0))
    else:
        xw_spec = pl.BlockSpec((tk, f_pad), lambda m, k: (k, 0))

    h_shape = jax.ShapeDtypeStruct((n_pad, f_pad), out_dtype)
    h_spec = pl.BlockSpec((tm, f_pad), lambda m, k: (m, 0))
    if with_stats:
        stat_shape = jax.ShapeDtypeStruct((grid_m * 8, f_pad), jnp.float32)
        stat_spec = pl.BlockSpec((8, f_pad), lambda m, k: (m, 0))
        out_shape = (h_shape, stat_shape, stat_shape)
        out_specs = (h_spec, stat_spec, stat_spec)
    else:
        out_shape = h_shape
        out_specs = h_spec

    kernel = functools.partial(
        _agg_kernel, n_valid=n_valid, with_stats=with_stats,
        tk=tk, xw_resident=xw_resident)

    # TODO(synk): sweep pipeline_mode=pl.Buffered(3) on the A_hat spec if DMA issue
    # latency ever shows up in the profile (kept at default depth here for portability).
    return pl.pallas_call(
        kernel,
        out_shape=out_shape,
        grid_spec=pltpu.PrefetchScalarGridSpec(
            num_scalar_prefetch=0,
            grid=(grid_m, grid_k),
            in_specs=[
                pl.BlockSpec((tm, tk), lambda m, k: (m, k)),   # A_hat tile (streamed)
                xw_spec,                                       # XW (resident or k-slab)
                pl.BlockSpec((1, f_pad), lambda m, k: (0, 0)), # bias (resident)
            ],
            out_specs=out_specs,
            scratch_shapes=[pltpu.VMEM((tm, f_pad), jnp.float32)],
        ),
        compiler_params=pltpu.CompilerParams(
            dimension_semantics=("parallel", "arbitrary"),
            vmem_limit_bytes=_VMEM_LIMIT,
        ),
    )(a_hat, xw, bias)


# ---------------------------------------------------------------------------
# Glue: dense symmetric-normalized adjacency (PyG gcn_norm semantics:
# add_remaining_self_loops, D^-1/2 (A + I_missing) D^-1/2, sum aggregation into dst).
# Built ONCE per graph (outside the jitted forward), padded and cast to bf16.
# ---------------------------------------------------------------------------
def build_normalized_adjacency(edge_index, num_nodes, n_pad):
    src, dst = edge_index[0], edge_index[1]
    a = jnp.zeros((num_nodes, num_nodes), jnp.float32).at[dst, src].add(1.0)
    diag = jnp.diagonal(a)
    a = a + jnp.diag(jnp.where(diag > 0.0, 0.0, 1.0))   # only add *missing* self-loops
    deg = jnp.sum(a, axis=1)                             # in-degree incl. self-loop
    dinv = jnp.where(deg > 0.0, jax.lax.rsqrt(deg), 0.0)
    a_hat = dinv[:, None] * a * dinv[None, :]
    return jnp.pad(a_hat, ((0, n_pad - num_nodes),
                           (0, n_pad - num_nodes))).astype(jnp.bfloat16)


# ---------------------------------------------------------------------------
# GCN2 forward:  gcn1 (batch_norm=True, relu) -> gcn2 (activation='none')
# ---------------------------------------------------------------------------
def gcn2_forward(x, a_hat_pad, params):
    n, f_in = x.shape
    n_pad = a_hat_pad.shape[0]
    f_hid = params["w1"].shape[1]
    f_out = params["w2"].shape[1]

    fin_p = _round_up(f_in, 128)
    fh_p = _round_up(f_hid, 128)
    fo_p = _round_up(f_out, 128)
    tm_row = _pick_tile(n_pad, (1024, 512, 256))

    # Pad + cast the streamed operands to bf16 (f32 accumulation inside kernels).
    x_p = jnp.pad(x, ((0, n_pad - n), (0, fin_p - f_in))).astype(jnp.bfloat16)
    w1_p = jnp.pad(params["w1"], ((0, fin_p - f_in), (0, fh_p - f_hid))).astype(jnp.bfloat16)
    b1_p = jnp.pad(params["b1"], ((0, 0), (0, fh_p - f_hid)))
    g1_p = jnp.pad(params["gamma1"], ((0, 0), (0, fh_p - f_hid)))
    be1_p = jnp.pad(params["beta1"], ((0, 0), (0, fh_p - f_hid)))
    w2_p = jnp.pad(params["w2"], ((0, fh_p - f_hid), (0, fo_p - f_out))).astype(jnp.bfloat16)
    b2_p = jnp.pad(params["b2"], ((0, 0), (0, fo_p - f_out)))

    # ---- layer 1: GCNConv (+ partial batch statistics) ---------------------
    xw1 = matmul_rows(x_p, w1_p, tm=tm_row)                               # bf16 [n_pad, fh_p]
    h1, psum, psumsq = gcn_aggregate(a_hat_pad, xw1, b1_p, n_valid=n,
                                     with_stats=True, out_dtype=jnp.bfloat16)

    # BatchNorm1d finalize (training-mode batch statistics, biased variance),
    # folded into a single scale/shift pair consumed by the fused layer-2 kernel.
    mean = jnp.sum(psum, axis=0, keepdims=True) / n
    var = jnp.maximum(jnp.sum(psumsq, axis=0, keepdims=True) / n - mean * mean, 0.0)
    scale = g1_p * jax.lax.rsqrt(var + 1e-5)
    shift = be1_p - mean * scale

    # ---- layer 2: fused BN + ReLU + X@W2, then GCNConv aggregation ---------
    xw2 = bn_relu_matmul_rows(h1, scale, shift, w2_p, tm=tm_row)          # bf16 [n_pad, fo_p]
    out = gcn_aggregate(a_hat_pad, xw2, b2_p, n_valid=n,
                        with_stats=False, out_dtype=jnp.float32)          # f32 [n_pad, fo_p]

    return out[:n, :f_out]


def init_params(key, in_features, hidden_feat, out_features):
    k1, k2 = jax.random.split(key)
    scale1 = 1.0 / jnp.sqrt(jnp.float32(in_features))
    scale2 = 1.0 / jnp.sqrt(jnp.float32(hidden_feat))
    return {
        "w1": jax.random.normal(k1, (in_features, hidden_feat), jnp.float32) * scale1,
        "b1": jnp.zeros((1, hidden_feat), jnp.float32),
        "gamma1": jnp.ones((1, hidden_feat), jnp.float32),
        "beta1": jnp.zeros((1, hidden_feat), jnp.float32),
        "w2": jax.random.normal(k2, (hidden_feat, out_features), jnp.float32) * scale2,
        "b2": jnp.zeros((1, out_features), jnp.float32),
    }


if __name__ == "__main__":
    # Small synthetic graph consistent with the module's forward:
    #   data.x: [num_nodes, in_features], data.edge_index: [2, num_edges]
    num_nodes = 32
    in_features = 16
    hidden_feat = 32      # (module default 256; kept small for the synthetic run)
    out_features = 8
    num_edges = 64

    key = jax.random.PRNGKey(0)
    kx, ke, kp = jax.random.split(key, 3)

    x = jax.random.normal(kx, (num_nodes, in_features), jnp.float32)
    edge_index = jax.random.randint(ke, (2, num_edges), 0, num_nodes, dtype=jnp.int32)
    params = init_params(kp, in_features, hidden_feat, out_features)

    # Build the dense normalized adjacency once, outside the jitted forward.
    n_pad = _round_up(num_nodes, TM_AGG)
    a_hat = build_normalized_adjacency(edge_index, num_nodes, n_pad)
    a_hat = jax.block_until_ready(a_hat)

    out = jax.jit(gcn2_forward)(x, a_hat, params)
    out = jax.block_until_ready(out)

    assert out.shape == (num_nodes, out_features)
    assert bool(jnp.all(jnp.isfinite(out)))
    print("KERNEL_OK")
</pallas_src>

<mosaic_0001>
module attributes {stable_mosaic.version = 11 : i64} {
  func.func @_xw_kernel(%arg0: i32, %arg1: memref<256x128xbf16, #tpu.memory_space<vmem>>, %arg2: memref<128x128xbf16, #tpu.memory_space<vmem>>, %arg3: memref<256x128xbf16, #tpu.memory_space<vmem>>) attributes {dimension_semantics = [#tpu.dimension_semantics<parallel>], iteration_bounds = array<i64: 1>, scalar_prefetch = 0 : i64, scratch_operands = 0 : i64, tpu.core_type = #tpu.core_type<tc>, window_params = [{transform_indices = @transform_0, window_bounds = array<i64: 256, 128>}, {pipeline_mode = #tpu.pipeline_mode<synchronous>, transform_indices = @transform_1, window_bounds = array<i64: 128, 128>}, {transform_indices = @transform_2, window_bounds = array<i64: 256, 128>}]} {
    %c0 = arith.constant 0 : index
    %c0_0 = arith.constant 0 : index
    %0 = vector.load %arg1[%c0, %c0_0] : memref<256x128xbf16, #tpu.memory_space<vmem>>, vector<256x128xbf16>
    %c0_1 = arith.constant 0 : index
    %c0_2 = arith.constant 0 : index
    %1 = vector.load %arg2[%c0_1, %c0_2] : memref<128x128xbf16, #tpu.memory_space<vmem>>, vector<128x128xbf16>
    %cst = arith.constant dense<0.000000e+00> : vector<256x128xf32>
    %2 = tpu.matmul %0, %1, %cst {dimension_numbers = #tpu.dot_dimension_numbers<[1], [0], [0], [1], [0, 0, 1, 1], [], []>} : vector<256x128xbf16>, vector<128x128xbf16>, vector<256x128xf32> -> vector<256x128xf32>
    %3 = arith.truncf %2 : vector<256x128xf32> to vector<256x128xbf16>
    %c0_3 = arith.constant 0 : index
    %c0_4 = arith.constant 0 : index
    %4 = vector.load %arg3[%c0_3, %c0_4] : memref<256x128xbf16, #tpu.memory_space<vmem>>, vector<256x128xbf16>
    tpu.vector_store %arg3[%c0_3, %c0_4], %3 {strides = array<i32>} : memref<256x128xbf16, #tpu.memory_space<vmem>>, vector<256x128xbf16>,
    return
  }
  func.func @transform_0(%arg0: i32) -> (i32, i32) {
    %c0_i32 = arith.constant 0 : i32
    %c0_i32_0 = arith.constant 0 : i32
    return %arg0, %c0_i32 : i32, i32
  }
  func.func @transform_1(%arg0: i32) -> (i32, i32) {
    %c0_i32 = arith.constant 0 : i32
    %c0_i32_0 = arith.constant 0 : i32
    %c0_i32_1 = arith.constant 0 : i32
    return %c0_i32, %c0_i32_0 : i32, i32
  }
  func.func @transform_2(%arg0: i32) -> (i32, i32) {
    %c0_i32 = arith.constant 0 : i32
    %c0_i32_0 = arith.constant 0 : i32
    return %arg0, %c0_i32 : i32, i32
  }
}

module attributes {stable_mosaic.version = 11 : i64} {
  func.func @_agg_kernel(%arg0: i32, %arg1: i32, %arg2: memref<256x256xbf16, #tpu.memory_space<vmem>>, %arg3: memref<256x128xbf16, #tpu.memory_space<vmem>>, %arg4: memref<1x128xf32, #tpu.memory_space<vmem>>, %arg5: memref<256x128xbf16, #tpu.memory_space<vmem>>, %arg6: memref<8x128xf32, #tpu.memory_space<vmem>>, %arg7: memref<8x128xf32, #tpu.memory_space<vmem>>, %arg8: memref<256x128xf32, #tpu.memory_space<vmem>>) attributes {dimension_semantics = [#tpu.dimension_semantics<parallel>, #tpu.dimension_semantics<arbitrary>], iteration_bounds = array<i64: 1, 1>, scalar_prefetch = 0 : i64, scratch_operands = 1 : i64, tpu.core_type = #tpu.core_type<tc>, window_params = [{transform_indices = @transform_0, window_bounds = array<i64: 256, 256>}, {pipeline_mode = #tpu.pipeline_mode<synchronous>, transform_indices = @transform_1, window_bounds = array<i64: 256, 128>}, {pipeline_mode = #tpu.pipeline_mode<synchronous>, transform_indices = @transform_2, window_bounds = array<i64: 1, 128>}, {transform_indices = @transform_3, window_bounds = array<i64: 256, 128>}, {transform_indices = @transform_4, window_bounds = array<i64: 8, 128>}, {transform_indices = @transform_5, window_bounds = array<i64: 8, 128>}]} {
    %c0_i32 = arith.constant 0 : i32
    %0 = arith.cmpi eq, %arg1, %c0_i32 : i32
    %1 = arith.extui %0 : i1 to i32
    %c0_i32_0 = arith.constant 0 : i32
    %2 = arith.cmpi ne, %1, %c0_i32_0 : i32
    scf.if %2 {
      %cst_9 = arith.constant 0.000000e+00 : f32
      %14 = vector.broadcast %cst_9 : f32 to vector<256x128xf32>
      %c0_10 = arith.constant 0 : index
      %c0_11 = arith.constant 0 : index
      %15 = vector.load %arg8[%c0_10, %c0_11] : memref<256x128xf32, #tpu.memory_space<vmem>>, vector<256x128xf32>
      tpu.vector_store %arg8[%c0_10, %c0_11], %14 {strides = array<i32>} : memref<256x128xf32, #tpu.memory_space<vmem>>, vector<256x128xf32>,
    } else {
    }
    %c256_i32 = arith.constant 256 : i32
    %3 = arith.muli %arg1, %c256_i32 : i32
    %4 = arith.index_cast %3 : i32 to index
    %c0 = arith.constant 0 : index
    %5 = vector.load %arg3[%4, %c0] : memref<256x128xbf16, #tpu.memory_space<vmem>>, vector<256x128xbf16>
    %c0_1 = arith.constant 0 : index
    %c0_2 = arith.constant 0 : index
    %6 = vector.load %arg8[%c0_1, %c0_2] : memref<256x128xf32, #tpu.memory_space<vmem>>, vector<256x128xf32>
    %c0_3 = arith.constant 0 : index
    %c0_4 = arith.constant 0 : index
    %7 = vector.load %arg2[%c0_3, %c0_4] : memref<256x256xbf16, #tpu.memory_space<vmem>>, vector<256x256xbf16>
    %cst = arith.constant dense<0.000000e+00> : vector<256x128xf32>
    %8 = tpu.matmul %7, %5, %cst {dimension_numbers = #tpu.dot_dimension_numbers<[1], [0], [0], [1], [0, 0, 1, 1], [], []>} : vector<256x256xbf16>, vector<256x128xbf16>, vector<256x128xf32> -> vector<256x128xf32>
    %9 = arith.addf %6, %8 : vector<256x128xf32>
    %c0_5 = arith.constant 0 : index
    %c0_6 = arith.constant 0 : index
    %10 = vector.load %arg8[%c0_5, %c0_6] : memref<256x128xf32, #tpu.memory_space<vmem>>, vector<256x128xf32>
    tpu.vector_store %arg8[%c0_5, %c0_6], %9 {strides = array<i32>} : memref<256x128xf32, #tpu.memory_space<vmem>>, vector<256x128xf32>,
    %c0_i32_7 = arith.constant 0 : i32
    %11 = arith.cmpi eq, %arg1, %c0_i32_7 : i32
    %12 = arith.extui %11 : i1 to i32
    %c0_i32_8 = arith.constant 0 : i32
    %13 = arith.cmpi ne, %12, %c0_i32_8 : i32
    scf.if %13 {
      %c0_9 = arith.constant 0 : index
      %c0_10 = arith.constant 0 : index
      %14 = vector.load %arg8[%c0_9, %c0_10] : memref<256x128xf32, #tpu.memory_space<vmem>>, vector<256x128xf32>
      %c0_11 = arith.constant 0 : index
      %c0_12 = arith.constant 0 : index
      %15 = vector.load %arg4[%c0_11, %c0_12] : memref<1x128xf32, #tpu.memory_space<vmem>>, vector<1x128xf32>
      %16 = vector.broadcast %15 : vector<1x128xf32> to vector<256x128xf32>
      %17 = arith.addf %14, %16 : vector<256x128xf32>
      %18 = arith.truncf %17 : vector<256x128xf32> to vector<256x128xbf16>
      %c0_13 = arith.constant 0 : index
      %c0_14 = arith.constant 0 : index
      %19 = vector.load %arg5[%c0_13, %c0_14] : memref<256x128xbf16, #tpu.memory_space<vmem>>, vector<256x128xbf16>
      tpu.vector_store %arg5[%c0_13, %c0_14], %18 {strides = array<i32>} : memref<256x128xbf16, #tpu.memory_space<vmem>>, vector<256x128xbf16>,
      %c256_i32_15 = arith.constant 256 : i32
      %20 = arith.muli %arg0, %c256_i32_15 : i32
      %21 = tpu.iota {dimensions = array<i32: 0>} : vector<256x1xi32>
      %22 = vector.broadcast %20 : i32 to vector<256x1xi32>
      %23 = arith.addi %22, %21 : vector<256x1xi32>
      %c32_i32 = arith.constant 32 : i32
      %24 = vector.broadcast %c32_i32 : i32 to vector<256x1xi32>
      %25 = arith.cmpi slt, %23, %24 : vector<256x1xi32>
      %cst_16 = arith.constant 0.000000e+00 : f32
      %26 = vector.shape_cast %25 : vector<256x1xi1> to vector<256x1xi1>
      %27 = vector.broadcast %26 : vector<256x1xi1> to vector<256x128xi1>
      %28 = vector.broadcast %cst_16 : f32 to vector<256x128xf32>
      %29 = arith.select %27, %17, %28 : vector<256x128xi1>, vector<256x128xf32>
      %cst_17 = arith.constant dense<0.000000e+00> : vector<128xf32>
      %30 = vector.multi_reduction <add>, %29, %cst_17 [0] : vector<256x128xf32> to vector<128xf32>
      %31 = vector.shape_cast %30 : vector<128xf32> to vector<1x128xf32>
      %32 = arith.mulf %29, %29 : vector<256x128xf32>
      %cst_18 = arith.constant dense<0.000000e+00> : vector<128xf32>
      %33 = vector.multi_reduction <add>, %32, %cst_18 [0] : vector<256x128xf32> to vector<128xf32>
      %34 = vector.shape_cast %33 : vector<128xf32> to vector<1x128xf32>
      %35 = tpu.iota {dimensions = array<i32: 0>} : vector<8x128xi32>
      %c0_i32_19 = arith.constant 0 : i32
      %36 = vector.broadcast %c0_i32_19 : i32 to vector<8x128xi32>
      %37 = arith.cmpi eq, %35, %36 : vector<8x128xi32>
      %cst_20 = arith.constant 0.000000e+00 : f32
      %38 = vector.shape_cast %31 : vector<1x128xf32> to vector<1x128xf32>
      %39 = vector.broadcast %38 : vector<1x128xf32> to vector<8x128xf32>
      %40 = vector.broadcast %cst_20 : f32 to vector<8x128xf32>
      %41 = arith.select %37, %39, %40 : vector<8x128xi1>, vector<8x128xf32>
      %c0_21 = arith.constant 0 : index
      %c0_22 = arith.constant 0 : index
      %42 = vector.load %arg6[%c0_21, %c0_22] : memref<8x128xf32, #tpu.memory_space<vmem>>, vector<8x128xf32>
      tpu.vector_store %arg6[%c0_21, %c0_22], %41 {strides = array<i32>} : memref<8x128xf32, #tpu.memory_space<vmem>>, vector<8x128xf32>,
      %c0_i32_23 = arith.constant 0 : i32
      %43 = vector.broadcast %c0_i32_23 : i32 to vector<8x128xi32>
      %44 = arith.cmpi eq, %35, %43 : vector<8x128xi32>
      %cst_24 = arith.constant 0.000000e+00 : f32
      %45 = vector.shape_cast %34 : vector<1x128xf32> to vector<1x128xf32>
      %46 = vector.broadcast %45 : vector<1x128xf32> to vector<8x128xf32>
      %47 = vector.broadcast %cst_24 : f32 to vector<8x128xf32>
      %48 = arith.select %44, %46, %47 : vector<8x128xi1>, vector<8x128xf32>
      %c0_25 = arith.constant 0 : index
      %c0_26 = arith.constant 0 : index
      %49 = vector.load %arg7[%c0_25, %c0_26] : memref<8x128xf32, #tpu.memory_space<vmem>>, vector<8x128xf32>
      tpu.vector_store %arg7[%c0_25, %c0_26], %48 {strides = array<i32>} : memref<8x128xf32, #tpu.memory_space<vmem>>, vector<8x128xf32>,
    } else {
    }
    return
  }
  func.func @transform_0(%arg0: i32, %arg1: i32) -> (i32, i32) {
    %c0_i32 = arith.constant 0 : i32
    return %arg0, %arg1 : i32, i32
  }
  func.func @transform_1(%arg0: i32, %arg1: i32) -> (i32, i32) {
    %c0_i32 = arith.constant 0 : i32
    %c0_i32_0 = arith.constant 0 : i32
    %c0_i32_1 = arith.constant 0 : i32
    return %c0_i32, %c0_i32_0 : i32, i32
  }
  func.func @transform_2(%arg0: i32, %arg1: i32) -> (i32, i32) {
    %c0_i32 = arith.constant 0 : i32
    %c0_i32_0 = arith.constant 0 : i32
    %c0_i32_1 = arith.constant 0 : i32
    return %c0_i32, %c0_i32_0 : i32, i32
  }
  func.func @transform_3(%arg0: i32, %arg1: i32) -> (i32, i32) {
    %c0_i32 = arith.constant 0 : i32
    %c0_i32_0 = arith.constant 0 : i32
    return %arg0, %c0_i32 : i32, i32
  }
  func.func @transform_4(%arg0: i32, %arg1: i32) -> (i32, i32) {
    %c0_i32 = arith.constant 0 : i32
    %c0_i32_0 = arith.constant 0 : i32
    return %arg0, %c0_i32 : i32, i32
  }
  func.func @transform_5(%arg0: i32, %arg1: i32) -> (i32, i32) {
    %c0_i32 = arith.constant 0 : i32
    %c0_i32_0 = arith.constant 0 : i32
    return %arg0, %c0_i32 : i32, i32
  }
}

module attributes {stable_mosaic.version = 11 : i64} {
  func.func @_bn_relu_xw_kernel(%arg0: i32, %arg1: memref<256x128xbf16, #tpu.memory_space<vmem>>, %arg2: memref<1x128xf32, #tpu.memory_space<vmem>>, %arg3: memref<1x128xf32, #tpu.memory_space<vmem>>, %arg4: memref<128x128xbf16, #tpu.memory_space<vmem>>, %arg5: memref<256x128xbf16, #tpu.memory_space<vmem>>) attributes {dimension_semantics = [#tpu.dimension_semantics<parallel>], iteration_bounds = array<i64: 1>, scalar_prefetch = 0 : i64, scratch_operands = 0 : i64, tpu.core_type = #tpu.core_type<tc>, window_params = [{transform_indices = @transform_0, window_bounds = array<i64: 256, 128>}, {pipeline_mode = #tpu.pipeline_mode<synchronous>, transform_indices = @transform_1, window_bounds = array<i64: 1, 128>}, {pipeline_mode = #tpu.pipeline_mode<synchronous>, transform_indices = @transform_2, window_bounds = array<i64: 1, 128>}, {pipeline_mode = #tpu.pipeline_mode<synchronous>, transform_indices = @transform_3, window_bounds = array<i64: 128, 128>}, {transform_indices = @transform_4, window_bounds = array<i64: 256, 128>}]} {
    %c0 = arith.constant 0 : index
    %c0_0 = arith.constant 0 : index
    %0 = vector.load %arg1[%c0, %c0_0] : memref<256x128xbf16, #tpu.memory_space<vmem>>, vector<256x128xbf16>
    %1 = arith.extf %0 : vector<256x128xbf16> to vector<256x128xf32>
    %c0_1 = arith.constant 0 : index
    %c0_2 = arith.constant 0 : index
    %2 = vector.load %arg2[%c0_1, %c0_2] : memref<1x128xf32, #tpu.memory_space<vmem>>, vector<1x128xf32>
    %3 = vector.broadcast %2 : vector<1x128xf32> to vector<256x128xf32>
    %4 = arith.mulf %1, %3 : vector<256x128xf32>
    %c0_3 = arith.constant 0 : index
    %c0_4 = arith.constant 0 : index
    %5 = vector.load %arg3[%c0_3, %c0_4] : memref<1x128xf32, #tpu.memory_space<vmem>>, vector<1x128xf32>
    %6 = vector.broadcast %5 : vector<1x128xf32> to vector<256x128xf32>
    %7 = arith.addf %4, %6 : vector<256x128xf32>
    %cst = arith.constant 0.000000e+00 : f32
    %8 = vector.broadcast %cst : f32 to vector<256x128xf32>
    %9 = arith.maximumf %7, %8 : vector<256x128xf32>
    %10 = arith.truncf %9 : vector<256x128xf32> to vector<256x128xbf16>
    %c0_5 = arith.constant 0 : index
    %c0_6 = arith.constant 0 : index
    %11 = vector.load %arg4[%c0_5, %c0_6] : memref<128x128xbf16, #tpu.memory_space<vmem>>, vector<128x128xbf16>
    %cst_7 = arith.constant dense<0.000000e+00> : vector<256x128xf32>
    %12 = tpu.matmul %10, %11, %cst_7 {dimension_numbers = #tpu.dot_dimension_numbers<[1], [0], [0], [1], [0, 0, 1, 1], [], []>} : vector<256x128xbf16>, vector<128x128xbf16>, vector<256x128xf32> -> vector<256x128xf32>
    %13 = arith.truncf %12 : vector<256x128xf32> to vector<256x128xbf16>
    %c0_8 = arith.constant 0 : index
    %c0_9 = arith.constant 0 : index
    %14 = vector.load %arg5[%c0_8, %c0_9] : memref<256x128xbf16, #tpu.memory_space<vmem>>, vector<256x128xbf16>
    tpu.vector_store %arg5[%c0_8, %c0_9], %13 {strides = array<i32>} : memref<256x128xbf16, #tpu.memory_space<vmem>>, vector<256x128xbf16>,
    return
  }
  func.func @transform_0(%arg0: i32) -> (i32, i32) {
    %c0_i32 = arith.constant 0 : i32
    %c0_i32_0 = arith.constant 0 : i32
    return %arg0, %c0_i32 : i32, i32
  }
  func.func @transform_1(%arg0: i32) -> (i32, i32) {
    %c0_i32 = arith.constant 0 : i32
    %c0_i32_0 = arith.constant 0 : i32
    %c0_i32_1 = arith.constant 0 : i32
    return %c0_i32, %c0_i32_0 : i32, i32
  }
  func.func @transform_2(%arg0: i32) -> (i32, i32) {
    %c0_i32 = arith.constant 0 : i32
    %c0_i32_0 = arith.constant 0 : i32
    %c0_i32_1 = arith.constant 0 : i32
    return %c0_i32, %c0_i32_0 : i32, i32
  }
  func.func @transform_3(%arg0: i32) -> (i32, i32) {
    %c0_i32 = arith.constant 0 : i32
    %c0_i32_0 = arith.constant 0 : i32
    %c0_i32_1 = arith.constant 0 : i32
    return %c0_i32, %c0_i32_0 : i32, i32
  }
  func.func @transform_4(%arg0: i32) -> (i32, i32) {
    %c0_i32 = arith.constant 0 : i32
    %c0_i32_0 = arith.constant 0 : i32
    return %arg0, %c0_i32 : i32, i32
  }
}

module attributes {stable_mosaic.version = 11 : i64} {
  func.func @_agg_kernel(%arg0: i32, %arg1: i32, %arg2: memref<256x256xbf16, #tpu.memory_space<vmem>>, %arg3: memref<256x128xbf16, #tpu.memory_space<vmem>>, %arg4: memref<1x128xf32, #tpu.memory_space<vmem>>, %arg5: memref<256x128xf32, #tpu.memory_space<vmem>>, %arg6: memref<256x128xf32, #tpu.memory_space<vmem>>) attributes {dimension_semantics = [#tpu.dimension_semantics<parallel>, #tpu.dimension_semantics<arbitrary>], iteration_bounds = array<i64: 1, 1>, scalar_prefetch = 0 : i64, scratch_operands = 1 : i64, tpu.core_type = #tpu.core_type<tc>, window_params = [{transform_indices = @transform_0, window_bounds = array<i64: 256, 256>}, {pipeline_mode = #tpu.pipeline_mode<synchronous>, transform_indices = @transform_1, window_bounds = array<i64: 256, 128>}, {pipeline_mode = #tpu.pipeline_mode<synchronous>, transform_indices = @transform_2, window_bounds = array<i64: 1, 128>}, {transform_indices = @transform_3, window_bounds = array<i64: 256, 128>}]} {
    %c0_i32 = arith.constant 0 : i32
    %0 = arith.cmpi eq, %arg1, %c0_i32 : i32
    %1 = arith.extui %0 : i1 to i32
    %c0_i32_0 = arith.constant 0 : i32
    %2 = arith.cmpi ne, %1, %c0_i32_0 : i32
    scf.if %2 {
      %cst_9 = arith.constant 0.000000e+00 : f32
      %14 = vector.broadcast %cst_9 : f32 to vector<256x128xf32>
      %c0_10 = arith.constant 0 : index
      %c0_11 = arith.constant 0 : index
      %15 = vector.load %arg6[%c0_10, %c0_11] : memref<256x128xf32, #tpu.memory_space<vmem>>, vector<256x128xf32>
      tpu.vector_store %arg6[%c0_10, %c0_11], %14 {strides = array<i32>} : memref<256x128xf32, #tpu.memory_space<vmem>>, vector<256x128xf32>,
    } else {
    }
    %c256_i32 = arith.constant 256 : i32
    %3 = arith.muli %arg1, %c256_i32 : i32
    %4 = arith.index_cast %3 : i32 to index
    %c0 = arith.constant 0 : index
    %5 = vector.load %arg3[%4, %c0] : memref<256x128xbf16, #tpu.memory_space<vmem>>, vector<256x128xbf16>
    %c0_1 = arith.constant 0 : index
    %c0_2 = arith.constant 0 : index
    %6 = vector.load %arg6[%c0_1, %c0_2] : memref<256x128xf32, #tpu.memory_space<vmem>>, vector<256x128xf32>
    %c0_3 = arith.constant 0 : index
    %c0_4 = arith.constant 0 : index
    %7 = vector.load %arg2[%c0_3, %c0_4] : memref<256x256xbf16, #tpu.memory_space<vmem>>, vector<256x256xbf16>
    %cst = arith.constant dense<0.000000e+00> : vector<256x128xf32>
    %8 = tpu.matmul %7, %5, %cst {dimension_numbers = #tpu.dot_dimension_numbers<[1], [0], [0], [1], [0, 0, 1, 1], [], []>} : vector<256x256xbf16>, vector<256x128xbf16>, vector<256x128xf32> -> vector<256x128xf32>
    %9 = arith.addf %6, %8 : vector<256x128xf32>
    %c0_5 = arith.constant 0 : index
    %c0_6 = arith.constant 0 : index
    %10 = vector.load %arg6[%c0_5, %c0_6] : memref<256x128xf32, #tpu.memory_space<vmem>>, vector<256x128xf32>
    tpu.vector_store %arg6[%c0_5, %c0_6], %9 {strides = array<i32>} : memref<256x128xf32, #tpu.memory_space<vmem>>, vector<256x128xf32>,
    %c0_i32_7 = arith.constant 0 : i32
    %11 = arith.cmpi eq, %arg1, %c0_i32_7 : i32
    %12 = arith.extui %11 : i1 to i32
    %c0_i32_8 = arith.constant 0 : i32
    %13 = arith.cmpi ne, %12, %c0_i32_8 : i32
    scf.if %13 {
      %c0_9 = arith.constant 0 : index
      %c0_10 = arith.constant 0 : index
      %14 = vector.load %arg6[%c0_9, %c0_10] : memref<256x128xf32, #tpu.memory_space<vmem>>, vector<256x128xf32>
      %c0_11 = arith.constant 0 : index
      %c0_12 = arith.constant 0 : index
      %15 = vector.load %arg4[%c0_11, %c0_12] : memref<1x128xf32, #tpu.memory_space<vmem>>, vector<1x128xf32>
      %16 = vector.broadcast %15 : vector<1x128xf32> to vector<256x128xf32>
      %17 = arith.addf %14, %16 : vector<256x128xf32>
      %c0_13 = arith.constant 0 : index
      %c0_14 = arith.constant 0 : index
      %18 = vector.load %arg5[%c0_13, %c0_14] : memref<256x128xf32, #tpu.memory_space<vmem>>, vector<256x128xf32>
      tpu.vector_store %arg5[%c0_13, %c0_14], %17 {strides = array<i32>} : memref<256x128xf32, #tpu.memory_space<vmem>>, vector<256x128xf32>,
    } else {
    }
    return
  }
  func.func @transform_0(%arg0: i32, %arg1: i32) -> (i32, i32) {
    %c0_i32 = arith.constant 0 : i32
    return %arg0, %arg1 : i32, i32
  }
  func.func @transform_1(%arg0: i32, %arg1: i32) -> (i32, i32) {
    %c0_i32 = arith.constant 0 : i32
    %c0_i32_0 = arith.constant 0 : i32
    %c0_i32_1 = arith.constant 0 : i32
    return %c0_i32, %c0_i32_0 : i32, i32
  }
  func.func @transform_2(%arg0: i32, %arg1: i32) -> (i32, i32) {
    %c0_i32 = arith.constant 0 : i32
    %c0_i32_0 = arith.constant 0 : i32
    %c0_i32_1 = arith.constant 0 : i32
    return %c0_i32, %c0_i32_0 : i32, i32
  }
  func.func @transform_3(%arg0: i32, %arg1: i32) -> (i32, i32) {
    %c0_i32 = arith.constant 0 : i32
    %c0_i32_0 = arith.constant 0 : i32
    return %arg0, %c0_i32 : i32, i32
  }
}

</mosaic_0001>

<llo_original>
// kernel: gcn2_forward.4
$region0: #{gcn2_forward.4}
  #allocation0 [shape = 'u32[]', space=smem, size = 0x4, offset = 0x4, fixed_abs, tag = 'smem constant byte address 0x4 - core index']
  #allocation1 [shape = 'u32[144,128]{1,0:T(1,128)}', space=vmem, size = 0x12000, scoped, tag = 'internal scratch']
  %s0 = inlined_call_operand.vmem [shape: bf16[256,128], index: 0, kind: input, shape index: {}]
  %s1 = inlined_call_operand.vmem [shape: bf16[128,128], index: 1, kind: input, shape index: {}]
  %s2 = inlined_call_operand.vmem [shape: bf16[256,128], index: 2, kind: output, shape index: {}]
  %s3 = sld [smem:[#allocation0]]
  $region18: #{gcn2_forward.4} parent=0
    _
  %s5 = ssub.s32 1, %s3
  %s6 = scalar_select 0, %s5, %s3
  // Predicated region
  $region2: #{gcn2_forward.4} parent=0 // pred_check
    _
  $region3: #{gcn2_forward.4} parent=0 // pred_check_branch
    %8 = sbr.rel (0) target = $region5
  $region4: #{gcn2_forward.4} parent=0 // pred_region
    _
  $region5: #{gcn2_forward.4} parent=0 // pred_fallthru
    _
  // Predicated region
  $region6: #{gcn2_forward.4} parent=0 // pred_check
    _
  $region7: #{gcn2_forward.4} parent=0 // pred_check_branch
    %10 = sbr.rel (0) target = $region9
  $region8: #{gcn2_forward.4} parent=0 // pred_region
    _
  $region9: #{gcn2_forward.4} parent=0 // pred_fallthru
    _
  %v12 = vld [vmem:[%s0] sm:$0xf]
  %v13 = vld [vmem:[%s0 + $0x4] sm:$0xf]
  %v14 = vld [vmem:[%s0 + $0x8] sm:$0xf]
  %v15 = vld [vmem:[%s0 + $0xc] sm:$0xf]
  %v16 = vld [vmem:[%s0 + $0x10] sm:$0xf]
  %v17 = vld [vmem:[%s0 + $0x14] sm:$0xf]
  %v18 = vld [vmem:[%s0 + $0x18] sm:$0xf]
  %v19 = vld [vmem:[%s0 + $0x1c] sm:$0xf]
  %v20 = vld [vmem:[%s0 + $0x20] sm:$0xf]
  %v21 = vld [vmem:[%s0 + $0x24] sm:$0xf]
  %v22 = vld [vmem:[%s0 + $0x28] sm:$0xf]
  %v23 = vld [vmem:[%s0 + $0x2c] sm:$0xf]
  %v24 = vld [vmem:[%s0 + $0x30] sm:$0xf]
  %v25 = vld [vmem:[%s0 + $0x34] sm:$0xf]
  %v26 = vld [vmem:[%s0 + $0x38] sm:$0xf]
  %v27 = vld [vmem:[%s0 + $0x3c] sm:$0xf]
  %v28 = vld [vmem:[%s0 + $0x40] sm:$0xf]
  %v29 = vld [vmem:[%s0 + $0x44] sm:$0xf]
  %v30 = vld [vmem:[%s0 + $0x48] sm:$0xf]
  %v31 = vld [vmem:[%s0 + $0x4c] sm:$0xf]
  %v32 = vld [vmem:[%s0 + $0x50] sm:$0xf]
  %v33 = vld [vmem:[%s0 + $0x54] sm:$0xf]
  %v34 = vld [vmem:[%s0 + $0x58] sm:$0xf]
  %v35 = vld [vmem:[%s0 + $0x5c] sm:$0xf]
  %v36 = vld [vmem:[%s0 + $0x60] sm:$0xf]
  %v37 = vld [vmem:[%s0 + $0x64] sm:$0xf]
  %v38 = vld [vmem:[%s0 + $0x68] sm:$0xf]
  %v39 = vld [vmem:[%s0 + $0x6c] sm:$0xf]
  %v40 = vld [vmem:[%s0 + $0x70] sm:$0xf]
  %v41 = vld [vmem:[%s0 + $0x74] sm:$0xf]
  %v42 = vld [vmem:[%s0 + $0x78] sm:$0xf]
  %v43 = vld [vmem:[%s0 + $0x7c] sm:$0xf]
  %v44 = vld [vmem:[%s1] sm:$0xf]
  %v45 = vld [vmem:[%s1 + $0x4] sm:$0xf]
  %v46 = vld [vmem:[%s1 + $0x8] sm:$0xf]
  %v47 = vld [vmem:[%s1 + $0xc] sm:$0xf]
  %v48 = vld [vmem:[%s1 + $0x10] sm:$0xf]
  %v49 = vld [vmem:[%s1 + $0x14] sm:$0xf]
  %v50 = vld [vmem:[%s1 + $0x18] sm:$0xf]
  %v51 = vld [vmem:[%s1 + $0x1c] sm:$0xf]
  %v52 = vld [vmem:[%s1 + $0x20] sm:$0xf]
  %v53 = vld [vmem:[%s1 + $0x24] sm:$0xf]
  %v54 = vld [vmem:[%s1 + $0x28] sm:$0xf]
  %v55 = vld [vmem:[%s1 + $0x2c] sm:$0xf]
  %v56 = vld [vmem:[%s1 + $0x30] sm:$0xf]
  %v57 = vld [vmem:[%s1 + $0x34] sm:$0xf]
  %v58 = vld [vmem:[%s1 + $0x38] sm:$0xf]
  %v59 = vld [vmem:[%s1 + $0x3c] sm:$0xf]
  %v92 = vunpack.c.l.b16 %v12
  %v93 = vunpack.c.l.b16 %v13
  %v94 = vunpack.c.l.b16 %v14
  %v95 = vunpack.c.l.b16 %v15
  %v96 = vunpack.c.l.b16 %v16
  %v97 = vunpack.c.l.b16 %v17
  %v98 = vunpack.c.l.b16 %v18
  %v99 = vunpack.c.l.b16 %v19
  %v100 = vunpack.c.l.b16 %v20
  %v101 = vunpack.c.l.b16 %v21
  %v102 = vunpack.c.l.b16 %v22
  %v103 = vunpack.c.l.b16 %v23
  %v104 = vunpack.c.l.b16 %v24
  %v105 = vunpack.c.l.b16 %v25
  %v106 = vunpack.c.l.b16 %v26
  %v107 = vunpack.c.l.b16 %v27
  %v108 = vunpack.c.l.b16 %v28
  %v109 = vunpack.c.l.b16 %v29
  %v110 = vunpack.c.l.b16 %v30
  %v111 = vunpack.c.l.b16 %v31
  %v112 = vunpack.c.l.b16 %v32
  %v113 = vunpack.c.l.b16 %v33
  %v114 = vunpack.c.l.b16 %v34
  %v115 = vunpack.c.l.b16 %v35
  %v116 = vunpack.c.l.b16 %v36
  %v117 = vunpack.c.l.b16 %v37
  %v118 = vunpack.c.l.b16 %v38
  %v119 = vunpack.c.l.b16 %v39
  %v120 = vunpack.c.l.b16 %v40
  %v121 = vunpack.c.l.b16 %v41
  %v122 = vunpack.c.l.b16 %v42
  %v123 = vunpack.c.l.b16 %v43
  %v124 = vpack.c.b16 %v93, %v92
  %v125 = vpack.c.b16 %v95, %v94
  %v126 = vpack.c.b16 %v97, %v96
  %v127 = vpack.c.b16 %v99, %v98
  %v128 = vpack.c.b16 %v101, %v100
  %v129 = vpack.c.b16 %v103, %v102
  %v130 = vpack.c.b16 %v105, %v104
  %v131 = vpack.c.b16 %v107, %v106
  %v132 = vpack.c.b16 %v109, %v108
  %v133 = vpack.c.b16 %v111, %v110
  %v134 = vpack.c.b16 %v113, %v112
  %v135 = vpack.c.b16 %v115, %v114
  %v136 = vpack.c.b16 %v117, %v116
  %v137 = vpack.c.b16 %v119, %v118
  %v138 = vpack.c.b16 %v121, %v120
  %v139 = vpack.c.b16 %v123, %v122
  %v172 = vunpack.c.l.b16 %v44
  %v173 = vunpack.c.l.b16 %v45
  %v174 = vunpack.c.l.b16 %v46
  %v175 = vunpack.c.l.b16 %v47
  %v176 = vunpack.c.l.b16 %v48
  %v177 = vunpack.c.l.b16 %v49
  %v178 = vunpack.c.l.b16 %v50
  %v179 = vunpack.c.l.b16 %v51
  %v180 = vunpack.c.l.b16 %v52
  %v181 = vunpack.c.l.b16 %v53
  %v182 = vunpack.c.l.b16 %v54
  %v183 = vunpack.c.l.b16 %v55
  %v184 = vunpack.c.l.b16 %v56
  %v185 = vunpack.c.l.b16 %v57
  %v186 = vunpack.c.l.b16 %v58
  %v187 = vunpack.c.l.b16 %v59
  %v188 = vpack.c.b16 %v173, %v172
  %v189 = vpack.c.b16 %v175, %v174
  %v190 = vpack.c.b16 %v177, %v176
  %v191 = vpack.c.b16 %v179, %v178
  %v192 = vpack.c.b16 %v181, %v180
  %v193 = vpack.c.b16 %v183, %v182
  %v194 = vpack.c.b16 %v185, %v184
  %v195 = vpack.c.b16 %v187, %v186
  %204 = vmatprep.subr.bf16.mxu0 0
  %205 = vmatpush1.bf16.msra.mxu0 %v188
  %206 = vmatprep.subr.bf16.mxu0 0
  %207 = vmatpush1.bf16.msra.mxu0 %v189
  %208 = vmatprep.subr.bf16.mxu0 0
  %209 = vmatpush1.bf16.msra.mxu0 %v190
  %210 = vmatprep.subr.bf16.mxu0 0
  %211 = vmatpush1.bf16.msra.mxu0 %v191
  %212 = vmatprep.subr.bf16.mxu0 0
  %213 = vmatpush1.bf16.msra.mxu0 %v192
  %214 = vmatprep.subr.bf16.mxu0 0
  %215 = vmatpush1.bf16.msra.mxu0 %v193
  %216 = vmatprep.subr.bf16.mxu0 0
  %217 = vmatpush1.bf16.msra.mxu0 %v194
  %218 = vmatprep.subr.bf16.mxu0 0
  %219 = vmatpush1.bf16.msra.mxu0 %v195
  %220 = vmatprep.subr.bf16.mxu0 0
  %221 = vmatpush1.bf16.msra.mxu0 0
  %222 = vmatprep.subr.bf16.mxu0 0
  %223 = vmatpush1.bf16.msra.mxu0 0
  %224 = vmatprep.subr.bf16.mxu0 0
  %225 = vmatpush1.bf16.msra.mxu0 0
  %226 = vmatprep.subr.bf16.mxu0 0
  %227 = vmatpush1.bf16.msra.mxu0 0
  %228 = vmatprep.subr.bf16.mxu0 0
  %229 = vmatpush1.bf16.msra.mxu0 0
  %230 = vmatprep.subr.bf16.mxu0 0
  %231 = vmatpush1.bf16.msra.mxu0 0
  %232 = vmatprep.subr.bf16.mxu0 0
  %233 = vmatpush1.bf16.msra.mxu0 0
  %234 = vmatprep.subr.bf16.mxu0 0
  %235 = vmatpush1.bf16.msra.mxu0 0
  %236 = vmatprep.mubr.bf16.mxu0 0
  %237 = vmatmul.mubr.bf16.gmra.mrb[0].mxu0 %v124
  %v238 = vpop.f32.mrb[0].mxu0
  %v239 = vadd.f32 0.0, %v238
  %v240 = vpop.f32.mrb[0].mxu0
  %v241 = vpop.f32.mrb[0].mxu0
  %v242 = vadd.f32 0.0, %v241
  %v243 = vpop.f32.mrb[0].mxu0
  %244 = vmatprep.mubr.bf16.mxu0 0
  %245 = vmatmul.mubr.bf16.gmra.mrb[0].mxu0 %v125
  %v246 = vpop.f32.mrb[0].mxu0
  %v247 = vadd.f32 0.0, %v246
  %v248 = vpop.f32.mrb[0].mxu0
  %v249 = vpop.f32.mrb[0].mxu0
  %v250 = vadd.f32 0.0, %v249
  %v251 = vpop.f32.mrb[0].mxu0
  %252 = vmatprep.mubr.bf16.mxu0 0
  %253 = vmatmul.mubr.bf16.gmra.mrb[0].mxu0 %v126
  %v254 = vpop.f32.mrb[0].mxu0
  %v255 = vadd.f32 0.0, %v254
  %v256 = vpop.f32.mrb[0].mxu0
  %v257 = vpop.f32.mrb[0].mxu0
  %v258 = vadd.f32 0.0, %v257
  %v259 = vpop.f32.mrb[0].mxu0
  %260 = vmatprep.mubr.bf16.mxu0 0
  %261 = vmatmul.mubr.bf16.gmra.mrb[0].mxu0 %v127
  %v262 = vpop.f32.mrb[0].mxu0
  %v263 = vadd.f32 0.0, %v262
  %v264 = vpop.f32.mrb[0].mxu0
  %v265 = vpop.f32.mrb[0].mxu0
  %v266 = vadd.f32 0.0, %v265
  %v267 = vpop.f32.mrb[0].mxu0
  %268 = vmatprep.mubr.bf16.mxu0 0
  %269 = vmatmul.mubr.bf16.gmra.mrb[0].mxu0 %v128
  %v270 = vpop.f32.mrb[0].mxu0
  %v271 = vadd.f32 0.0, %v270
  %v272 = vpop.f32.mrb[0].mxu0
  %v273 = vpop.f32.mrb[0].mxu0
  %v274 = vadd.f32 0.0, %v273
  %v275 = vpop.f32.mrb[0].mxu0
  %276 = vmatprep.mubr.bf16.mxu0 0
  %277 = vmatmul.mubr.bf16.gmra.mrb[0].mxu0 %v129
  %v278 = vpop.f32.mrb[0].mxu0
  %v279 = vadd.f32 0.0, %v278
  %v280 = vpop.f32.mrb[0].mxu0
  %v281 = vpop.f32.mrb[0].mxu0
  %v282 = vadd.f32 0.0, %v281
  %v283 = vpop.f32.mrb[0].mxu0
  %284 = vmatprep.mubr.bf16.mxu0 0
  %285 = vmatmul.mubr.bf16.gmra.mrb[0].mxu0 %v130
  %v286 = vpop.f32.mrb[0].mxu0
  %v287 = vadd.f32 0.0, %v286
  %v288 = vpop.f32.mrb[0].mxu0
  %v289 = vpop.f32.mrb[0].mxu0
  %v290 = vadd.f32 0.0, %v289
  %v291 = vpop.f32.mrb[0].mxu0
  %292 = vmatprep.mubr.bf16.mxu0 0
  %293 = vmatmul.mubr.bf16.gmra.mrb[0].mxu0 %v131
  %v294 = vpop.f32.mrb[0].mxu0
  %v295 = vadd.f32 0.0, %v294
  %v296 = vpop.f32.mrb[0].mxu0
  %v297 = vpop.f32.mrb[0].mxu0
  %v298 = vadd.f32 0.0, %v297
  %v299 = vpop.f32.mrb[0].mxu0
  %300 = vmatprep.mubr.bf16.mxu0 0
  %301 = vmatmul.mubr.bf16.gmra.mrb[0].mxu0 %v132
  %v302 = vpop.f32.mrb[0].mxu0
  %v303 = vadd.f32 0.0, %v302
  %v304 = vpop.f32.mrb[0].mxu0
  %v305 = vpop.f32.mrb[0].mxu0
  %v306 = vadd.f32 0.0, %v305
  %v307 = vpop.f32.mrb[0].mxu0
  %308 = vmatprep.mubr.bf16.mxu0 0
  %309 = vmatmul.mubr.bf16.gmra.mrb[0].mxu0 %v133
  %v310 = vpop.f32.mrb[0].mxu0
  %v311 = vadd.f32 0.0, %v310
  %v312 = vpop.f32.mrb[0].mxu0
  %v313 = vpop.f32.mrb[0].mxu0
  %v314 = vadd.f32 0.0, %v313
  %v315 = vpop.f32.mrb[0].mxu0
  %316 = vmatprep.mubr.bf16.mxu0 0
  %317 = vmatmul.mubr.bf16.gmra.mrb[0].mxu0 %v134
  %v318 = vpop.f32.mrb[0].mxu0
  %v319 = vadd.f32 0.0, %v318
  %v320 = vpop.f32.mrb[0].mxu0
  %v321 = vpop.f32.mrb[0].mxu0
  %v322 = vadd.f32 0.0, %v321
  %v323 = vpop.f32.mrb[0].mxu0
  %324 = vmatprep.mubr.bf16.mxu0 0
  %325 = vmatmul.mubr.bf16.gmra.mrb[0].mxu0 %v135
  %v326 = vpop.f32.mrb[0].mxu0
  %v327 = vadd.f32 0.0, %v326
  %v328 = vpop.f32.mrb[0].mxu0
  %v329 = vpop.f32.mrb[0].mxu0
  %v330 = vadd.f32 0.0, %v329
  %v331 = vpop.f32.mrb[0].mxu0
  %332 = vmatprep.mubr.bf16.mxu0 0
  %333 = vmatmul.mubr.bf16.gmra.mrb[0].mxu0 %v136
  %v334 = vpop.f32.mrb[0].mxu0
  %v335 = vadd.f32 0.0, %v334
  %v336 = vpop.f32.mrb[0].mxu0
  %v337 = vpop.f32.mrb[0].mxu0
  %v338 = vadd.f32 0.0, %v337
  %v339 = vpop.f32.mrb[0].mxu0
  %340 = vmatprep.mubr.bf16.mxu0 0
  %341 = vmatmul.mubr.bf16.gmra.mrb[0].mxu0 %v137
  %v342 = vpop.f32.mrb[0].mxu0
  %v343 = vadd.f32 0.0, %v342
  %v344 = vpop.f32.mrb[0].mxu0
  %v345 = vpop.f32.mrb[0].mxu0
  %v346 = vadd.f32 0.0, %v345
  %v347 = vpop.f32.mrb[0].mxu0
  %348 = vmatprep.mubr.bf16.mxu0 0
  %349 = vmatmul.mubr.bf16.gmra.mrb[0].mxu0 %v138
  %v350 = vpop.f32.mrb[0].mxu0
  %v351 = vadd.f32 0.0, %v350
  %v352 = vpop.f32.mrb[0].mxu0
  %v353 = vpop.f32.mrb[0].mxu0
  %v354 = vadd.f32 0.0, %v353
  %v355 = vpop.f32.mrb[0].mxu0
  %356 = vmatprep.mubr.bf16.mxu0 0
  %357 = vmatmul.mubr.bf16.gmra.mrb[0].mxu0 %v139
  %v358 = vpop.f32.mrb[0].mxu0
  %v359 = vadd.f32 0.0, %v358
  %v360 = vpop.f32.mrb[0].mxu0
  %v361 = vpop.f32.mrb[0].mxu0
  %v362 = vadd.f32 0.0, %v361
  %v363 = vpop.f32.mrb[0].mxu0
  %364 = vdwg.mxu0
  %v365 = vpack.c.bf16 %v242, %v239
  %v366 = vpack.c.bf16 %v250, %v247
  %v367 = vpack.c.bf16 %v258, %v255
  %v368 = vpack.c.bf16 %v266, %v263
  %v369 = vpack.c.bf16 %v274, %v271
  %v370 = vpack.c.bf16 %v282, %v279
  %v371 = vpack.c.bf16 %v290, %v287
  %v372 = vpack.c.bf16 %v298, %v295
  %v373 = vpack.c.bf16 %v306, %v303
  %v374 = vpack.c.bf16 %v314, %v311
  %v375 = vpack.c.bf16 %v322, %v319
  %v376 = vpack.c.bf16 %v330, %v327
  %v377 = vpack.c.bf16 %v338, %v335
  %v378 = vpack.c.bf16 %v346, %v343
  %v379 = vpack.c.bf16 %v354, %v351
  %v380 = vpack.c.bf16 %v362, %v359
  %v397 = vunpack.c.l.b16 %v365
  %v398 = vunpack.c.h.b16 %v365
  %v399 = vunpack.c.l.b16 %v366
  %v400 = vunpack.c.h.b16 %v366
  %v401 = vunpack.c.l.b16 %v367
  %v402 = vunpack.c.h.b16 %v367
  %v403 = vunpack.c.l.b16 %v368
  %v404 = vunpack.c.h.b16 %v368
  %v405 = vunpack.c.l.b16 %v369
  %v406 = vunpack.c.h.b16 %v369
  %v407 = vunpack.c.l.b16 %v370
  %v408 = vunpack.c.h.b16 %v370
  %v409 = vunpack.c.l.b16 %v371
  %v410 = vunpack.c.h.b16 %v371
  %v411 = vunpack.c.l.b16 %v372
  %v412 = vunpack.c.h.b16 %v372
  %v413 = vunpack.c.l.b16 %v373
  %v414 = vunpack.c.h.b16 %v373
  %v415 = vunpack.c.l.b16 %v374
  %v416 = vunpack.c.h.b16 %v374
  %v417 = vunpack.c.l.b16 %v375
  %v418 = vunpack.c.h.b16 %v375
  %v419 = vunpack.c.l.b16 %v376
  %v420 = vunpack.c.h.b16 %v376
  %v421 = vunpack.c.l.b16 %v377
  %v422 = vunpack.c.h.b16 %v377
  %v423 = vunpack.c.l.b16 %v378
  %v424 = vunpack.c.h.b16 %v378
  %v425 = vunpack.c.l.b16 %v379
  %v426 = vunpack.c.h.b16 %v379
  %v427 = vunpack.c.l.b16 %v380
  %v428 = vunpack.c.h.b16 %v380
  %v429 = vpack.c.b16 %v397, %v397
  %v430 = vpack.c.b16 %v398, %v398
  %v431 = vpack.c.b16 %v399, %v399
  %v432 = vpack.c.b16 %v400, %v400
  %v433 = vpack.c.b16 %v401, %v401
  %v434 = vpack.c.b16 %v402, %v402
  %v435 = vpack.c.b16 %v403, %v403
  %v436 = vpack.c.b16 %v404, %v404
  %v437 = vpack.c.b16 %v405, %v405
  %v438 = vpack.c.b16 %v406, %v406
  %v439 = vpack.c.b16 %v407, %v407
  %v440 = vpack.c.b16 %v408, %v408
  %v441 = vpack.c.b16 %v409, %v409
  %v442 = vpack.c.b16 %v410, %v410
  %v443 = vpack.c.b16 %v411, %v411
  %v444 = vpack.c.b16 %v412, %v412
  %v445 = vpack.c.b16 %v413, %v413
  %v446 = vpack.c.b16 %v414, %v414
  %v447 = vpack.c.b16 %v415, %v415
  %v448 = vpack.c.b16 %v416, %v416
  %v449 = vpack.c.b16 %v417, %v417
  %v450 = vpack.c.b16 %v418, %v418
  %v451 = vpack.c.b16 %v419, %v419
  %v452 = vpack.c.b16 %v420, %v420
  %v453 = vpack.c.b16 %v421, %v421
  %v454 = vpack.c.b16 %v422, %v422
  %v455 = vpack.c.b16 %v423, %v423
  %v456 = vpack.c.b16 %v424, %v424
  %v457 = vpack.c.b16 %v425, %v425
  %v458 = vpack.c.b16 %v426, %v426
  %v459 = vpack.c.b16 %v427, %v427
  %v460 = vpack.c.b16 %v428, %v428
  %493 = vst [vmem:[%s2] sm:$0xf] %v429
  %494 = vst [vmem:[%s2 + $0x4] sm:$0xf] %v430
  %495 = vst [vmem:[%s2 + $0x8] sm:$0xf] %v431
  %496 = vst [vmem:[%s2 + $0xc] sm:$0xf] %v432
  %497 = vst [vmem:[%s2 + $0x10] sm:$0xf] %v433
  %498 = vst [vmem:[%s2 + $0x14] sm:$0xf] %v434
  %499 = vst [vmem:[%s2 + $0x18] sm:$0xf] %v435
  %500 = vst [vmem:[%s2 + $0x1c] sm:$0xf] %v436
  %501 = vst [vmem:[%s2 + $0x20] sm:$0xf] %v437
  %502 = vst [vmem:[%s2 + $0x24] sm:$0xf] %v438
  %503 = vst [vmem:[%s2 + $0x28] sm:$0xf] %v439
  %504 = vst [vmem:[%s2 + $0x2c] sm:$0xf] %v440
  %505 = vst [vmem:[%s2 + $0x30] sm:$0xf] %v441
  %506 = vst [vmem:[%s2 + $0x34] sm:$0xf] %v442
  %507 = vst [vmem:[%s2 + $0x38] sm:$0xf] %v443
  %508 = vst [vmem:[%s2 + $0x3c] sm:$0xf] %v444
  %509 = vst [vmem:[%s2 + $0x40] sm:$0xf] %v445
  %510 = vst [vmem:[%s2 + $0x44] sm:$0xf] %v446
  %511 = vst [vmem:[%s2 + $0x48] sm:$0xf] %v447
  %512 = vst [vmem:[%s2 + $0x4c] sm:$0xf] %v448
  %513 = vst [vmem:[%s2 + $0x50] sm:$0xf] %v449
  %514 = vst [vmem:[%s2 + $0x54] sm:$0xf] %v450
  %515 = vst [vmem:[%s2 + $0x58] sm:$0xf] %v451
  %516 = vst [vmem:[%s2 + $0x5c] sm:$0xf] %v452
  %517 = vst [vmem:[%s2 + $0x60] sm:$0xf] %v453
  %518 = vst [vmem:[%s2 + $0x64] sm:$0xf] %v454
  %519 = vst [vmem:[%s2 + $0x68] sm:$0xf] %v455
  %520 = vst [vmem:[%s2 + $0x6c] sm:$0xf] %v456
  %521 = vst [vmem:[%s2 + $0x70] sm:$0xf] %v457
  %522 = vst [vmem:[%s2 + $0x74] sm:$0xf] %v458
  %523 = vst [vmem:[%s2 + $0x78] sm:$0xf] %v459
  %524 = vst [vmem:[%s2 + $0x7c] sm:$0xf] %v460
  // Predicated region
  $region10: #{gcn2_forward.4} parent=0 // pred_check
    _
  $region11: #{gcn2_forward.4} parent=0 // pred_check_branch
    %526 = sbr.rel (0) target = $region13
  $region12: #{gcn2_forward.4} parent=0 // pred_region
    _
  $region13: #{gcn2_forward.4} parent=0 // pred_fallthru
    _
  // Predicated region
  $region14: #{gcn2_forward.4} parent=0 // pred_check
    _
  $region15: #{gcn2_forward.4} parent=0 // pred_check_branch
    %528 = sbr.rel (0) target = $region17
  $region16: #{gcn2_forward.4} parent=0 // pred_region
    _
  $region17: #{gcn2_forward.4} parent=0 // pred_fallthru
    _

// kernel: gcn2_forward.5
$region0: #{gcn2_forward.5}
  #allocation0 [shape = 'u32[]', space=smem, size = 0x4, offset = 0x4, fixed_abs, tag = 'smem constant byte address 0x4 - core index']
  #allocation1 [shape = 'u32[144,128]{1,0:T(1,128)}', space=vmem, size = 0x12000, scoped, tag = 'internal scratch']
  #allocation2 [shape = 'f32[256,128]{1,0:T(8,128)}', space=vmem, size = 0x20000, scoped, tag = 'scratch operand']
  %s0 = inlined_call_operand.vmem [shape: bf16[256,256], index: 0, kind: input, shape index: {}]
  %s1 = inlined_call_operand.vmem [shape: bf16[256,128], index: 1, kind: input, shape index: {}]
  %s2 = inlined_call_operand.vmem [shape: f32[1,128], index: 2, kind: input, shape index: {}]
  %s3 = inlined_call_operand.vmem [shape: bf16[256,128], index: 3, kind: output, shape index: {0}]
  %s4 = inlined_call_operand.vmem [shape: f32[8,128], index: 4, kind: output, shape index: {1}]
  %s5 = inlined_call_operand.vmem [shape: f32[8,128], index: 5, kind: output, shape index: {2}]
  %6 = xla_tuple %s3, %s4, %s5
  %s7 = sld [smem:[#allocation0]]
  $region46: #{gcn2_forward.5} parent=0
    _
  %s9 = ssub.s32 1, %s7
  %s10 = scalar_select 0, %s9, %s7
  // Predicated region
  $region2: #{gcn2_forward.5} parent=0 // pred_check
    _
  $region3: #{gcn2_forward.5} parent=0 // pred_check_branch
    %12 = sbr.rel (0) target = $region5
  $region4: #{gcn2_forward.5} parent=0 // pred_region
    _
  $region5: #{gcn2_forward.5} parent=0 // pred_fallthru
    _
  // Predicated region
  $region6: #{gcn2_forward.5} parent=0 // pred_check
    _
  $region7: #{gcn2_forward.5} parent=0 // pred_check_branch
    %14 = sbr.rel (0) target = $region9
  $region8: #{gcn2_forward.5} parent=0 // pred_region
    _
  $region9: #{gcn2_forward.5} parent=0 // pred_fallthru
    _
  // Predicated region
  $region10: #{gcn2_forward.5} parent=0 // pred_check
    _
  $region11: #{gcn2_forward.5} parent=0 // pred_check_branch
    %16 = sbr.rel (0) target = $region13
  $region12: #{gcn2_forward.5} parent=0 // pred_region
    _
  $region13: #{gcn2_forward.5} parent=0 // pred_fallthru
    _
  %p18 = scmp.eq.s32.totalorder 0, 0
  // Predicated region
  $region14: #{gcn2_forward.5} parent=0 // pred_check
    %p19 = pneg %p18
  $region15: #{gcn2_forward.5} parent=0 // pred_check_branch
    %21 = sbr.rel (%p19) target = $region17
  $region16: #{gcn2_forward.5} parent=0 // pred_region
    %22 = vst [vmem:[#allocation2] sm:$0xff] 0.0
    %23 = vst [vmem:[#allocation2 + $0x8] sm:$0xff] 0.0
    %24 = vst [vmem:[#allocation2 + $0x10] sm:$0xff] 0.0
    %25 = vst [vmem:[#allocation2 + $0x18] sm:$0xff] 0.0
    %26 = vst [vmem:[#allocation2 + $0x20] sm:$0xff] 0.0
    %27 = vst [vmem:[#allocation2 + $0x28] sm:$0xff] 0.0
    %28 = vst [vmem:[#allocation2 + $0x30] sm:$0xff] 0.0
    %29 = vst [vmem:[#allocation2 + $0x38] sm:$0xff] 0.0
    %30 = vst [vmem:[#allocation2 + $0x40] sm:$0xff] 0.0
    %31 = vst [vmem:[#allocation2 + $0x48] sm:$0xff] 0.0
    %32 = vst [vmem:[#allocation2 + $0x50] sm:$0xff] 0.0
    %33 = vst [vmem:[#allocation2 + $0x58] sm:$0xff] 0.0
    %34 = vst [vmem:[#allocation2 + $0x60] sm:$0xff] 0.0
    %35 = vst [vmem:[#allocation2 + $0x68] sm:$0xff] 0.0
    %36 = vst [vmem:[#allocation2 + $0x70] sm:$0xff] 0.0
    %37 = vst [vmem:[#allocation2 + $0x78] sm:$0xff] 0.0
    %38 = vst [vmem:[#allocation2 + $0x80] sm:$0xff] 0.0
    %39 = vst [vmem:[#allocation2 + $0x88] sm:$0xff] 0.0
    %40 = vst [vmem:[#allocation2 + $0x90] sm:$0xff] 0.0
    %41 = vst [vmem:[#allocation2 + $0x98] sm:$0xff] 0.0
    %42 = vst [vmem:[#allocation2 + $0xa0] sm:$0xff] 0.0
    %43 = vst [vmem:[#allocation2 + $0xa8] sm:$0xff] 0.0
    %44 = vst [vmem:[#allocation2 + $0xb0] sm:$0xff] 0.0
    %45 = vst [vmem:[#allocation2 + $0xb8] sm:$0xff] 0.0
    %46 = vst [vmem:[#allocation2 + $0xc0] sm:$0xff] 0.0
    %47 = vst [vmem:[#allocation2 + $0xc8] sm:$0xff] 0.0
    %48 = vst [vmem:[#allocation2 + $0xd0] sm:$0xff] 0.0
    %49 = vst [vmem:[#allocation2 + $0xd8] sm:$0xff] 0.0
    %50 = vst [vmem:[#allocation2 + $0xe0] sm:$0xff] 0.0
    %51 = vst [vmem:[#allocation2 + $0xe8] sm:$0xff] 0.0
    %52 = vst [vmem:[#allocation2 + $0xf0] sm:$0xff] 0.0
    %53 = vst [vmem:[#allocation2 + $0xf8] sm:$0xff] 0.0
  $region17: #{gcn2_forward.5} parent=0 // pred_fallthru
    _
  %s54 = smul.u32 0, 256
  %s55 = sshra.s32 %s54, 3
  %s56 = sand.u32 %s54, 7
  %s57 = smul.addr %s55, 4
  %s58 = scalar_lea.vmem %s1, %s57
  %v59 = vld [vmem:[%s58] sm:$0xf]
  %v60 = vld [vmem:[%s58 + $0x4] sm:$0xf]
  %v61 = vld [vmem:[%s58 + $0x8] sm:$0xf]
  %v62 = vld [vmem:[%s58 + $0xc] sm:$0xf]
  %v63 = vld [vmem:[%s58 + $0x10] sm:$0xf]
  %v64 = vld [vmem:[%s58 + $0x14] sm:$0xf]
  %v65 = vld [vmem:[%s58 + $0x18] sm:$0xf]
  %v66 = vld [vmem:[%s58 + $0x1c] sm:$0xf]
  %v67 = vld [vmem:[%s58 + $0x20] sm:$0xf]
  %v68 = vld [vmem:[%s58 + $0x24] sm:$0xf]
  %v69 = vld [vmem:[%s58 + $0x28] sm:$0xf]
  %v70 = vld [vmem:[%s58 + $0x2c] sm:$0xf]
  %v71 = vld [vmem:[%s58 + $0x30] sm:$0xf]
  %v72 = vld [vmem:[%s58 + $0x34] sm:$0xf]
  %v73 = vld [vmem:[%s58 + $0x38] sm:$0xf]
  %v74 = vld [vmem:[%s58 + $0x3c] sm:$0xf]
  %v75 = vld [vmem:[%s58 + $0x40] sm:$0xf]
  %v76 = vld [vmem:[%s58 + $0x44] sm:$0xf]
  %v77 = vld [vmem:[%s58 + $0x48] sm:$0xf]
  %v78 = vld [vmem:[%s58 + $0x4c] sm:$0xf]
  %v79 = vld [vmem:[%s58 + $0x50] sm:$0xf]
  %v80 = vld [vmem:[%s58 + $0x54] sm:$0xf]
  %v81 = vld [vmem:[%s58 + $0x58] sm:$0xf]
  %v82 = vld [vmem:[%s58 + $0x5c] sm:$0xf]
  %v83 = vld [vmem:[%s58 + $0x60] sm:$0xf]
  %v84 = vld [vmem:[%s58 + $0x64] sm:$0xf]
  %v85 = vld [vmem:[%s58 + $0x68] sm:$0xf]
  %v86 = vld [vmem:[%s58 + $0x6c] sm:$0xf]
  %v87 = vld [vmem:[%s58 + $0x70] sm:$0xf]
  %v88 = vld [vmem:[%s58 + $0x74] sm:$0xf]
  %v89 = vld [vmem:[%s58 + $0x78] sm:$0xf]
  %v90 = vld [vmem:[%s58 + $0x7c] sm:$0xf]
  %v91 = vld [vmem:[#allocation2] sm:$0xff]
  %v92 = vld [vmem:[#allocation2 + $0x8] sm:$0xff]
  %v93 = vld [vmem:[#allocation2 + $0x10] sm:$0xff]
  %v94 = vld [vmem:[#allocation2 + $0x18] sm:$0xff]
  %v95 = vld [vmem:[#allocation2 + $0x20] sm:$0xff]
  %v96 = vld [vmem:[#allocation2 + $0x28] sm:$0xff]
  %v97 = vld [vmem:[#allocation2 + $0x30] sm:$0xff]
  %v98 = vld [vmem:[#allocation2 + $0x38] sm:$0xff]
  %v99 = vld [vmem:[#allocation2 + $0x40] sm:$0xff]
  %v100 = vld [vmem:[#allocation2 + $0x48] sm:$0xff]
  %v101 = vld [vmem:[#allocation2 + $0x50] sm:$0xff]
  %v102 = vld [vmem:[#allocation2 + $0x58] sm:$0xff]
  %v103 = vld [vmem:[#allocation2 + $0x60] sm:$0xff]
  %v104 = vld [vmem:[#allocation2 + $0x68] sm:$0xff]
  %v105 = vld [vmem:[#allocation2 + $0x70] sm:$0xff]
  %v106 = vld [vmem:[#allocation2 + $0x78] sm:$0xff]
  %v107 = vld [vmem:[#allocation2 + $0x80] sm:$0xff]
  %v108 = vld [vmem:[#allocation2 + $0x88] sm:$0xff]
  %v109 = vld [vmem:[#allocation2 + $0x90] sm:$0xff]
  %v110 = vld [vmem:[#allocation2 + $0x98] sm:$0xff]
  %v111 = vld [vmem:[#allocation2 + $0xa0] sm:$0xff]
  %v112 = vld [vmem:[#allocation2 + $0xa8] sm:$0xff]
  %v113 = vld [vmem:[#allocation2 + $0xb0] sm:$0xff]
  %v114 = vld [vmem:[#allocation2 + $0xb8] sm:$0xff]
  %v115 = vld [vmem:[#allocation2 + $0xc0] sm:$0xff]
  %v116 = vld [vmem:[#allocation2 + $0xc8] sm:$0xff]
  %v117 = vld [vmem:[#allocation2 + $0xd0] sm:$0xff]
  %v118 = vld [vmem:[#allocation2 + $0xd8] sm:$0xff]
  %v119 = vld [vmem:[#allocation2 + $0xe0] sm:$0xff]
  %v120 = vld [vmem:[#allocation2 + $0xe8] sm:$0xff]
  %v121 = vld [vmem:[#allocation2 + $0xf0] sm:$0xff]
  %v122 = vld [vmem:[#allocation2 + $0xf8] sm:$0xff]
  %v123 = vld [vmem:[%s0] sm:$0xff]
  %v124 = vld [vmem:[%s0 + $0x8] sm:$0xff]
  %v125 = vld [vmem:[%s0 + $0x10] sm:$0xff]
  %v126 = vld [vmem:[%s0 + $0x18] sm:$0xff]
  %v127 = vld [vmem:[%s0 + $0x20] sm:$0xff]
  %v128 = vld [vmem:[%s0 + $0x28] sm:$0xff]
  %v129 = vld [vmem:[%s0 + $0x30] sm:$0xff]
  %v130 = vld [vmem:[%s0 + $0x38] sm:$0xff]
  %v131 = vld [vmem:[%s0 + $0x40] sm:$0xff]
  %v132 = vld [vmem:[%s0 + $0x48] sm:$0xff]
  %v133 = vld [vmem:[%s0 + $0x50] sm:$0xff]
  %v134 = vld [vmem:[%s0 + $0x58] sm:$0xff]
  %v135 = vld [vmem:[%s0 + $0x60] sm:$0xff]
  %v136 = vld [vmem:[%s0 + $0x68] sm:$0xff]
  %v137 = vld [vmem:[%s0 + $0x70] sm:$0xff]
  %v138 = vld [vmem:[%s0 + $0x78] sm:$0xff]
  %v139 = vld [vmem:[%s0 + $0x80] sm:$0xff]
  %v140 = vld [vmem:[%s0 + $0x88] sm:$0xff]
  %v141 = vld [vmem:[%s0 + $0x90] sm:$0xff]
  %v142 = vld [vmem:[%s0 + $0x98] sm:$0xff]
  %v143 = vld [vmem:[%s0 + $0xa0] sm:$0xff]
  %v144 = vld [vmem:[%s0 + $0xa8] sm:$0xff]
  %v145 = vld [vmem:[%s0 + $0xb0] sm:$0xff]
  %v146 = vld [vmem:[%s0 + $0xb8] sm:$0xff]
  %v147 = vld [vmem:[%s0 + $0xc0] sm:$0xff]
  %v148 = vld [vmem:[%s0 + $0xc8] sm:$0xff]
  %v149 = vld [vmem:[%s0 + $0xd0] sm:$0xff]
  %v150 = vld [vmem:[%s0 + $0xd8] sm:$0xff]
  %v151 = vld [vmem:[%s0 + $0xe0] sm:$0xff]
  %v152 = vld [vmem:[%s0 + $0xe8] sm:$0xff]
  %v153 = vld [vmem:[%s0 + $0xf0] sm:$0xff]
  %v154 = vld [vmem:[%s0 + $0xf8] sm:$0xff]
  %v187 = vunpack.c.l.b16 %v123
  %v188 = vunpack.c.h.b16 %v123
  %v189 = vunpack.c.l.b16 %v124
  %v190 = vunpack.c.h.b16 %v124
  %v191 = vunpack.c.l.b16 %v125
  %v192 = vunpack.c.h.b16 %v125
  %v193 = vunpack.c.l.b16 %v126
  %v194 = vunpack.c.h.b16 %v126
  %v195 = vunpack.c.l.b16 %v127
  %v196 = vunpack.c.h.b16 %v127
  %v197 = vunpack.c.l.b16 %v128
  %v198 = vunpack.c.h.b16 %v128
  %v199 = vunpack.c.l.b16 %v129
  %v200 = vunpack.c.h.b16 %v129
  %v201 = vunpack.c.l.b16 %v130
  %v202 = vunpack.c.h.b16 %v130
  %v203 = vunpack.c.l.b16 %v131
  %v204 = vunpack.c.h.b16 %v131
  %v205 = vunpack.c.l.b16 %v132
  %v206 = vunpack.c.h.b16 %v132
  %v207 = vunpack.c.l.b16 %v133
  %v208 = vunpack.c.h.b16 %v133
  %v209 = vunpack.c.l.b16 %v134
  %v210 = vunpack.c.h.b16 %v134
  %v211 = vunpack.c.l.b16 %v135
  %v212 = vunpack.c.h.b16 %v135
  %v213 = vunpack.c.l.b16 %v136
  %v214 = vunpack.c.h.b16 %v136
  %v215 = vunpack.c.l.b16 %v137
  %v216 = vunpack.c.h.b16 %v137
  %v217 = vunpack.c.l.b16 %v138
  %v218 = vunpack.c.h.b16 %v138
  %v219 = vunpack.c.l.b16 %v139
  %v220 = vunpack.c.h.b16 %v139
  %v221 = vunpack.c.l.b16 %v140
  %v222 = vunpack.c.h.b16 %v140
  %v223 = vunpack.c.l.b16 %v141
  %v224 = vunpack.c.h.b16 %v141
  %v225 = vunpack.c.l.b16 %v142
  %v226 = vunpack.c.h.b16 %v142
  %v227 = vunpack.c.l.b16 %v143
  %v228 = vunpack.c.h.b16 %v143
  %v229 = vunpack.c.l.b16 %v144
  %v230 = vunpack.c.h.b16 %v144
  %v231 = vunpack.c.l.b16 %v145
  %v232 = vunpack.c.h.b16 %v145
  %v233 = vunpack.c.l.b16 %v146
  %v234 = vunpack.c.h.b16 %v146
  %v235 = vunpack.c.l.b16 %v147
  %v236 = vunpack.c.h.b16 %v147
  %v237 = vunpack.c.l.b16 %v148
  %v238 = vunpack.c.h.b16 %v148
  %v239 = vunpack.c.l.b16 %v149
  %v240 = vunpack.c.h.b16 %v149
  %v241 = vunpack.c.l.b16 %v150
  %v242 = vunpack.c.h.b16 %v150
  %v243 = vunpack.c.l.b16 %v151
  %v244 = vunpack.c.h.b16 %v151
  %v245 = vunpack.c.l.b16 %v152
  %v246 = vunpack.c.h.b16 %v152
  %v247 = vunpack.c.l.b16 %v153
  %v248 = vunpack.c.h.b16 %v153
  %v249 = vunpack.c.l.b16 %v154
  %v250 = vunpack.c.h.b16 %v154
  %v251 = vpack.c.b16 %v189, %v187
  %v252 = vpack.c.b16 %v190, %v188
  %v253 = vpack.c.b16 %v193, %v191
  %v254 = vpack.c.b16 %v194, %v192
  %v255 = vpack.c.b16 %v197, %v195
  %v256 = vpack.c.b16 %v198, %v196
  %v257 = vpack.c.b16 %v201, %v199
  %v258 = vpack.c.b16 %v202, %v200
  %v259 = vpack.c.b16 %v205, %v203
  %v260 = vpack.c.b16 %v206, %v204
  %v261 = vpack.c.b16 %v209, %v207
  %v262 = vpack.c.b16 %v210, %v208
  %v263 = vpack.c.b16 %v213, %v211
  %v264 = vpack.c.b16 %v214, %v212
  %v265 = vpack.c.b16 %v217, %v215
  %v266 = vpack.c.b16 %v218, %v216
  %v267 = vpack.c.b16 %v221, %v219
  %v268 = vpack.c.b16 %v222, %v220
  %v269 = vpack.c.b16 %v225, %v223
  %v270 = vpack.c.b16 %v226, %v224
  %v271 = vpack.c.b16 %v229, %v227
  %v272 = vpack.c.b16 %v230, %v228
  %v273 = vpack.c.b16 %v233, %v231
  %v274 = vpack.c.b16 %v234, %v232
  %v275 = vpack.c.b16 %v237, %v235
  %v276 = vpack.c.b16 %v238, %v236
  %v277 = vpack.c.b16 %v241, %v239
  %v278 = vpack.c.b16 %v242, %v240
  %v279 = vpack.c.b16 %v245, %v243
  %v280 = vpack.c.b16 %v246, %v244
  %v281 = vpack.c.b16 %v249, %v247
  %v282 = vpack.c.b16 %v250, %v248
  %v347 = vunpack.c.l.b16 %v59
  %v348 = vunpack.c.l.b16 %v60
  %v349 = vunpack.c.l.b16 %v61
  %v350 = vunpack.c.l.b16 %v62
  %v351 = vunpack.c.l.b16 %v63
  %v352 = vunpack.c.l.b16 %v64
  %v353 = vunpack.c.l.b16 %v65
  %v354 = vunpack.c.l.b16 %v66
  %v355 = vunpack.c.l.b16 %v67
  %v356 = vunpack.c.l.b16 %v68
  %v357 = vunpack.c.l.b16 %v69
  %v358 = vunpack.c.l.b16 %v70
  %v359 = vunpack.c.l.b16 %v71
  %v360 = vunpack.c.l.b16 %v72
  %v361 = vunpack.c.l.b16 %v73
  %v362 = vunpack.c.l.b16 %v74
  %v363 = vunpack.c.l.b16 %v75
  %v364 = vunpack.c.l.b16 %v76
  %v365 = vunpack.c.l.b16 %v77
  %v366 = vunpack.c.l.b16 %v78
  %v367 = vunpack.c.l.b16 %v79
  %v368 = vunpack.c.l.b16 %v80
  %v369 = vunpack.c.l.b16 %v81
  %v370 = vunpack.c.l.b16 %v82
  %v371 = vunpack.c.l.b16 %v83
  %v372 = vunpack.c.l.b16 %v84
  %v373 = vunpack.c.l.b16 %v85
  %v374 = vunpack.c.l.b16 %v86
  %v375 = vunpack.c.l.b16 %v87
  %v376 = vunpack.c.l.b16 %v88
  %v377 = vunpack.c.l.b16 %v89
  %v378 = vunpack.c.l.b16 %v90
  %v379 = vpack.c.b16 %v348, %v347
  %v380 = vpack.c.b16 %v350, %v349
  %v381 = vpack.c.b16 %v352, %v351
  %v382 = vpack.c.b16 %v354, %v353
  %v383 = vpack.c.b16 %v356, %v355
  %v384 = vpack.c.b16 %v358, %v357
  %v385 = vpack.c.b16 %v360, %v359
  %v386 = vpack.c.b16 %v362, %v361
  %v387 = vpack.c.b16 %v364, %v363
  %v388 = vpack.c.b16 %v366, %v365
  %v389 = vpack.c.b16 %v368, %v367
  %v390 = vpack.c.b16 %v370, %v369
  %v391 = vpack.c.b16 %v372, %v371
  %v392 = vpack.c.b16 %v374, %v373
  %v393 = vpack.c.b16 %v376, %v375
  %v394 = vpack.c.b16 %v378, %v377
  %411 = vmatprep.subr.bf16.mxu0 0
  %412 = vmatpush1.bf16.msra.mxu0 %v379
  %413 = vmatprep.subr.bf16.mxu0 0
  %414 = vmatpush1.bf16.msra.mxu0 %v380
  %415 = vmatprep.subr.bf16.mxu0 0
  %416 = vmatpush1.bf16.msra.mxu0 %v381
  %417 = vmatprep.subr.bf16.mxu0 0
  %418 = vmatpush1.bf16.msra.mxu0 %v382
  %419 = vmatprep.subr.bf16.mxu0 0
  %420 = vmatpush1.bf16.msra.mxu0 %v383
  %421 = vmatprep.subr.bf16.mxu0 0
  %422 = vmatpush1.bf16.msra.mxu0 %v384
  %423 = vmatprep.subr.bf16.mxu0 0
  %424 = vmatpush1.bf16.msra.mxu0 %v385
  %425 = vmatprep.subr.bf16.mxu0 0
  %426 = vmatpush1.bf16.msra.mxu0 %v386
  %427 = vmatprep.subr.bf16.mxu0 0
  %428 = vmatpush1.bf16.msra.mxu0 %v387
  %429 = vmatprep.subr.bf16.mxu0 0
  %430 = vmatpush1.bf16.msra.mxu0 %v388
  %431 = vmatprep.subr.bf16.mxu0 0
  %432 = vmatpush1.bf16.msra.mxu0 %v389
  %433 = vmatprep.subr.bf16.mxu0 0
  %434 = vmatpush1.bf16.msra.mxu0 %v390
  %435 = vmatprep.subr.bf16.mxu0 0
  %436 = vmatpush1.bf16.msra.mxu0 %v391
  %437 = vmatprep.subr.bf16.mxu0 0
  %438 = vmatpush1.bf16.msra.mxu0 %v392
  %439 = vmatprep.subr.bf16.mxu0 0
  %440 = vmatpush1.bf16.msra.mxu0 %v393
  %441 = vmatprep.subr.bf16.mxu0 0
  %442 = vmatpush1.bf16.msra.mxu0 %v394
  %443 = vmatprep.mubr.bf16.mxu0 %v252
  %444 = vmatmul.mubr.bf16.gmra.mrb[0].mxu0 %v251
  %v445 = vpop.f32.mrb[0].mxu0
  %v446 = vadd.f32 0.0, %v445
  %v447 = vpop.f32.mrb[0].mxu0
  %v448 = vpop.f32.mrb[0].mxu0
  %v449 = vadd.f32 0.0, %v448
  %v450 = vpop.f32.mrb[0].mxu0
  %451 = vmatprep.mubr.bf16.mxu0 %v254
  %452 = vmatmul.mubr.bf16.gmra.mrb[0].mxu0 %v253
  %v453 = vpop.f32.mrb[0].mxu0
  %v454 = vadd.f32 0.0, %v453
  %v455 = vpop.f32.mrb[0].mxu0
  %v456 = vpop.f32.mrb[0].mxu0
  %v457 = vadd.f32 0.0, %v456
  %v458 = vpop.f32.mrb[0].mxu0
  %459 = vmatprep.mubr.bf16.mxu0 %v256
  %460 = vmatmul.mubr.bf16.gmra.mrb[0].mxu0 %v255
  %v461 = vpop.f32.mrb[0].mxu0
  %v462 = vadd.f32 0.0, %v461
  %v463 = vpop.f32.mrb[0].mxu0
  %v464 = vpop.f32.mrb[0].mxu0
  %v465 = vadd.f32 0.0, %v464
  %v466 = vpop.f32.mrb[0].mxu0
  %467 = vmatprep.mubr.bf16.mxu0 %v258
  %468 = vmatmul.mubr.bf16.gmra.mrb[0].mxu0 %v257
  %v469 = vpop.f32.mrb[0].mxu0
  %v470 = vadd.f32 0.0, %v469
  %v471 = vpop.f32.mrb[0].mxu0
  %v472 = vpop.f32.mrb[0].mxu0
  %v473 = vadd.f32 0.0, %v472
  %v474 = vpop.f32.mrb[0].mxu0
  %475 = vmatprep.mubr.bf16.mxu0 %v260
  %476 = vmatmul.mubr.bf16.gmra.mrb[0].mxu0 %v259
  %v477 = vpop.f32.mrb[0].mxu0
  %v478 = vadd.f32 0.0, %v477
  %v479 = vpop.f32.mrb[0].mxu0
  %v480 = vpop.f32.mrb[0].mxu0
  %v481 = vadd.f32 0.0, %v480
  %v482 = vpop.f32.mrb[0].mxu0
  %483 = vmatprep.mubr.bf16.mxu0 %v262
  %484 = vmatmul.mubr.bf16.gmra.mrb[0].mxu0 %v261
  %v485 = vpop.f32.mrb[0].mxu0
  %v486 = vadd.f32 0.0, %v485
  %v487 = vpop.f32.mrb[0].mxu0
  %v488 = vpop.f32.mrb[0].mxu0
  %v489 = vadd.f32 0.0, %v488
  %v490 = vpop.f32.mrb[0].mxu0
  %491 = vmatprep.mubr.bf16.mxu0 %v264
  %492 = vmatmul.mubr.bf16.gmra.mrb[0].mxu0 %v263
  %v493 = vpop.f32.mrb[0].mxu0
  %v494 = vadd.f32 0.0, %v493
  %v495 = vpop.f32.mrb[0].mxu0
  %v496 = vpop.f32.mrb[0].mxu0
  %v497 = vadd.f32 0.0, %v496
  %v498 = vpop.f32.mrb[0].mxu0
  %499 = vmatprep.mubr.bf16.mxu0 %v266
  %500 = vmatmul.mubr.bf16.gmra.mrb[0].mxu0 %v265
  %v501 = vpop.f32.mrb[0].mxu0
  %v502 = vadd.f32 0.0, %v501
  %v503 = vpop.f32.mrb[0].mxu0
  %v504 = vpop.f32.mrb[0].mxu0
  %v505 = vadd.f32 0.0, %v504
  %v506 = vpop.f32.mrb[0].mxu0
  %507 = vmatprep.mubr.bf16.mxu0 %v268
  %508 = vmatmul.mubr.bf16.gmra.mrb[0].mxu0 %v267
  %v509 = vpop.f32.mrb[0].mxu0
  %v510 = vadd.f32 0.0, %v509
  %v511 = vpop.f32.mrb[0].mxu0
  %v512 = vpop.f32.mrb[0].mxu0
  %v513 = vadd.f32 0.0, %v512
  %v514 = vpop.f32.mrb[0].mxu0
  %515 = vmatprep.mubr.bf16.mxu0 %v270
  %516 = vmatmul.mubr.bf16.gmra.mrb[0].mxu0 %v269
  %v517 = vpop.f32.mrb[0].mxu0
  %v518 = vadd.f32 0.0, %v517
  %v519 = vpop.f32.mrb[0].mxu0
  %v520 = vpop.f32.mrb[0].mxu0
  %v521 = vadd.f32 0.0, %v520
  %v522 = vpop.f32.mrb[0].mxu0
  %523 = vmatprep.mubr.bf16.mxu0 %v272
  %524 = vmatmul.mubr.bf16.gmra.mrb[0].mxu0 %v271
  %v525 = vpop.f32.mrb[0].mxu0
  %v526 = vadd.f32 0.0, %v525
  %v527 = vpop.f32.mrb[0].mxu0
  %v528 = vpop.f32.mrb[0].mxu0
  %v529 = vadd.f32 0.0, %v528
  %v530 = vpop.f32.mrb[0].mxu0
  %531 = vmatprep.mubr.bf16.mxu0 %v274
  %532 = vmatmul.mubr.bf16.gmra.mrb[0].mxu0 %v273
  %v533 = vpop.f32.mrb[0].mxu0
  %v534 = vadd.f32 0.0, %v533
  %v535 = vpop.f32.mrb[0].mxu0
  %v536 = vpop.f32.mrb[0].mxu0
  %v537 = vadd.f32 0.0, %v536
  %v538 = vpop.f32.mrb[0].mxu0
  %539 = vmatprep.mubr.bf16.mxu0 %v276
  %540 = vmatmul.mubr.bf16.gmra.mrb[0].mxu0 %v275
  %v541 = vpop.f32.mrb[0].mxu0
  %v542 = vadd.f32 0.0, %v541
  %v543 = vpop.f32.mrb[0].mxu0
  %v544 = vpop.f32.mrb[0].mxu0
  %v545 = vadd.f32 0.0, %v544
  %v546 = vpop.f32.mrb[0].mxu0
  %547 = vmatprep.mubr.bf16.mxu0 %v278
  %548 = vmatmul.mubr.bf16.gmra.mrb[0].mxu0 %v277
  %v549 = vpop.f32.mrb[0].mxu0
  %v550 = vadd.f32 0.0, %v549
  %v551 = vpop.f32.mrb[0].mxu0
  %v552 = vpop.f32.mrb[0].mxu0
  %v553 = vadd.f32 0.0, %v552
  %v554 = vpop.f32.mrb[0].mxu0
  %555 = vmatprep.mubr.bf16.mxu0 %v280
  %556 = vmatmul.mubr.bf16.gmra.mrb[0].mxu0 %v279
  %v557 = vpop.f32.mrb[0].mxu0
  %v558 = vadd.f32 0.0, %v557
  %v559 = vpop.f32.mrb[0].mxu0
  %v560 = vpop.f32.mrb[0].mxu0
  %v561 = vadd.f32 0.0, %v560
  %v562 = vpop.f32.mrb[0].mxu0
  %563 = vmatprep.mubr.bf16.mxu0 %v282
  %564 = vmatmul.mubr.bf16.gmra.mrb[0].mxu0 %v281
  %v565 = vpop.f32.mrb[0].mxu0
  %v566 = vadd.f32 0.0, %v565
  %v567 = vpop.f32.mrb[0].mxu0
  %v568 = vpop.f32.mrb[0].mxu0
  %v569 = vadd.f32 0.0, %v568
  %v570 = vpop.f32.mrb[0].mxu0
  %571 = vdwg.mxu0
  %v572 = vadd.f32 %v91, %v446
  %v573 = vadd.f32 %v92, %v449
  %v574 = vadd.f32 %v93, %v454
  %v575 = vadd.f32 %v94, %v457
  %v576 = vadd.f32 %v95, %v462
  %v577 = vadd.f32 %v96, %v465
  %v578 = vadd.f32 %v97, %v470
  %v579 = vadd.f32 %v98, %v473
  %v580 = vadd.f32 %v99, %v478
  %v581 = vadd.f32 %v100, %v481
  %v582 = vadd.f32 %v101, %v486
  %v583 = vadd.f32 %v102, %v489
  %v584 = vadd.f32 %v103, %v494
  %v585 = vadd.f32 %v104, %v497
  %v586 = vadd.f32 %v105, %v502
  %v587 = vadd.f32 %v106, %v505
  %v588 = vadd.f32 %v107, %v510
  %v589 = vadd.f32 %v108, %v513
  %v590 = vadd.f32 %v109, %v518
  %v591 = vadd.f32 %v110, %v521
  %v592 = vadd.f32 %v111, %v526
  %v593 = vadd.f32 %v112, %v529
  %v594 = vadd.f32 %v113, %v534
  %v595 = vadd.f32 %v114, %v537
  %v596 = vadd.f32 %v115, %v542
  %v597 = vadd.f32 %v116, %v545
  %v598 = vadd.f32 %v117, %v550
  %v599 = vadd.f32 %v118, %v553
  %v600 = vadd.f32 %v119, %v558
  %v601 = vadd.f32 %v120, %v561
  %v602 = vadd.f32 %v121, %v566
  %v603 = vadd.f32 %v122, %v569
  %604 = vst [vmem:[#allocation2] sm:$0xff] %v572
  %605 = vst [vmem:[#allocation2 + $0x8] sm:$0xff] %v573
  %606 = vst [vmem:[#allocation2 + $0x10] sm:$0xff] %v574
  %607 = vst [vmem:[#allocation2 + $0x18] sm:$0xff] %v575
  %608 = vst [vmem:[#allocation2 + $0x20] sm:$0xff] %v576
  %609 = vst [vmem:[#allocation2 + $0x28] sm:$0xff] %v577
  %610 = vst [vmem:[#allocation2 + $0x30] sm:$0xff] %v578
  %611 = vst [vmem:[#allocation2 + $0x38] sm:$0xff] %v579
  %612 = vst [vmem:[#allocation2 + $0x40] sm:$0xff] %v580
  %613 = vst [vmem:[#allocation2 + $0x48] sm:$0xff] %v581
  %614 = vst [vmem:[#allocation2 + $0x50] sm:$0xff] %v582
  %615 = vst [vmem:[#allocation2 + $0x58] sm:$0xff] %v583
  %616 = vst [vmem:[#allocation2 + $0x60] sm:$0xff] %v584
  %617 = vst [vmem:[#allocation2 + $0x68] sm:$0xff] %v585
  %618 = vst [vmem:[#allocation2 + $0x70] sm:$0xff] %v586
  %619 = vst [vmem:[#allocation2 + $0x78] sm:$0xff] %v587
  %620 = vst [vmem:[#allocation2 + $0x80] sm:$0xff] %v588
  %621 = vst [vmem:[#allocation2 + $0x88] sm:$0xff] %v589
  %622 = vst [vmem:[#allocation2 + $0x90] sm:$0xff] %v590
  %623 = vst [vmem:[#allocation2 + $0x98] sm:$0xff] %v591
  %624 = vst [vmem:[#allocation2 + $0xa0] sm:$0xff] %v592
  %625 = vst [vmem:[#allocation2 + $0xa8] sm:$0xff] %v593
  %626 = vst [vmem:[#allocation2 + $0xb0] sm:$0xff] %v594
  %627 = vst [vmem:[#allocation2 + $0xb8] sm:$0xff] %v595
  %628 = vst [vmem:[#allocation2 + $0xc0] sm:$0xff] %v596
  %629 = vst [vmem:[#allocation2 + $0xc8] sm:$0xff] %v597
  %630 = vst [vmem:[#allocation2 + $0xd0] sm:$0xff] %v598
  %631 = vst [vmem:[#allocation2 + $0xd8] sm:$0xff] %v599
  %632 = vst [vmem:[#allocation2 + $0xe0] sm:$0xff] %v600
  %633 = vst [vmem:[#allocation2 + $0xe8] sm:$0xff] %v601
  %634 = vst [vmem:[#allocation2 + $0xf0] sm:$0xff] %v602
  %635 = vst [vmem:[#allocation2 + $0xf8] sm:$0xff] %v603
  // Predicated region
  $region18: #{gcn2_forward.5} parent=0 // pred_check
    %p636 = pneg %p18
  $region19: #{gcn2_forward.5} parent=0 // pred_check_branch
    %638 = sbr.rel (%p636) target = $region21
  $region20: #{gcn2_forward.5} parent=0 // pred_region
    %v639 = vld [vmem:[#allocation2] sm:$0xff]
    %v640 = vld [vmem:[#allocation2 + $0x8] sm:$0xff]
    %v641 = vld [vmem:[#allocation2 + $0x10] sm:$0xff]
    %v642 = vld [vmem:[#allocation2 + $0x18] sm:$0xff]
    %v643 = vld [vmem:[#allocation2 + $0x20] sm:$0xff]
    %v644 = vld [vmem:[#allocation2 + $0x28] sm:$0xff]
    %v645 = vld [vmem:[#allocation2 + $0x30] sm:$0xff]
    %v646 = vld [vmem:[#allocation2 + $0x38] sm:$0xff]
    %v647 = vld [vmem:[#allocation2 + $0x40] sm:$0xff]
    %v648 = vld [vmem:[#allocation2 + $0x48] sm:$0xff]
    %v649 = vld [vmem:[#allocation2 + $0x50] sm:$0xff]
    %v650 = vld [vmem:[#allocation2 + $0x58] sm:$0xff]
    %v651 = vld [vmem:[#allocation2 + $0x60] sm:$0xff]
    %v652 = vld [vmem:[#allocation2 + $0x68] sm:$0xff]
    %v653 = vld [vmem:[#allocation2 + $0x70] sm:$0xff]
    %v654 = vld [vmem:[#allocation2 + $0x78] sm:$0xff]
    %v655 = vld [vmem:[#allocation2 + $0x80] sm:$0xff]
    %v656 = vld [vmem:[#allocation2 + $0x88] sm:$0xff]
    %v657 = vld [vmem:[#allocation2 + $0x90] sm:$0xff]
    %v658 = vld [vmem:[#allocation2 + $0x98] sm:$0xff]
    %v659 = vld [vmem:[#allocation2 + $0xa0] sm:$0xff]
    %v660 = vld [vmem:[#allocation2 + $0xa8] sm:$0xff]
    %v661 = vld [vmem:[#allocation2 + $0xb0] sm:$0xff]
    %v662 = vld [vmem:[#allocation2 + $0xb8] sm:$0xff]
    %v663 = vld [vmem:[#allocation2 + $0xc0] sm:$0xff]
    %v664 = vld [vmem:[#allocation2 + $0xc8] sm:$0xff]
    %v665 = vld [vmem:[#allocation2 + $0xd0] sm:$0xff]
    %v666 = vld [vmem:[#allocation2 + $0xd8] sm:$0xff]
    %v667 = vld [vmem:[#allocation2 + $0xe0] sm:$0xff]
    %v668 = vld [vmem:[#allocation2 + $0xe8] sm:$0xff]
    %v669 = vld [vmem:[#allocation2 + $0xf0] sm:$0xff]
    %v670 = vld [vmem:[#allocation2 + $0xf8] sm:$0xff]
    %v671 = vld [vmem:[%s2] sm:$0x1]
    %v673 = vlaneseq
    %v674 = vshrl.u32 %v673, 7
    %v675 = vsub.s32 0, %v674
    %v676 = vrot.slane %v671, %v675
    %v678 = vadd.f32 %v639, %v676
    %v679 = vadd.f32 %v640, %v676
    %v680 = vadd.f32 %v641, %v676
    %v681 = vadd.f32 %v642, %v676
    %v682 = vadd.f32 %v643, %v676
    %v683 = vadd.f32 %v644, %v676
    %v684 = vadd.f32 %v645, %v676
    %v685 = vadd.f32 %v646, %v676
    %v686 = vadd.f32 %v647, %v676
    %v687 = vadd.f32 %v648, %v676
    %v688 = vadd.f32 %v649, %v676
    %v689 = vadd.f32 %v650, %v676
    %v690 = vadd.f32 %v651, %v676
    %v691 = vadd.f32 %v652, %v676
    %v692 = vadd.f32 %v653, %v676
    %v693 = vadd.f32 %v654, %v676
    %v694 = vadd.f32 %v655, %v676
    %v695 = vadd.f32 %v656, %v676
    %v696 = vadd.f32 %v657, %v676
    %v697 = vadd.f32 %v658, %v676
    %v698 = vadd.f32 %v659, %v676
    %v699 = vadd.f32 %v660, %v676
    %v700 = vadd.f32 %v661, %v676
    %v701 = vadd.f32 %v662, %v676
    %v702 = vadd.f32 %v663, %v676
    %v703 = vadd.f32 %v664, %v676
    %v704 = vadd.f32 %v665, %v676
    %v705 = vadd.f32 %v666, %v676
    %v706 = vadd.f32 %v667, %v676
    %v707 = vadd.f32 %v668, %v676
    %v708 = vadd.f32 %v669, %v676
    %v709 = vadd.f32 %v670, %v676
    %v710 = vpack.c.bf16 %v679, %v678
    %v711 = vpack.c.bf16 %v681, %v680
    %v712 = vpack.c.bf16 %v683, %v682
    %v713 = vpack.c.bf16 %v685, %v684
    %v714 = vpack.c.bf16 %v687, %v686
    %v715 = vpack.c.bf16 %v689, %v688
    %v716 = vpack.c.bf16 %v691, %v690
    %v717 = vpack.c.bf16 %v693, %v692
    %v718 = vpack.c.bf16 %v695, %v694
    %v719 = vpack.c.bf16 %v697, %v696
    %v720 = vpack.c.bf16 %v699, %v698
    %v721 = vpack.c.bf16 %v701, %v700
    %v722 = vpack.c.bf16 %v703, %v702
    %v723 = vpack.c.bf16 %v705, %v704
    %v724 = vpack.c.bf16 %v707, %v706
    %v725 = vpack.c.bf16 %v709, %v708
    %v742 = vunpack.c.l.b16 %v710
    %v743 = vunpack.c.h.b16 %v710
    %v744 = vunpack.c.l.b16 %v711
    %v745 = vunpack.c.h.b16 %v711
    %v746 = vunpack.c.l.b16 %v712
    %v747 = vunpack.c.h.b16 %v712
    %v748 = vunpack.c.l.b16 %v713
    %v749 = vunpack.c.h.b16 %v713
    %v750 = vunpack.c.l.b16 %v714
    %v751 = vunpack.c.h.b16 %v714
    %v752 = vunpack.c.l.b16 %v715
    %v753 = vunpack.c.h.b16 %v715
    %v754 = vunpack.c.l.b16 %v716
    %v755 = vunpack.c.h.b16 %v716
    %v756 = vunpack.c.l.b16 %v717
    %v757 = vunpack.c.h.b16 %v717
    %v758 = vunpack.c.l.b16 %v718
    %v759 = vunpack.c.h.b16 %v718
    %v760 = vunpack.c.l.b16 %v719
    %v761 = vunpack.c.h.b16 %v719
    %v762 = vunpack.c.l.b16 %v720
    %v763 = vunpack.c.h.b16 %v720
    %v764 = vunpack.c.l.b16 %v721
    %v765 = vunpack.c.h.b16 %v721
    %v766 = vunpack.c.l.b16 %v722
    %v767 = vunpack.c.h.b16 %v722
    %v768 = vunpack.c.l.b16 %v723
    %v769 = vunpack.c.h.b16 %v723
    %v770 = vunpack.c.l.b16 %v724
    %v771 = vunpack.c.h.b16 %v724
    %v772 = vunpack.c.l.b16 %v725
    %v773 = vunpack.c.h.b16 %v725
    %v774 = vpack.c.b16 %v742, %v742
    %v775 = vpack.c.b16 %v743, %v743
    %v776 = vpack.c.b16 %v744, %v744
    %v777 = vpack.c.b16 %v745, %v745
    %v778 = vpack.c.b16 %v746, %v746
    %v779 = vpack.c.b16 %v747, %v747
    %v780 = vpack.c.b16 %v748, %v748
    %v781 = vpack.c.b16 %v749, %v749
    %v782 = vpack.c.b16 %v750, %v750
    %v783 = vpack.c.b16 %v751, %v751
    %v784 = vpack.c.b16 %v752, %v752
    %v785 = vpack.c.b16 %v753, %v753
    %v786 = vpack.c.b16 %v754, %v754
    %v787 = vpack.c.b16 %v755, %v755
    %v788 = vpack.c.b16 %v756, %v756
    %v789 = vpack.c.b16 %v757, %v757
    %v790 = vpack.c.b16 %v758, %v758
    %v791 = vpack.c.b16 %v759, %v759
    %v792 = vpack.c.b16 %v760, %v760
    %v793 = vpack.c.b16 %v761, %v761
    %v794 = vpack.c.b16 %v762, %v762
    %v795 = vpack.c.b16 %v763, %v763
    %v796 = vpack.c.b16 %v764, %v764
    %v797 = vpack.c.b16 %v765, %v765
    %v798 = vpack.c.b16 %v766, %v766
    %v799 = vpack.c.b16 %v767, %v767
    %v800 = vpack.c.b16 %v768, %v768
    %v801 = vpack.c.b16 %v769, %v769
    %v802 = vpack.c.b16 %v770, %v770
    %v803 = vpack.c.b16 %v771, %v771
    %v804 = vpack.c.b16 %v772, %v772
    %v805 = vpack.c.b16 %v773, %v773
    %838 = vst [vmem:[%s3] sm:$0xf] %v774
    %839 = vst [vmem:[%s3 + $0x4] sm:$0xf] %v775
    %840 = vst [vmem:[%s3 + $0x8] sm:$0xf] %v776
    %841 = vst [vmem:[%s3 + $0xc] sm:$0xf] %v777
    %842 = vst [vmem:[%s3 + $0x10] sm:$0xf] %v778
    %843 = vst [vmem:[%s3 + $0x14] sm:$0xf] %v779
    %844 = vst [vmem:[%s3 + $0x18] sm:$0xf] %v780
    %845 = vst [vmem:[%s3 + $0x1c] sm:$0xf] %v781
    %846 = vst [vmem:[%s3 + $0x20] sm:$0xf] %v782
    %847 = vst [vmem:[%s3 + $0x24] sm:$0xf] %v783
    %848 = vst [vmem:[%s3 + $0x28] sm:$0xf] %v784
    %849 = vst [vmem:[%s3 + $0x2c] sm:$0xf] %v785
    %850 = vst [vmem:[%s3 + $0x30] sm:$0xf] %v786
    %851 = vst [vmem:[%s3 + $0x34] sm:$0xf] %v787
    %852 = vst [vmem:[%s3 + $0x38] sm:$0xf] %v788
    %853 = vst [vmem:[%s3 + $0x3c] sm:$0xf] %v789
    %854 = vst [vmem:[%s3 + $0x40] sm:$0xf] %v790
    %855 = vst [vmem:[%s3 + $0x44] sm:$0xf] %v791
    %856 = vst [vmem:[%s3 + $0x48] sm:$0xf] %v792
    %857 = vst [vmem:[%s3 + $0x4c] sm:$0xf] %v793
    %858 = vst [vmem:[%s3 + $0x50] sm:$0xf] %v794
    %859 = vst [vmem:[%s3 + $0x54] sm:$0xf] %v795
    %860 = vst [vmem:[%s3 + $0x58] sm:$0xf] %v796
    %861 = vst [vmem:[%s3 + $0x5c] sm:$0xf] %v797
    %862 = vst [vmem:[%s3 + $0x60] sm:$0xf] %v798
    %863 = vst [vmem:[%s3 + $0x64] sm:$0xf] %v799
    %864 = vst [vmem:[%s3 + $0x68] sm:$0xf] %v800
    %865 = vst [vmem:[%s3 + $0x6c] sm:$0xf] %v801
    %866 = vst [vmem:[%s3 + $0x70] sm:$0xf] %v802
    %867 = vst [vmem:[%s3 + $0x74] sm:$0xf] %v803
    %868 = vst [vmem:[%s3 + $0x78] sm:$0xf] %v804
    %869 = vst [vmem:[%s3 + $0x7c] sm:$0xf] %v805
    %s870 = smul.u32 0, 256
    %v871 = vlaneseq
    %v872 = vshrl.u32 %v871, 7
    %v873 = vadd.s32 %v872, 8
    %v874 = vadd.s32 %v872, 16
    %v875 = vadd.s32 %v872, 24
    %v876 = vadd.s32 %v872, 32
    %v877 = vadd.s32 %v872, 40
    %v878 = vadd.s32 %v872, 48
    %v879 = vadd.s32 %v872, 56
    %v880 = vadd.s32 %v872, 64
    %v881 = vadd.s32 %v872, 72
    %v882 = vadd.s32 %v872, 80
    %v883 = vadd.s32 %v872, 88
    %v884 = vadd.s32 %v872, 96
    %v885 = vadd.s32 %v872, 104
    %v886 = vadd.s32 %v872, 112
    %v887 = vadd.s32 %v872, 120
    %v888 = vadd.s32 %v872, 128
    %v889 = vadd.s32 %v872, 136
    %v890 = vadd.s32 %v872, 144
    %v891 = vadd.s32 %v872, 152
    %v892 = vadd.s32 %v872, 160
    %v893 = vadd.s32 %v872, 168
    %v894 = vadd.s32 %v872, 176
    %v895 = vadd.s32 %v872, 184
    %v896 = vadd.s32 %v872, 192
    %v897 = vadd.s32 %v872, 200
    %v898 = vadd.s32 %v872, 208
    %v899 = vadd.s32 %v872, 216
    %v900 = vadd.s32 %v872, 224
    %v901 = vadd.s32 %v872, 232
    %v902 = vadd.s32 %v872, 240
    %v903 = vadd.s32 %v872, 248
    %v904 = vstv %s870
    %v905 = vadd.s32 %v904, %v872
    %v906 = vadd.s32 %v904, %v873
    %v907 = vadd.s32 %v904, %v874
    %v908 = vadd.s32 %v904, %v875
    %v909 = vadd.s32 %v904, %v876
    %v910 = vadd.s32 %v904, %v877
    %v911 = vadd.s32 %v904, %v878
    %v912 = vadd.s32 %v904, %v879
    %v913 = vadd.s32 %v904, %v880
    %v914 = vadd.s32 %v904, %v881
    %v915 = vadd.s32 %v904, %v882
    %v916 = vadd.s32 %v904, %v883
    %v917 = vadd.s32 %v904, %v884
    %v918 = vadd.s32 %v904, %v885
    %v919 = vadd.s32 %v904, %v886
    %v920 = vadd.s32 %v904, %v887
    %v921 = vadd.s32 %v904, %v888
    %v922 = vadd.s32 %v904, %v889
    %v923 = vadd.s32 %v904, %v890
    %v924 = vadd.s32 %v904, %v891
    %v925 = vadd.s32 %v904, %v892
    %v926 = vadd.s32 %v904, %v893
    %v927 = vadd.s32 %v904, %v894
    %v928 = vadd.s32 %v904, %v895
    %v929 = vadd.s32 %v904, %v896
    %v930 = vadd.s32 %v904, %v897
    %v931 = vadd.s32 %v904, %v898
    %v932 = vadd.s32 %v904, %v899
    %v933 = vadd.s32 %v904, %v900
    %v934 = vadd.s32 %v904, %v901
    %v935 = vadd.s32 %v904, %v902
    %v936 = vadd.s32 %v904, %v903
    %vm937 = vcmp.lt.s32.totalorder %v905, 32
    %vm938 = vcmp.lt.s32.totalorder %v906, 32
    %vm939 = vcmp.lt.s32.totalorder %v907, 32
    %vm940 = vcmp.lt.s32.totalorder %v908, 32
    %vm941 = vcmp.lt.s32.totalorder %v909, 32
    %vm942 = vcmp.lt.s32.totalorder %v910, 32
    %vm943 = vcmp.lt.s32.totalorder %v911, 32
    %vm944 = vcmp.lt.s32.totalorder %v912, 32
    %vm945 = vcmp.lt.s32.totalorder %v913, 32
    %vm946 = vcmp.lt.s32.totalorder %v914, 32
    %vm947 = vcmp.lt.s32.totalorder %v915, 32
    %vm948 = vcmp.lt.s32.totalorder %v916, 32
    %vm949 = vcmp.lt.s32.totalorder %v917, 32
    %vm950 = vcmp.lt.s32.totalorder %v918, 32
    %vm951 = vcmp.lt.s32.totalorder %v919, 32
    %vm952 = vcmp.lt.s32.totalorder %v920, 32
    %vm953 = vcmp.lt.s32.totalorder %v921, 32
    %vm954 = vcmp.lt.s32.totalorder %v922, 32
    %vm955 = vcmp.lt.s32.totalorder %v923, 32
    %vm956 = vcmp.lt.s32.totalorder %v924, 32
    %vm957 = vcmp.lt.s32.totalorder %v925, 32
    %vm958 = vcmp.lt.s32.totalorder %v926, 32
    %vm959 = vcmp.lt.s32.totalorder %v927, 32
    %vm960 = vcmp.lt.s32.totalorder %v928, 32
    %vm961 = vcmp.lt.s32.totalorder %v929, 32
    %vm962 = vcmp.lt.s32.totalorder %v930, 32
    %vm963 = vcmp.lt.s32.totalorder %v931, 32
    %vm964 = vcmp.lt.s32.totalorder %v932, 32
    %vm965 = vcmp.lt.s32.totalorder %v933, 32
    %vm966 = vcmp.lt.s32.totalorder %v934, 32
    %vm967 = vcmp.lt.s32.totalorder %v935, 32
    %vm968 = vcmp.lt.s32.totalorder %v936, 32
    %v969 = vsel %vm937, 1, 0
    %v970 = vsel %vm938, 1, 0
    %v971 = vsel %vm939, 1, 0
    %v972 = vsel %vm940, 1, 0
    %v973 = vsel %vm941, 1, 0
    %v974 = vsel %vm942, 1, 0
    %v975 = vsel %vm943, 1, 0
    %v976 = vsel %vm944, 1, 0
    %v977 = vsel %vm945, 1, 0
    %v978 = vsel %vm946, 1, 0
    %v979 = vsel %vm947, 1, 0
    %v980 = vsel %vm948, 1, 0
    %v981 = vsel %vm949, 1, 0
    %v982 = vsel %vm950, 1, 0
    %v983 = vsel %vm951, 1, 0
    %v984 = vsel %vm952, 1, 0
    %v985 = vsel %vm953, 1, 0
    %v986 = vsel %vm954, 1, 0
    %v987 = vsel %vm955, 1, 0
    %v988 = vsel %vm956, 1, 0
    %v989 = vsel %vm957, 1, 0
    %v990 = vsel %vm958, 1, 0
    %v991 = vsel %vm959, 1, 0
    %v992 = vsel %vm960, 1, 0
    %v993 = vsel %vm961, 1, 0
    %v994 = vsel %vm962, 1, 0
    %v995 = vsel %vm963, 1, 0
    %v996 = vsel %vm964, 1, 0
    %v997 = vsel %vm965, 1, 0
    %v998 = vsel %vm966, 1, 0
    %v999 = vsel %vm967, 1, 0
    %v1000 = vsel %vm968, 1, 0
    %vm1001 = vcmp.eq.s32.totalorder %v969, 1
    %vm1002 = vcmp.eq.s32.totalorder %v970, 1
    %vm1003 = vcmp.eq.s32.totalorder %v971, 1
    %vm1004 = vcmp.eq.s32.totalorder %v972, 1
    %vm1005 = vcmp.eq.s32.totalorder %v973, 1
    %vm1006 = vcmp.eq.s32.totalorder %v974, 1
    %vm1007 = vcmp.eq.s32.totalorder %v975, 1
    %vm1008 = vcmp.eq.s32.totalorder %v976, 1
    %vm1009 = vcmp.eq.s32.totalorder %v977, 1
    %vm1010 = vcmp.eq.s32.totalorder %v978, 1
    %vm1011 = vcmp.eq.s32.totalorder %v979, 1
    %vm1012 = vcmp.eq.s32.totalorder %v980, 1
    %vm1013 = vcmp.eq.s32.totalorder %v981, 1
    %vm1014 = vcmp.eq.s32.totalorder %v982, 1
    %vm1015 = vcmp.eq.s32.totalorder %v983, 1
    %vm1016 = vcmp.eq.s32.totalorder %v984, 1
    %vm1017 = vcmp.eq.s32.totalorder %v985, 1
    %vm1018 = vcmp.eq.s32.totalorder %v986, 1
    %vm1019 = vcmp.eq.s32.totalorder %v987, 1
    %vm1020 = vcmp.eq.s32.totalorder %v988, 1
    %vm1021 = vcmp.eq.s32.totalorder %v989, 1
    %vm1022 = vcmp.eq.s32.totalorder %v990, 1
    %vm1023 = vcmp.eq.s32.totalorder %v991, 1
    %vm1024 = vcmp.eq.s32.totalorder %v992, 1
    %vm1025 = vcmp.eq.s32.totalorder %v993, 1
    %vm1026 = vcmp.eq.s32.totalorder %v994, 1
    %vm1027 = vcmp.eq.s32.totalorder %v995, 1
    %vm1028 = vcmp.eq.s32.totalorder %v996, 1
    %vm1029 = vcmp.eq.s32.totalorder %v997, 1
    %vm1030 = vcmp.eq.s32.totalorder %v998, 1
    %vm1031 = vcmp.eq.s32.totalorder %v999, 1
    %vm1032 = vcmp.eq.s32.totalorder %v1000, 1
    %v1033 = vsel %vm1001, %v678, 0.0
    %v1034 = vsel %vm1002, %v679, 0.0
    %v1035 = vsel %vm1003, %v680, 0.0
    %v1036 = vsel %vm1004, %v681, 0.0
    %v1037 = vsel %vm1005, %v682, 0.0
    %v1038 = vsel %vm1006, %v683, 0.0
    %v1039 = vsel %vm1007, %v684, 0.0
    %v1040 = vsel %vm1008, %v685, 0.0
    %v1041 = vsel %vm1009, %v686, 0.0
    %v1042 = vsel %vm1010, %v687, 0.0
    %v1043 = vsel %vm1011, %v688, 0.0
    %v1044 = vsel %vm1012, %v689, 0.0
    %v1045 = vsel %vm1013, %v690, 0.0
    %v1046 = vsel %vm1014, %v691, 0.0
    %v1047 = vsel %vm1015, %v692, 0.0
    %v1048 = vsel %vm1016, %v693, 0.0
    %v1049 = vsel %vm1017, %v694, 0.0
    %v1050 = vsel %vm1018, %v695, 0.0
    %v1051 = vsel %vm1019, %v696, 0.0
    %v1052 = vsel %vm1020, %v697, 0.0
    %v1053 = vsel %vm1021, %v698, 0.0
    %v1054 = vsel %vm1022, %v699, 0.0
    %v1055 = vsel %vm1023, %v700, 0.0
    %v1056 = vsel %vm1024, %v701, 0.0
    %v1057 = vsel %vm1025, %v702, 0.0
    %v1058 = vsel %vm1026, %v703, 0.0
    %v1059 = vsel %vm1027, %v704, 0.0
    %v1060 = vsel %vm1028, %v705, 0.0
    %v1061 = vsel %vm1029, %v706, 0.0
    %v1062 = vsel %vm1030, %v707, 0.0
    %v1063 = vsel %vm1031, %v708, 0.0
    %v1064 = vsel %vm1032, %v709, 0.0
    %v1065 = vadd.f32 %v1033, %v1034
    %v1066 = vadd.f32 %v1065, %v1035
    %v1067 = vadd.f32 %v1066, %v1036
    %v1068 = vadd.f32 %v1067, %v1037
    %v1069 = vadd.f32 %v1068, %v1038
    %v1070 = vadd.f32 %v1069, %v1039
    %v1071 = vadd.f32 %v1070, %v1040
    %v1072 = vadd.f32 %v1071, %v1041
    %v1073 = vadd.f32 %v1072, %v1042
    %v1074 = vadd.f32 %v1073, %v1043
    %v1075 = vadd.f32 %v1074, %v1044
    %v1076 = vadd.f32 %v1075, %v1045
    %v1077 = vadd.f32 %v1076, %v1046
    %v1078 = vadd.f32 %v1077, %v1047
    %v1079 = vadd.f32 %v1078, %v1048
    %v1080 = vadd.f32 %v1079, %v1049
    %v1081 = vadd.f32 %v1080, %v1050
    %v1082 = vadd.f32 %v1081, %v1051
    %v1083 = vadd.f32 %v1082, %v1052
    %v1084 = vadd.f32 %v1083, %v1053
    %v1085 = vadd.f32 %v1084, %v1054
    %v1086 = vadd.f32 %v1085, %v1055
    %v1087 = vadd.f32 %v1086, %v1056
    %v1088 = vadd.f32 %v1087, %v1057
    %v1089 = vadd.f32 %v1088, %v1058
    %v1090 = vadd.f32 %v1089, %v1059
    %v1091 = vadd.f32 %v1090, %v1060
    %v1092 = vadd.f32 %v1091, %v1061
    %v1093 = vadd.f32 %v1092, %v1062
    %v1094 = vadd.f32 %v1093, %v1063
    %v1095 = vadd.f32 %v1094, %v1064
    %v1096 = vrot.slane %v1095, 4
    %v1097 = vadd.f32 %v1095, %v1096
    %v1098 = vrot.slane %v1097, 2
    %v1099 = vadd.f32 %v1097, %v1098
    %v1100 = vrot.slane %v1099, 1
    %v1101 = vadd.f32 %v1099, %v1100
    %v1102 = vmul.f32 %v1033, %v1033
    %v1103 = vmul.f32 %v1034, %v1034
    %v1104 = vmul.f32 %v1035, %v1035
    %v1105 = vmul.f32 %v1036, %v1036
    %v1106 = vmul.f32 %v1037, %v1037
    %v1107 = vmul.f32 %v1038, %v1038
    %v1108 = vmul.f32 %v1039, %v1039
    %v1109 = vmul.f32 %v1040, %v1040
    %v1110 = vmul.f32 %v1041, %v1041
    %v1111 = vmul.f32 %v1042, %v1042
    %v1112 = vmul.f32 %v1043, %v1043
    %v1113 = vmul.f32 %v1044, %v1044
    %v1114 = vmul.f32 %v1045, %v1045
    %v1115 = vmul.f32 %v1046, %v1046
    %v1116 = vmul.f32 %v1047, %v1047
    %v1117 = vmul.f32 %v1048, %v1048
    %v1118 = vmul.f32 %v1049, %v1049
    %v1119 = vmul.f32 %v1050, %v1050
    %v1120 = vmul.f32 %v1051, %v1051
    %v1121 = vmul.f32 %v1052, %v1052
    %v1122 = vmul.f32 %v1053, %v1053
    %v1123 = vmul.f32 %v1054, %v1054
    %v1124 = vmul.f32 %v1055, %v1055
    %v1125 = vmul.f32 %v1056, %v1056
    %v1126 = vmul.f32 %v1057, %v1057
    %v1127 = vmul.f32 %v1058, %v1058
    %v1128 = vmul.f32 %v1059, %v1059
    %v1129 = vmul.f32 %v1060, %v1060
    %v1130 = vmul.f32 %v1061, %v1061
    %v1131 = vmul.f32 %v1062, %v1062
    %v1132 = vmul.f32 %v1063, %v1063
    %v1133 = vmul.f32 %v1064, %v1064
    %v1134 = vadd.f32 %v1102, %v1103
    %v1135 = vadd.f32 %v1134, %v1104
    %v1136 = vadd.f32 %v1135, %v1105
    %v1137 = vadd.f32 %v1136, %v1106
    %v1138 = vadd.f32 %v1137, %v1107
    %v1139 = vadd.f32 %v1138, %v1108
    %v1140 = vadd.f32 %v1139, %v1109
    %v1141 = vadd.f32 %v1140, %v1110
    %v1142 = vadd.f32 %v1141, %v1111
    %v1143 = vadd.f32 %v1142, %v1112
    %v1144 = vadd.f32 %v1143, %v1113
    %v1145 = vadd.f32 %v1144, %v1114
    %v1146 = vadd.f32 %v1145, %v1115
    %v1147 = vadd.f32 %v1146, %v1116
    %v1148 = vadd.f32 %v1147, %v1117
    %v1149 = vadd.f32 %v1148, %v1118
    %v1150 = vadd.f32 %v1149, %v1119
    %v1151 = vadd.f32 %v1150, %v1120
    %v1152 = vadd.f32 %v1151, %v1121
    %v1153 = vadd.f32 %v1152, %v1122
    %v1154 = vadd.f32 %v1153, %v1123
    %v1155 = vadd.f32 %v1154, %v1124
    %v1156 = vadd.f32 %v1155, %v1125
    %v1157 = vadd.f32 %v1156, %v1126
    %v1158 = vadd.f32 %v1157, %v1127
    %v1159 = vadd.f32 %v1158, %v1128
    %v1160 = vadd.f32 %v1159, %v1129
    %v1161 = vadd.f32 %v1160, %v1130
    %v1162 = vadd.f32 %v1161, %v1131
    %v1163 = vadd.f32 %v1162, %v1132
    %v1164 = vadd.f32 %v1163, %v1133
    %v1165 = vrot.slane %v1164, 4
    %v1166 = vadd.f32 %v1164, %v1165
    %v1167 = vrot.slane %v1166, 2
    %v1168 = vadd.f32 %v1166, %v1167
    %v1169 = vrot.slane %v1168, 1
    %v1170 = vadd.f32 %v1168, %v1169
    %vm1171 = vcmp.eq.s32.totalorder %v872, 0
    %v1172 = vsel %vm1171, %v1101, 0.0
    %1173 = vst [vmem:[%s4] sm:$0xff] %v1172
    %v1174 = vsel %vm1171, %v1170, 0.0
    %1175 = vst [vmem:[%s5] sm:$0xff] %v1174
  $region21: #{gcn2_forward.5} parent=0 // pred_fallthru
    _
  // Predicated region
  $region22: #{gcn2_forward.5} parent=0 // pred_check
    _
  $region23: #{gcn2_forward.5} parent=0 // pred_check_branch
    %1177 = sbr.rel (0) target = $region25
  $region24: #{gcn2_forward.5} parent=0 // pred_region
    _
  $region25: #{gcn2_forward.5} parent=0 // pred_fallthru
    _
  // Predicated region
  $region26: #{gcn2_forward.5} parent=0 // pred_check
    _
  $region27: #{gcn2_forward.5} parent=0 // pred_check_branch
    %1179 = sbr.rel (0) target = $region29
  $region28: #{gcn2_forward.5} parent=0 // pred_region
    _
  $region29: #{gcn2_forward.5} parent=0 // pred_fallthru
    _
  // Predicated region
  $region30: #{gcn2_forward.5} parent=0 // pred_check
    _
  $region31: #{gcn2_forward.5} parent=0 // pred_check_branch
    %1181 = sbr.rel (0) target = $region33
  $region32: #{gcn2_forward.5} parent=0 // pred_region
    _
  $region33: #{gcn2_forward.5} parent=0 // pred_fallthru
    _
  // Predicated region
  $region34: #{gcn2_forward.5} parent=0 // pred_check
    _
  $region35: #{gcn2_forward.5} parent=0 // pred_check_branch
    %1183 = sbr.rel (0) target = $region37
  $region36: #{gcn2_forward.5} parent=0 // pred_region
    _
  $region37: #{gcn2_forward.5} parent=0 // pred_fallthru
    _
  // Predicated region
  $region38: #{gcn2_forward.5} parent=0 // pred_check
    _
  $region39: #{gcn2_forward.5} parent=0 // pred_check_branch
    %1185 = sbr.rel (0) target = $region41
  $region40: #{gcn2_forward.5} parent=0 // pred_region
    _
  $region41: #{gcn2_forward.5} parent=0 // pred_fallthru
    _
  // Predicated region
  $region42: #{gcn2_forward.5} parent=0 // pred_check
    _
  $region43: #{gcn2_forward.5} parent=0 // pred_check_branch
    %1187 = sbr.rel (0) target = $region45
  $region44: #{gcn2_forward.5} parent=0 // pred_region
    _
  $region45: #{gcn2_forward.5} parent=0 // pred_fallthru
    _

// kernel: gcn2_forward.6
$region0: #{gcn2_forward.6}
  #allocation0 [shape = 'u32[]', space=smem, size = 0x4, offset = 0x4, fixed_abs, tag = 'smem constant byte address 0x4 - core index']
  #allocation1 [shape = 'u32[144,128]{1,0:T(1,128)}', space=vmem, size = 0x12000, scoped, tag = 'internal scratch']
  %s0 = inlined_call_operand.vmem [shape: bf16[256,128], index: 0, kind: input, shape index: {}]
  %s1 = inlined_call_operand.vmem [shape: f32[1,128], index: 1, kind: input, shape index: {}]
  %s2 = inlined_call_operand.vmem [shape: f32[1,128], index: 2, kind: input, shape index: {}]
  %s3 = inlined_call_operand.vmem [shape: bf16[128,128], index: 3, kind: input, shape index: {}]
  %s4 = inlined_call_operand.vmem [shape: bf16[256,128], index: 4, kind: output, shape index: {}]
  %s5 = sld [smem:[#allocation0]]
  $region26: #{gcn2_forward.6} parent=0
    _
  %s7 = ssub.s32 1, %s5
  %s8 = scalar_select 0, %s7, %s5
  // Predicated region
  $region2: #{gcn2_forward.6} parent=0 // pred_check
    _
  $region3: #{gcn2_forward.6} parent=0 // pred_check_branch
    %10 = sbr.rel (0) target = $region5
  $region4: #{gcn2_forward.6} parent=0 // pred_region
    _
  $region5: #{gcn2_forward.6} parent=0 // pred_fallthru
    _
  // Predicated region
  $region6: #{gcn2_forward.6} parent=0 // pred_check
    _
  $region7: #{gcn2_forward.6} parent=0 // pred_check_branch
    %12 = sbr.rel (0) target = $region9
  $region8: #{gcn2_forward.6} parent=0 // pred_region
    _
  $region9: #{gcn2_forward.6} parent=0 // pred_fallthru
    _
  // Predicated region
  $region10: #{gcn2_forward.6} parent=0 // pred_check
    _
  $region11: #{gcn2_forward.6} parent=0 // pred_check_branch
    %14 = sbr.rel (0) target = $region13
  $region12: #{gcn2_forward.6} parent=0 // pred_region
    _
  $region13: #{gcn2_forward.6} parent=0 // pred_fallthru
    _
  // Predicated region
  $region14: #{gcn2_forward.6} parent=0 // pred_check
    _
  $region15: #{gcn2_forward.6} parent=0 // pred_check_branch
    %16 = sbr.rel (0) target = $region17
  $region16: #{gcn2_forward.6} parent=0 // pred_region
    _
  $region17: #{gcn2_forward.6} parent=0 // pred_fallthru
    _
  %v18 = vld [vmem:[%s0] sm:$0xf]
  %v19 = vld [vmem:[%s0 + $0x4] sm:$0xf]
  %v20 = vld [vmem:[%s0 + $0x8] sm:$0xf]
  %v21 = vld [vmem:[%s0 + $0xc] sm:$0xf]
  %v22 = vld [vmem:[%s0 + $0x10] sm:$0xf]
  %v23 = vld [vmem:[%s0 + $0x14] sm:$0xf]
  %v24 = vld [vmem:[%s0 + $0x18] sm:$0xf]
  %v25 = vld [vmem:[%s0 + $0x1c] sm:$0xf]
  %v26 = vld [vmem:[%s0 + $0x20] sm:$0xf]
  %v27 = vld [vmem:[%s0 + $0x24] sm:$0xf]
  %v28 = vld [vmem:[%s0 + $0x28] sm:$0xf]
  %v29 = vld [vmem:[%s0 + $0x2c] sm:$0xf]
  %v30 = vld [vmem:[%s0 + $0x30] sm:$0xf]
  %v31 = vld [vmem:[%s0 + $0x34] sm:$0xf]
  %v32 = vld [vmem:[%s0 + $0x38] sm:$0xf]
  %v33 = vld [vmem:[%s0 + $0x3c] sm:$0xf]
  %v34 = vld [vmem:[%s0 + $0x40] sm:$0xf]
  %v35 = vld [vmem:[%s0 + $0x44] sm:$0xf]
  %v36 = vld [vmem:[%s0 + $0x48] sm:$0xf]
  %v37 = vld [vmem:[%s0 + $0x4c] sm:$0xf]
  %v38 = vld [vmem:[%s0 + $0x50] sm:$0xf]
  %v39 = vld [vmem:[%s0 + $0x54] sm:$0xf]
  %v40 = vld [vmem:[%s0 + $0x58] sm:$0xf]
  %v41 = vld [vmem:[%s0 + $0x5c] sm:$0xf]
  %v42 = vld [vmem:[%s0 + $0x60] sm:$0xf]
  %v43 = vld [vmem:[%s0 + $0x64] sm:$0xf]
  %v44 = vld [vmem:[%s0 + $0x68] sm:$0xf]
  %v45 = vld [vmem:[%s0 + $0x6c] sm:$0xf]
  %v46 = vld [vmem:[%s0 + $0x70] sm:$0xf]
  %v47 = vld [vmem:[%s0 + $0x74] sm:$0xf]
  %v48 = vld [vmem:[%s0 + $0x78] sm:$0xf]
  %v49 = vld [vmem:[%s0 + $0x7c] sm:$0xf]
  %v50 = vunpack.c.l.bf16 %v18
  %v51 = vunpack.c.l.bf16 %v19
  %v52 = vunpack.c.l.bf16 %v20
  %v53 = vunpack.c.l.bf16 %v21
  %v54 = vunpack.c.l.bf16 %v22
  %v55 = vunpack.c.l.bf16 %v23
  %v56 = vunpack.c.l.bf16 %v24
  %v57 = vunpack.c.l.bf16 %v25
  %v58 = vunpack.c.l.bf16 %v26
  %v59 = vunpack.c.l.bf16 %v27
  %v60 = vunpack.c.l.bf16 %v28
  %v61 = vunpack.c.l.bf16 %v29
  %v62 = vunpack.c.l.bf16 %v30
  %v63 = vunpack.c.l.bf16 %v31
  %v64 = vunpack.c.l.bf16 %v32
  %v65 = vunpack.c.l.bf16 %v33
  %v66 = vunpack.c.l.bf16 %v34
  %v67 = vunpack.c.l.bf16 %v35
  %v68 = vunpack.c.l.bf16 %v36
  %v69 = vunpack.c.l.bf16 %v37
  %v70 = vunpack.c.l.bf16 %v38
  %v71 = vunpack.c.l.bf16 %v39
  %v72 = vunpack.c.l.bf16 %v40
  %v73 = vunpack.c.l.bf16 %v41
  %v74 = vunpack.c.l.bf16 %v42
  %v75 = vunpack.c.l.bf16 %v43
  %v76 = vunpack.c.l.bf16 %v44
  %v77 = vunpack.c.l.bf16 %v45
  %v78 = vunpack.c.l.bf16 %v46
  %v79 = vunpack.c.l.bf16 %v47
  %v80 = vunpack.c.l.bf16 %v48
  %v81 = vunpack.c.l.bf16 %v49
  %v82 = vld [vmem:[%s1] sm:$0x1]
  %v84 = vlaneseq
  %v85 = vshrl.u32 %v84, 7
  %v86 = vsub.s32 0, %v85
  %v87 = vrot.slane %v82, %v86
  %v89 = vmul.f32 %v50, %v87
  %v90 = vmul.f32 %v51, %v87
  %v91 = vmul.f32 %v52, %v87
  %v92 = vmul.f32 %v53, %v87
  %v93 = vmul.f32 %v54, %v87
  %v94 = vmul.f32 %v55, %v87
  %v95 = vmul.f32 %v56, %v87
  %v96 = vmul.f32 %v57, %v87
  %v97 = vmul.f32 %v58, %v87
  %v98 = vmul.f32 %v59, %v87
  %v99 = vmul.f32 %v60, %v87
  %v100 = vmul.f32 %v61, %v87
  %v101 = vmul.f32 %v62, %v87
  %v102 = vmul.f32 %v63, %v87
  %v103 = vmul.f32 %v64, %v87
  %v104 = vmul.f32 %v65, %v87
  %v105 = vmul.f32 %v66, %v87
  %v106 = vmul.f32 %v67, %v87
  %v107 = vmul.f32 %v68, %v87
  %v108 = vmul.f32 %v69, %v87
  %v109 = vmul.f32 %v70, %v87
  %v110 = vmul.f32 %v71, %v87
  %v111 = vmul.f32 %v72, %v87
  %v112 = vmul.f32 %v73, %v87
  %v113 = vmul.f32 %v74, %v87
  %v114 = vmul.f32 %v75, %v87
  %v115 = vmul.f32 %v76, %v87
  %v116 = vmul.f32 %v77, %v87
  %v117 = vmul.f32 %v78, %v87
  %v118 = vmul.f32 %v79, %v87
  %v119 = vmul.f32 %v80, %v87
  %v120 = vmul.f32 %v81, %v87
  %v121 = vld [vmem:[%s2] sm:$0x1]
  %v123 = vlaneseq
  %v124 = vshrl.u32 %v123, 7
  %v125 = vsub.s32 0, %v124
  %v126 = vrot.slane %v121, %v125
  %v128 = vadd.f32 %v89, %v126
  %v129 = vadd.f32 %v90, %v126
  %v130 = vadd.f32 %v91, %v126
  %v131 = vadd.f32 %v92, %v126
  %v132 = vadd.f32 %v93, %v126
  %v133 = vadd.f32 %v94, %v126
  %v134 = vadd.f32 %v95, %v126
  %v135 = vadd.f32 %v96, %v126
  %v136 = vadd.f32 %v97, %v126
  %v137 = vadd.f32 %v98, %v126
  %v138 = vadd.f32 %v99, %v126
  %v139 = vadd.f32 %v100, %v126
  %v140 = vadd.f32 %v101, %v126
  %v141 = vadd.f32 %v102, %v126
  %v142 = vadd.f32 %v103, %v126
  %v143 = vadd.f32 %v104, %v126
  %v144 = vadd.f32 %v105, %v126
  %v145 = vadd.f32 %v106, %v126
  %v146 = vadd.f32 %v107, %v126
  %v147 = vadd.f32 %v108, %v126
  %v148 = vadd.f32 %v109, %v126
  %v149 = vadd.f32 %v110, %v126
  %v150 = vadd.f32 %v111, %v126
  %v151 = vadd.f32 %v112, %v126
  %v152 = vadd.f32 %v113, %v126
  %v153 = vadd.f32 %v114, %v126
  %v154 = vadd.f32 %v115, %v126
  %v155 = vadd.f32 %v116, %v126
  %v156 = vadd.f32 %v117, %v126
  %v157 = vadd.f32 %v118, %v126
  %v158 = vadd.f32 %v119, %v126
  %v159 = vadd.f32 %v120, %v126
  %v160 = vmax.f32 %v128, 0.0
  %v161 = vmax.f32 %v129, 0.0
  %v162 = vmax.f32 %v130, 0.0
  %v163 = vmax.f32 %v131, 0.0
  %v164 = vmax.f32 %v132, 0.0
  %v165 = vmax.f32 %v133, 0.0
  %v166 = vmax.f32 %v134, 0.0
  %v167 = vmax.f32 %v135, 0.0
  %v168 = vmax.f32 %v136, 0.0
  %v169 = vmax.f32 %v137, 0.0
  %v170 = vmax.f32 %v138, 0.0
  %v171 = vmax.f32 %v139, 0.0
  %v172 = vmax.f32 %v140, 0.0
  %v173 = vmax.f32 %v141, 0.0
  %v174 = vmax.f32 %v142, 0.0
  %v175 = vmax.f32 %v143, 0.0
  %v176 = vmax.f32 %v144, 0.0
  %v177 = vmax.f32 %v145, 0.0
  %v178 = vmax.f32 %v146, 0.0
  %v179 = vmax.f32 %v147, 0.0
  %v180 = vmax.f32 %v148, 0.0
  %v181 = vmax.f32 %v149, 0.0
  %v182 = vmax.f32 %v150, 0.0
  %v183 = vmax.f32 %v151, 0.0
  %v184 = vmax.f32 %v152, 0.0
  %v185 = vmax.f32 %v153, 0.0
  %v186 = vmax.f32 %v154, 0.0
  %v187 = vmax.f32 %v155, 0.0
  %v188 = vmax.f32 %v156, 0.0
  %v189 = vmax.f32 %v157, 0.0
  %v190 = vmax.f32 %v158, 0.0
  %v191 = vmax.f32 %v159, 0.0
  %v192 = vpack.c.bf16 %v161, %v160
  %v193 = vpack.c.bf16 %v163, %v162
  %v194 = vpack.c.bf16 %v165, %v164
  %v195 = vpack.c.bf16 %v167, %v166
  %v196 = vpack.c.bf16 %v169, %v168
  %v197 = vpack.c.bf16 %v171, %v170
  %v198 = vpack.c.bf16 %v173, %v172
  %v199 = vpack.c.bf16 %v175, %v174
  %v200 = vpack.c.bf16 %v177, %v176
  %v201 = vpack.c.bf16 %v179, %v178
  %v202 = vpack.c.bf16 %v181, %v180
  %v203 = vpack.c.bf16 %v183, %v182
  %v204 = vpack.c.bf16 %v185, %v184
  %v205 = vpack.c.bf16 %v187, %v186
  %v206 = vpack.c.bf16 %v189, %v188
  %v207 = vpack.c.bf16 %v191, %v190
  %v208 = vld [vmem:[%s3] sm:$0xf]
  %v209 = vld [vmem:[%s3 + $0x4] sm:$0xf]
  %v210 = vld [vmem:[%s3 + $0x8] sm:$0xf]
  %v211 = vld [vmem:[%s3 + $0xc] sm:$0xf]
  %v212 = vld [vmem:[%s3 + $0x10] sm:$0xf]
  %v213 = vld [vmem:[%s3 + $0x14] sm:$0xf]
  %v214 = vld [vmem:[%s3 + $0x18] sm:$0xf]
  %v215 = vld [vmem:[%s3 + $0x1c] sm:$0xf]
  %v216 = vld [vmem:[%s3 + $0x20] sm:$0xf]
  %v217 = vld [vmem:[%s3 + $0x24] sm:$0xf]
  %v218 = vld [vmem:[%s3 + $0x28] sm:$0xf]
  %v219 = vld [vmem:[%s3 + $0x2c] sm:$0xf]
  %v220 = vld [vmem:[%s3 + $0x30] sm:$0xf]
  %v221 = vld [vmem:[%s3 + $0x34] sm:$0xf]
  %v222 = vld [vmem:[%s3 + $0x38] sm:$0xf]
  %v223 = vld [vmem:[%s3 + $0x3c] sm:$0xf]
  %v240 = vunpack.c.l.b16 %v208
  %v241 = vunpack.c.l.b16 %v209
  %v242 = vunpack.c.l.b16 %v210
  %v243 = vunpack.c.l.b16 %v211
  %v244 = vunpack.c.l.b16 %v212
  %v245 = vunpack.c.l.b16 %v213
  %v246 = vunpack.c.l.b16 %v214
  %v247 = vunpack.c.l.b16 %v215
  %v248 = vunpack.c.l.b16 %v216
  %v249 = vunpack.c.l.b16 %v217
  %v250 = vunpack.c.l.b16 %v218
  %v251 = vunpack.c.l.b16 %v219
  %v252 = vunpack.c.l.b16 %v220
  %v253 = vunpack.c.l.b16 %v221
  %v254 = vunpack.c.l.b16 %v222
  %v255 = vunpack.c.l.b16 %v223
  %v256 = vpack.c.b16 %v241, %v240
  %v257 = vpack.c.b16 %v243, %v242
  %v258 = vpack.c.b16 %v245, %v244
  %v259 = vpack.c.b16 %v247, %v246
  %v260 = vpack.c.b16 %v249, %v248
  %v261 = vpack.c.b16 %v251, %v250
  %v262 = vpack.c.b16 %v253, %v252
  %v263 = vpack.c.b16 %v255, %v254
  %272 = vmatprep.subr.bf16.mxu0 0
  %273 = vmatpush1.bf16.msra.mxu0 %v256
  %274 = vmatprep.subr.bf16.mxu0 0
  %275 = vmatpush1.bf16.msra.mxu0 %v257
  %276 = vmatprep.subr.bf16.mxu0 0
  %277 = vmatpush1.bf16.msra.mxu0 %v258
  %278 = vmatprep.subr.bf16.mxu0 0
  %279 = vmatpush1.bf16.msra.mxu0 %v259
  %280 = vmatprep.subr.bf16.mxu0 0
  %281 = vmatpush1.bf16.msra.mxu0 %v260
  %282 = vmatprep.subr.bf16.mxu0 0
  %283 = vmatpush1.bf16.msra.mxu0 %v261
  %284 = vmatprep.subr.bf16.mxu0 0
  %285 = vmatpush1.bf16.msra.mxu0 %v262
  %286 = vmatprep.subr.bf16.mxu0 0
  %287 = vmatpush1.bf16.msra.mxu0 %v263
  %288 = vmatprep.subr.bf16.mxu0 0
  %289 = vmatpush1.bf16.msra.mxu0 0
  %290 = vmatprep.subr.bf16.mxu0 0
  %291 = vmatpush1.bf16.msra.mxu0 0
  %292 = vmatprep.subr.bf16.mxu0 0
  %293 = vmatpush1.bf16.msra.mxu0 0
  %294 = vmatprep.subr.bf16.mxu0 0
  %295 = vmatpush1.bf16.msra.mxu0 0
  %296 = vmatprep.subr.bf16.mxu0 0
  %297 = vmatpush1.bf16.msra.mxu0 0
  %298 = vmatprep.subr.bf16.mxu0 0
  %299 = vmatpush1.bf16.msra.mxu0 0
  %300 = vmatprep.subr.bf16.mxu0 0
  %301 = vmatpush1.bf16.msra.mxu0 0
  %302 = vmatprep.subr.bf16.mxu0 0
  %303 = vmatpush1.bf16.msra.mxu0 0
  %304 = vmatprep.mubr.bf16.mxu0 0
  %305 = vmatmul.mubr.bf16.gmra.mrb[0].mxu0 %v192
  %v306 = vpop.f32.mrb[0].mxu0
  %v307 = vadd.f32 0.0, %v306
  %v308 = vpop.f32.mrb[0].mxu0
  %v309 = vpop.f32.mrb[0].mxu0
  %v310 = vadd.f32 0.0, %v309
  %v311 = vpop.f32.mrb[0].mxu0
  %312 = vmatprep.mubr.bf16.mxu0 0
  %313 = vmatmul.mubr.bf16.gmra.mrb[0].mxu0 %v193
  %v314 = vpop.f32.mrb[0].mxu0
  %v315 = vadd.f32 0.0, %v314
  %v316 = vpop.f32.mrb[0].mxu0
  %v317 = vpop.f32.mrb[0].mxu0
  %v318 = vadd.f32 0.0, %v317
  %v319 = vpop.f32.mrb[0].mxu0
  %320 = vmatprep.mubr.bf16.mxu0 0
  %321 = vmatmul.mubr.bf16.gmra.mrb[0].mxu0 %v194
  %v322 = vpop.f32.mrb[0].mxu0
  %v323 = vadd.f32 0.0, %v322
  %v324 = vpop.f32.mrb[0].mxu0
  %v325 = vpop.f32.mrb[0].mxu0
  %v326 = vadd.f32 0.0, %v325
  %v327 = vpop.f32.mrb[0].mxu0
  %328 = vmatprep.mubr.bf16.mxu0 0
  %329 = vmatmul.mubr.bf16.gmra.mrb[0].mxu0 %v195
  %v330 = vpop.f32.mrb[0].mxu0
  %v331 = vadd.f32 0.0, %v330
  %v332 = vpop.f32.mrb[0].mxu0
  %v333 = vpop.f32.mrb[0].mxu0
  %v334 = vadd.f32 0.0, %v333
  %v335 = vpop.f32.mrb[0].mxu0
  %336 = vmatprep.mubr.bf16.mxu0 0
  %337 = vmatmul.mubr.bf16.gmra.mrb[0].mxu0 %v196
  %v338 = vpop.f32.mrb[0].mxu0
  %v339 = vadd.f32 0.0, %v338
  %v340 = vpop.f32.mrb[0].mxu0
  %v341 = vpop.f32.mrb[0].mxu0
  %v342 = vadd.f32 0.0, %v341
  %v343 = vpop.f32.mrb[0].mxu0
  %344 = vmatprep.mubr.bf16.mxu0 0
  %345 = vmatmul.mubr.bf16.gmra.mrb[0].mxu0 %v197
  %v346 = vpop.f32.mrb[0].mxu0
  %v347 = vadd.f32 0.0, %v346
  %v348 = vpop.f32.mrb[0].mxu0
  %v349 = vpop.f32.mrb[0].mxu0
  %v350 = vadd.f32 0.0, %v349
  %v351 = vpop.f32.mrb[0].mxu0
  %352 = vmatprep.mubr.bf16.mxu0 0
  %353 = vmatmul.mubr.bf16.gmra.mrb[0].mxu0 %v198
  %v354 = vpop.f32.mrb[0].mxu0
  %v355 = vadd.f32 0.0, %v354
  %v356 = vpop.f32.mrb[0].mxu0
  %v357 = vpop.f32.mrb[0].mxu0
  %v358 = vadd.f32 0.0, %v357
  %v359 = vpop.f32.mrb[0].mxu0
  %360 = vmatprep.mubr.bf16.mxu0 0
  %361 = vmatmul.mubr.bf16.gmra.mrb[0].mxu0 %v199
  %v362 = vpop.f32.mrb[0].mxu0
  %v363 = vadd.f32 0.0, %v362
  %v364 = vpop.f32.mrb[0].mxu0
  %v365 = vpop.f32.mrb[0].mxu0
  %v366 = vadd.f32 0.0, %v365
  %v367 = vpop.f32.mrb[0].mxu0
  %368 = vmatprep.mubr.bf16.mxu0 0
  %369 = vmatmul.mubr.bf16.gmra.mrb[0].mxu0 %v200
  %v370 = vpop.f32.mrb[0].mxu0
  %v371 = vadd.f32 0.0, %v370
  %v372 = vpop.f32.mrb[0].mxu0
  %v373 = vpop.f32.mrb[0].mxu0
  %v374 = vadd.f32 0.0, %v373
  %v375 = vpop.f32.mrb[0].mxu0
  %376 = vmatprep.mubr.bf16.mxu0 0
  %377 = vmatmul.mubr.bf16.gmra.mrb[0].mxu0 %v201
  %v378 = vpop.f32.mrb[0].mxu0
  %v379 = vadd.f32 0.0, %v378
  %v380 = vpop.f32.mrb[0].mxu0
  %v381 = vpop.f32.mrb[0].mxu0
  %v382 = vadd.f32 0.0, %v381
  %v383 = vpop.f32.mrb[0].mxu0
  %384 = vmatprep.mubr.bf16.mxu0 0
  %385 = vmatmul.mubr.bf16.gmra.mrb[0].mxu0 %v202
  %v386 = vpop.f32.mrb[0].mxu0
  %v387 = vadd.f32 0.0, %v386
  %v388 = vpop.f32.mrb[0].mxu0
  %v389 = vpop.f32.mrb[0].mxu0
  %v390 = vadd.f32 0.0, %v389
  %v391 = vpop.f32.mrb[0].mxu0
  %392 = vmatprep.mubr.bf16.mxu0 0
  %393 = vmatmul.mubr.bf16.gmra.mrb[0].mxu0 %v203
  %v394 = vpop.f32.mrb[0].mxu0
  %v395 = vadd.f32 0.0, %v394
  %v396 = vpop.f32.mrb[0].mxu0
  %v397 = vpop.f32.mrb[0].mxu0
  %v398 = vadd.f32 0.0, %v397
  %v399 = vpop.f32.mrb[0].mxu0
  %400 = vmatprep.mubr.bf16.mxu0 0
  %401 = vmatmul.mubr.bf16.gmra.mrb[0].mxu0 %v204
  %v402 = vpop.f32.mrb[0].mxu0
  %v403 = vadd.f32 0.0, %v402
  %v404 = vpop.f32.mrb[0].mxu0
  %v405 = vpop.f32.mrb[0].mxu0
  %v406 = vadd.f32 0.0, %v405
  %v407 = vpop.f32.mrb[0].mxu0
  %408 = vmatprep.mubr.bf16.mxu0 0
  %409 = vmatmul.mubr.bf16.gmra.mrb[0].mxu0 %v205
  %v410 = vpop.f32.mrb[0].mxu0
  %v411 = vadd.f32 0.0, %v410
  %v412 = vpop.f32.mrb[0].mxu0
  %v413 = vpop.f32.mrb[0].mxu0
  %v414 = vadd.f32 0.0, %v413
  %v415 = vpop.f32.mrb[0].mxu0
  %416 = vmatprep.mubr.bf16.mxu0 0
  %417 = vmatmul.mubr.bf16.gmra.mrb[0].mxu0 %v206
  %v418 = vpop.f32.mrb[0].mxu0
  %v419 = vadd.f32 0.0, %v418
  %v420 = vpop.f32.mrb[0].mxu0
  %v421 = vpop.f32.mrb[0].mxu0
  %v422 = vadd.f32 0.0, %v421
  %v423 = vpop.f32.mrb[0].mxu0
  %424 = vmatprep.mubr.bf16.mxu0 0
  %425 = vmatmul.mubr.bf16.gmra.mrb[0].mxu0 %v207
  %v426 = vpop.f32.mrb[0].mxu0
  %v427 = vadd.f32 0.0, %v426
  %v428 = vpop.f32.mrb[0].mxu0
  %v429 = vpop.f32.mrb[0].mxu0
  %v430 = vadd.f32 0.0, %v429
  %v431 = vpop.f32.mrb[0].mxu0
  %432 = vdwg.mxu0
  %v433 = vpack.c.bf16 %v310, %v307
  %v434 = vpack.c.bf16 %v318, %v315
  %v435 = vpack.c.bf16 %v326, %v323
  %v436 = vpack.c.bf16 %v334, %v331
  %v437 = vpack.c.bf16 %v342, %v339
  %v438 = vpack.c.bf16 %v350, %v347
  %v439 = vpack.c.bf16 %v358, %v355
  %v440 = vpack.c.bf16 %v366, %v363
  %v441 = vpack.c.bf16 %v374, %v371
  %v442 = vpack.c.bf16 %v382, %v379
  %v443 = vpack.c.bf16 %v390, %v387
  %v444 = vpack.c.bf16 %v398, %v395
  %v445 = vpack.c.bf16 %v406, %v403
  %v446 = vpack.c.bf16 %v414, %v411
  %v447 = vpack.c.bf16 %v422, %v419
  %v448 = vpack.c.bf16 %v430, %v427
  %v465 = vunpack.c.l.b16 %v433
  %v466 = vunpack.c.h.b16 %v433
  %v467 = vunpack.c.l.b16 %v434
  %v468 = vunpack.c.h.b16 %v434
  %v469 = vunpack.c.l.b16 %v435
  %v470 = vunpack.c.h.b16 %v435
  %v471 = vunpack.c.l.b16 %v436
  %v472 = vunpack.c.h.b16 %v436
  %v473 = vunpack.c.l.b16 %v437
  %v474 = vunpack.c.h.b16 %v437
  %v475 = vunpack.c.l.b16 %v438
  %v476 = vunpack.c.h.b16 %v438
  %v477 = vunpack.c.l.b16 %v439
  %v478 = vunpack.c.h.b16 %v439
  %v479 = vunpack.c.l.b16 %v440
  %v480 = vunpack.c.h.b16 %v440
  %v481 = vunpack.c.l.b16 %v441
  %v482 = vunpack.c.h.b16 %v441
  %v483 = vunpack.c.l.b16 %v442
  %v484 = vunpack.c.h.b16 %v442
  %v485 = vunpack.c.l.b16 %v443
  %v486 = vunpack.c.h.b16 %v443
  %v487 = vunpack.c.l.b16 %v444
  %v488 = vunpack.c.h.b16 %v444
  %v489 = vunpack.c.l.b16 %v445
  %v490 = vunpack.c.h.b16 %v445
  %v491 = vunpack.c.l.b16 %v446
  %v492 = vunpack.c.h.b16 %v446
  %v493 = vunpack.c.l.b16 %v447
  %v494 = vunpack.c.h.b16 %v447
  %v495 = vunpack.c.l.b16 %v448
  %v496 = vunpack.c.h.b16 %v448
  %v497 = vpack.c.b16 %v465, %v465
  %v498 = vpack.c.b16 %v466, %v466
  %v499 = vpack.c.b16 %v467, %v467
  %v500 = vpack.c.b16 %v468, %v468
  %v501 = vpack.c.b16 %v469, %v469
  %v502 = vpack.c.b16 %v470, %v470
  %v503 = vpack.c.b16 %v471, %v471
  %v504 = vpack.c.b16 %v472, %v472
  %v505 = vpack.c.b16 %v473, %v473
  %v506 = vpack.c.b16 %v474, %v474
  %v507 = vpack.c.b16 %v475, %v475
  %v508 = vpack.c.b16 %v476, %v476
  %v509 = vpack.c.b16 %v477, %v477
  %v510 = vpack.c.b16 %v478, %v478
  %v511 = vpack.c.b16 %v479, %v479
  %v512 = vpack.c.b16 %v480, %v480
  %v513 = vpack.c.b16 %v481, %v481
  %v514 = vpack.c.b16 %v482, %v482
  %v515 = vpack.c.b16 %v483, %v483
  %v516 = vpack.c.b16 %v484, %v484
  %v517 = vpack.c.b16 %v485, %v485
  %v518 = vpack.c.b16 %v486, %v486
  %v519 = vpack.c.b16 %v487, %v487
  %v520 = vpack.c.b16 %v488, %v488
  %v521 = vpack.c.b16 %v489, %v489
  %v522 = vpack.c.b16 %v490, %v490
  %v523 = vpack.c.b16 %v491, %v491
  %v524 = vpack.c.b16 %v492, %v492
  %v525 = vpack.c.b16 %v493, %v493
  %v526 = vpack.c.b16 %v494, %v494
  %v527 = vpack.c.b16 %v495, %v495
  %v528 = vpack.c.b16 %v496, %v496
  %561 = vst [vmem:[%s4] sm:$0xf] %v497
  %562 = vst [vmem:[%s4 + $0x4] sm:$0xf] %v498
  %563 = vst [vmem:[%s4 + $0x8] sm:$0xf] %v499
  %564 = vst [vmem:[%s4 + $0xc] sm:$0xf] %v500
  %565 = vst [vmem:[%s4 + $0x10] sm:$0xf] %v501
  %566 = vst [vmem:[%s4 + $0x14] sm:$0xf] %v502
  %567 = vst [vmem:[%s4 + $0x18] sm:$0xf] %v503
  %568 = vst [vmem:[%s4 + $0x1c] sm:$0xf] %v504
  %569 = vst [vmem:[%s4 + $0x20] sm:$0xf] %v505
  %570 = vst [vmem:[%s4 + $0x24] sm:$0xf] %v506
  %571 = vst [vmem:[%s4 + $0x28] sm:$0xf] %v507
  %572 = vst [vmem:[%s4 + $0x2c] sm:$0xf] %v508
  %573 = vst [vmem:[%s4 + $0x30] sm:$0xf] %v509
  %574 = vst [vmem:[%s4 + $0x34] sm:$0xf] %v510
  %575 = vst [vmem:[%s4 + $0x38] sm:$0xf] %v511
  %576 = vst [vmem:[%s4 + $0x3c] sm:$0xf] %v512
  %577 = vst [vmem:[%s4 + $0x40] sm:$0xf] %v513
  %578 = vst [vmem:[%s4 + $0x44] sm:$0xf] %v514
  %579 = vst [vmem:[%s4 + $0x48] sm:$0xf] %v515
  %580 = vst [vmem:[%s4 + $0x4c] sm:$0xf] %v516
  %581 = vst [vmem:[%s4 + $0x50] sm:$0xf] %v517
  %582 = vst [vmem:[%s4 + $0x54] sm:$0xf] %v518
  %583 = vst [vmem:[%s4 + $0x58] sm:$0xf] %v519
  %584 = vst [vmem:[%s4 + $0x5c] sm:$0xf] %v520
  %585 = vst [vmem:[%s4 + $0x60] sm:$0xf] %v521
  %586 = vst [vmem:[%s4 + $0x64] sm:$0xf] %v522
  %587 = vst [vmem:[%s4 + $0x68] sm:$0xf] %v523
  %588 = vst [vmem:[%s4 + $0x6c] sm:$0xf] %v524
  %589 = vst [vmem:[%s4 + $0x70] sm:$0xf] %v525
  %590 = vst [vmem:[%s4 + $0x74] sm:$0xf] %v526
  %591 = vst [vmem:[%s4 + $0x78] sm:$0xf] %v527
  %592 = vst [vmem:[%s4 + $0x7c] sm:$0xf] %v528
  // Predicated region
  $region18: #{gcn2_forward.6} parent=0 // pred_check
    _
  $region19: #{gcn2_forward.6} parent=0 // pred_check_branch
    %594 = sbr.rel (0) target = $region21
  $region20: #{gcn2_forward.6} parent=0 // pred_region
    _
  $region21: #{gcn2_forward.6} parent=0 // pred_fallthru
    _
  // Predicated region
  $region22: #{gcn2_forward.6} parent=0 // pred_check
    _
  $region23: #{gcn2_forward.6} parent=0 // pred_check_branch
    %596 = sbr.rel (0) target = $region25
  $region24: #{gcn2_forward.6} parent=0 // pred_region
    _
  $region25: #{gcn2_forward.6} parent=0 // pred_fallthru
    _

// kernel: gcn2_forward.7
$region0: #{gcn2_forward.7}
  #allocation0 [shape = 'u32[]', space=smem, size = 0x4, offset = 0x4, fixed_abs, tag = 'smem constant byte address 0x4 - core index']
  #allocation1 [shape = 'u32[144,128]{1,0:T(1,128)}', space=vmem, size = 0x12000, scoped, tag = 'internal scratch']
  #allocation2 [shape = 'f32[256,128]{1,0:T(8,128)}', space=vmem, size = 0x20000, scoped, tag = 'scratch operand']
  %s0 = inlined_call_operand.vmem [shape: bf16[256,256], index: 0, kind: input, shape index: {}]
  %s1 = inlined_call_operand.vmem [shape: bf16[256,128], index: 1, kind: input, shape index: {}]
  %s2 = inlined_call_operand.vmem [shape: f32[1,128], index: 2, kind: input, shape index: {}]
  %s3 = inlined_call_operand.vmem [shape: f32[256,128], index: 3, kind: output, shape index: {}]
  %s4 = sld [smem:[#allocation0]]
  $region30: #{gcn2_forward.7} parent=0
    _
  %s6 = ssub.s32 1, %s4
  %s7 = scalar_select 0, %s6, %s4
  // Predicated region
  $region2: #{gcn2_forward.7} parent=0 // pred_check
    _
  $region3: #{gcn2_forward.7} parent=0 // pred_check_branch
    %9 = sbr.rel (0) target = $region5
  $region4: #{gcn2_forward.7} parent=0 // pred_region
    _
  $region5: #{gcn2_forward.7} parent=0 // pred_fallthru
    _
  // Predicated region
  $region6: #{gcn2_forward.7} parent=0 // pred_check
    _
  $region7: #{gcn2_forward.7} parent=0 // pred_check_branch
    %11 = sbr.rel (0) target = $region9
  $region8: #{gcn2_forward.7} parent=0 // pred_region
    _
  $region9: #{gcn2_forward.7} parent=0 // pred_fallthru
    _
  // Predicated region
  $region10: #{gcn2_forward.7} parent=0 // pred_check
    _
  $region11: #{gcn2_forward.7} parent=0 // pred_check_branch
    %13 = sbr.rel (0) target = $region13
  $region12: #{gcn2_forward.7} parent=0 // pred_region
    _
  $region13: #{gcn2_forward.7} parent=0 // pred_fallthru
    _
  %p15 = scmp.eq.s32.totalorder 0, 0
  // Predicated region
  $region14: #{gcn2_forward.7} parent=0 // pred_check
    %p16 = pneg %p15
  $region15: #{gcn2_forward.7} parent=0 // pred_check_branch
    %18 = sbr.rel (%p16) target = $region17
  $region16: #{gcn2_forward.7} parent=0 // pred_region
    %19 = vst [vmem:[#allocation2] sm:$0xff] 0.0
    %20 = vst [vmem:[#allocation2 + $0x8] sm:$0xff] 0.0
    %21 = vst [vmem:[#allocation2 + $0x10] sm:$0xff] 0.0
    %22 = vst [vmem:[#allocation2 + $0x18] sm:$0xff] 0.0
    %23 = vst [vmem:[#allocation2 + $0x20] sm:$0xff] 0.0
    %24 = vst [vmem:[#allocation2 + $0x28] sm:$0xff] 0.0
    %25 = vst [vmem:[#allocation2 + $0x30] sm:$0xff] 0.0
    %26 = vst [vmem:[#allocation2 + $0x38] sm:$0xff] 0.0
    %27 = vst [vmem:[#allocation2 + $0x40] sm:$0xff] 0.0
    %28 = vst [vmem:[#allocation2 + $0x48] sm:$0xff] 0.0
    %29 = vst [vmem:[#allocation2 + $0x50] sm:$0xff] 0.0
    %30 = vst [vmem:[#allocation2 + $0x58] sm:$0xff] 0.0
    %31 = vst [vmem:[#allocation2 + $0x60] sm:$0xff] 0.0
    %32 = vst [vmem:[#allocation2 + $0x68] sm:$0xff] 0.0
    %33 = vst [vmem:[#allocation2 + $0x70] sm:$0xff] 0.0
    %34 = vst [vmem:[#allocation2 + $0x78] sm:$0xff] 0.0
    %35 = vst [vmem:[#allocation2 + $0x80] sm:$0xff] 0.0
    %36 = vst [vmem:[#allocation2 + $0x88] sm:$0xff] 0.0
    %37 = vst [vmem:[#allocation2 + $0x90] sm:$0xff] 0.0
    %38 = vst [vmem:[#allocation2 + $0x98] sm:$0xff] 0.0
    %39 = vst [vmem:[#allocation2 + $0xa0] sm:$0xff] 0.0
    %40 = vst [vmem:[#allocation2 + $0xa8] sm:$0xff] 0.0
    %41 = vst [vmem:[#allocation2 + $0xb0] sm:$0xff] 0.0
    %42 = vst [vmem:[#allocation2 + $0xb8] sm:$0xff] 0.0
    %43 = vst [vmem:[#allocation2 + $0xc0] sm:$0xff] 0.0
    %44 = vst [vmem:[#allocation2 + $0xc8] sm:$0xff] 0.0
    %45 = vst [vmem:[#allocation2 + $0xd0] sm:$0xff] 0.0
    %46 = vst [vmem:[#allocation2 + $0xd8] sm:$0xff] 0.0
    %47 = vst [vmem:[#allocation2 + $0xe0] sm:$0xff] 0.0
    %48 = vst [vmem:[#allocation2 + $0xe8] sm:$0xff] 0.0
    %49 = vst [vmem:[#allocation2 + $0xf0] sm:$0xff] 0.0
    %50 = vst [vmem:[#allocation2 + $0xf8] sm:$0xff] 0.0
  $region17: #{gcn2_forward.7} parent=0 // pred_fallthru
    _
  %s51 = smul.u32 0, 256
  %s52 = sshra.s32 %s51, 3
  %s53 = sand.u32 %s51, 7
  %s54 = smul.addr %s52, 4
  %s55 = scalar_lea.vmem %s1, %s54
  %v56 = vld [vmem:[%s55] sm:$0xf]
  %v57 = vld [vmem:[%s55 + $0x4] sm:$0xf]
  %v58 = vld [vmem:[%s55 + $0x8] sm:$0xf]
  %v59 = vld [vmem:[%s55 + $0xc] sm:$0xf]
  %v60 = vld [vmem:[%s55 + $0x10] sm:$0xf]
  %v61 = vld [vmem:[%s55 + $0x14] sm:$0xf]
  %v62 = vld [vmem:[%s55 + $0x18] sm:$0xf]
  %v63 = vld [vmem:[%s55 + $0x1c] sm:$0xf]
  %v64 = vld [vmem:[%s55 + $0x20] sm:$0xf]
  %v65 = vld [vmem:[%s55 + $0x24] sm:$0xf]
  %v66 = vld [vmem:[%s55 + $0x28] sm:$0xf]
  %v67 = vld [vmem:[%s55 + $0x2c] sm:$0xf]
  %v68 = vld [vmem:[%s55 + $0x30] sm:$0xf]
  %v69 = vld [vmem:[%s55 + $0x34] sm:$0xf]
  %v70 = vld [vmem:[%s55 + $0x38] sm:$0xf]
  %v71 = vld [vmem:[%s55 + $0x3c] sm:$0xf]
  %v72 = vld [vmem:[%s55 + $0x40] sm:$0xf]
  %v73 = vld [vmem:[%s55 + $0x44] sm:$0xf]
  %v74 = vld [vmem:[%s55 + $0x48] sm:$0xf]
  %v75 = vld [vmem:[%s55 + $0x4c] sm:$0xf]
  %v76 = vld [vmem:[%s55 + $0x50] sm:$0xf]
  %v77 = vld [vmem:[%s55 + $0x54] sm:$0xf]
  %v78 = vld [vmem:[%s55 + $0x58] sm:$0xf]
  %v79 = vld [vmem:[%s55 + $0x5c] sm:$0xf]
  %v80 = vld [vmem:[%s55 + $0x60] sm:$0xf]
  %v81 = vld [vmem:[%s55 + $0x64] sm:$0xf]
  %v82 = vld [vmem:[%s55 + $0x68] sm:$0xf]
  %v83 = vld [vmem:[%s55 + $0x6c] sm:$0xf]
  %v84 = vld [vmem:[%s55 + $0x70] sm:$0xf]
  %v85 = vld [vmem:[%s55 + $0x74] sm:$0xf]
  %v86 = vld [vmem:[%s55 + $0x78] sm:$0xf]
  %v87 = vld [vmem:[%s55 + $0x7c] sm:$0xf]
  %v88 = vld [vmem:[#allocation2] sm:$0xff]
  %v89 = vld [vmem:[#allocation2 + $0x8] sm:$0xff]
  %v90 = vld [vmem:[#allocation2 + $0x10] sm:$0xff]
  %v91 = vld [vmem:[#allocation2 + $0x18] sm:$0xff]
  %v92 = vld [vmem:[#allocation2 + $0x20] sm:$0xff]
  %v93 = vld [vmem:[#allocation2 + $0x28] sm:$0xff]
  %v94 = vld [vmem:[#allocation2 + $0x30] sm:$0xff]
  %v95 = vld [vmem:[#allocation2 + $0x38] sm:$0xff]
  %v96 = vld [vmem:[#allocation2 + $0x40] sm:$0xff]
  %v97 = vld [vmem:[#allocation2 + $0x48] sm:$0xff]
  %v98 = vld [vmem:[#allocation2 + $0x50] sm:$0xff]
  %v99 = vld [vmem:[#allocation2 + $0x58] sm:$0xff]
  %v100 = vld [vmem:[#allocation2 + $0x60] sm:$0xff]
  %v101 = vld [vmem:[#allocation2 + $0x68] sm:$0xff]
  %v102 = vld [vmem:[#allocation2 + $0x70] sm:$0xff]
  %v103 = vld [vmem:[#allocation2 + $0x78] sm:$0xff]
  %v104 = vld [vmem:[#allocation2 + $0x80] sm:$0xff]
  %v105 = vld [vmem:[#allocation2 + $0x88] sm:$0xff]
  %v106 = vld [vmem:[#allocation2 + $0x90] sm:$0xff]
  %v107 = vld [vmem:[#allocation2 + $0x98] sm:$0xff]
  %v108 = vld [vmem:[#allocation2 + $0xa0] sm:$0xff]
  %v109 = vld [vmem:[#allocation2 + $0xa8] sm:$0xff]
  %v110 = vld [vmem:[#allocation2 + $0xb0] sm:$0xff]
  %v111 = vld [vmem:[#allocation2 + $0xb8] sm:$0xff]
  %v112 = vld [vmem:[#allocation2 + $0xc0] sm:$0xff]
  %v113 = vld [vmem:[#allocation2 + $0xc8] sm:$0xff]
  %v114 = vld [vmem:[#allocation2 + $0xd0] sm:$0xff]
  %v115 = vld [vmem:[#allocation2 + $0xd8] sm:$0xff]
  %v116 = vld [vmem:[#allocation2 + $0xe0] sm:$0xff]
  %v117 = vld [vmem:[#allocation2 + $0xe8] sm:$0xff]
  %v118 = vld [vmem:[#allocation2 + $0xf0] sm:$0xff]
  %v119 = vld [vmem:[#allocation2 + $0xf8] sm:$0xff]
  %v120 = vld [vmem:[%s0] sm:$0xff]
  %v121 = vld [vmem:[%s0 + $0x8] sm:$0xff]
  %v122 = vld [vmem:[%s0 + $0x10] sm:$0xff]
  %v123 = vld [vmem:[%s0 + $0x18] sm:$0xff]
  %v124 = vld [vmem:[%s0 + $0x20] sm:$0xff]
  %v125 = vld [vmem:[%s0 + $0x28] sm:$0xff]
  %v126 = vld [vmem:[%s0 + $0x30] sm:$0xff]
  %v127 = vld [vmem:[%s0 + $0x38] sm:$0xff]
  %v128 = vld [vmem:[%s0 + $0x40] sm:$0xff]
  %v129 = vld [vmem:[%s0 + $0x48] sm:$0xff]
  %v130 = vld [vmem:[%s0 + $0x50] sm:$0xff]
  %v131 = vld [vmem:[%s0 + $0x58] sm:$0xff]
  %v132 = vld [vmem:[%s0 + $0x60] sm:$0xff]
  %v133 = vld [vmem:[%s0 + $0x68] sm:$0xff]
  %v134 = vld [vmem:[%s0 + $0x70] sm:$0xff]
  %v135 = vld [vmem:[%s0 + $0x78] sm:$0xff]
  %v136 = vld [vmem:[%s0 + $0x80] sm:$0xff]
  %v137 = vld [vmem:[%s0 + $0x88] sm:$0xff]
  %v138 = vld [vmem:[%s0 + $0x90] sm:$0xff]
  %v139 = vld [vmem:[%s0 + $0x98] sm:$0xff]
  %v140 = vld [vmem:[%s0 + $0xa0] sm:$0xff]
  %v141 = vld [vmem:[%s0 + $0xa8] sm:$0xff]
  %v142 = vld [vmem:[%s0 + $0xb0] sm:$0xff]
  %v143 = vld [vmem:[%s0 + $0xb8] sm:$0xff]
  %v144 = vld [vmem:[%s0 + $0xc0] sm:$0xff]
  %v145 = vld [vmem:[%s0 + $0xc8] sm:$0xff]
  %v146 = vld [vmem:[%s0 + $0xd0] sm:$0xff]
  %v147 = vld [vmem:[%s0 + $0xd8] sm:$0xff]
  %v148 = vld [vmem:[%s0 + $0xe0] sm:$0xff]
  %v149 = vld [vmem:[%s0 + $0xe8] sm:$0xff]
  %v150 = vld [vmem:[%s0 + $0xf0] sm:$0xff]
  %v151 = vld [vmem:[%s0 + $0xf8] sm:$0xff]
  %v184 = vunpack.c.l.b16 %v120
  %v185 = vunpack.c.h.b16 %v120
  %v186 = vunpack.c.l.b16 %v121
  %v187 = vunpack.c.h.b16 %v121
  %v188 = vunpack.c.l.b16 %v122
  %v189 = vunpack.c.h.b16 %v122
  %v190 = vunpack.c.l.b16 %v123
  %v191 = vunpack.c.h.b16 %v123
  %v192 = vunpack.c.l.b16 %v124
  %v193 = vunpack.c.h.b16 %v124
  %v194 = vunpack.c.l.b16 %v125
  %v195 = vunpack.c.h.b16 %v125
  %v196 = vunpack.c.l.b16 %v126
  %v197 = vunpack.c.h.b16 %v126
  %v198 = vunpack.c.l.b16 %v127
  %v199 = vunpack.c.h.b16 %v127
  %v200 = vunpack.c.l.b16 %v128
  %v201 = vunpack.c.h.b16 %v128
  %v202 = vunpack.c.l.b16 %v129
  %v203 = vunpack.c.h.b16 %v129
  %v204 = vunpack.c.l.b16 %v130
  %v205 = vunpack.c.h.b16 %v130
  %v206 = vunpack.c.l.b16 %v131
  %v207 = vunpack.c.h.b16 %v131
  %v208 = vunpack.c.l.b16 %v132
  %v209 = vunpack.c.h.b16 %v132
  %v210 = vunpack.c.l.b16 %v133
  %v211 = vunpack.c.h.b16 %v133
  %v212 = vunpack.c.l.b16 %v134
  %v213 = vunpack.c.h.b16 %v134
  %v214 = vunpack.c.l.b16 %v135
  %v215 = vunpack.c.h.b16 %v135
  %v216 = vunpack.c.l.b16 %v136
  %v217 = vunpack.c.h.b16 %v136
  %v218 = vunpack.c.l.b16 %v137
  %v219 = vunpack.c.h.b16 %v137
  %v220 = vunpack.c.l.b16 %v138
  %v221 = vunpack.c.h.b16 %v138
  %v222 = vunpack.c.l.b16 %v139
  %v223 = vunpack.c.h.b16 %v139
  %v224 = vunpack.c.l.b16 %v140
  %v225 = vunpack.c.h.b16 %v140
  %v226 = vunpack.c.l.b16 %v141
  %v227 = vunpack.c.h.b16 %v141
  %v228 = vunpack.c.l.b16 %v142
  %v229 = vunpack.c.h.b16 %v142
  %v230 = vunpack.c.l.b16 %v143
  %v231 = vunpack.c.h.b16 %v143
  %v232 = vunpack.c.l.b16 %v144
  %v233 = vunpack.c.h.b16 %v144
  %v234 = vunpack.c.l.b16 %v145
  %v235 = vunpack.c.h.b16 %v145
  %v236 = vunpack.c.l.b16 %v146
  %v237 = vunpack.c.h.b16 %v146
  %v238 = vunpack.c.l.b16 %v147
  %v239 = vunpack.c.h.b16 %v147
  %v240 = vunpack.c.l.b16 %v148
  %v241 = vunpack.c.h.b16 %v148
  %v242 = vunpack.c.l.b16 %v149
  %v243 = vunpack.c.h.b16 %v149
  %v244 = vunpack.c.l.b16 %v150
  %v245 = vunpack.c.h.b16 %v150
  %v246 = vunpack.c.l.b16 %v151
  %v247 = vunpack.c.h.b16 %v151
  %v248 = vpack.c.b16 %v186, %v184
  %v249 = vpack.c.b16 %v187, %v185
  %v250 = vpack.c.b16 %v190, %v188
  %v251 = vpack.c.b16 %v191, %v189
  %v252 = vpack.c.b16 %v194, %v192
  %v253 = vpack.c.b16 %v195, %v193
  %v254 = vpack.c.b16 %v198, %v196
  %v255 = vpack.c.b16 %v199, %v197
  %v256 = vpack.c.b16 %v202, %v200
  %v257 = vpack.c.b16 %v203, %v201
  %v258 = vpack.c.b16 %v206, %v204
  %v259 = vpack.c.b16 %v207, %v205
  %v260 = vpack.c.b16 %v210, %v208
  %v261 = vpack.c.b16 %v211, %v209
  %v262 = vpack.c.b16 %v214, %v212
  %v263 = vpack.c.b16 %v215, %v213
  %v264 = vpack.c.b16 %v218, %v216
  %v265 = vpack.c.b16 %v219, %v217
  %v266 = vpack.c.b16 %v222, %v220
  %v267 = vpack.c.b16 %v223, %v221
  %v268 = vpack.c.b16 %v226, %v224
  %v269 = vpack.c.b16 %v227, %v225
  %v270 = vpack.c.b16 %v230, %v228
  %v271 = vpack.c.b16 %v231, %v229
  %v272 = vpack.c.b16 %v234, %v232
  %v273 = vpack.c.b16 %v235, %v233
  %v274 = vpack.c.b16 %v238, %v236
  %v275 = vpack.c.b16 %v239, %v237
  %v276 = vpack.c.b16 %v242, %v240
  %v277 = vpack.c.b16 %v243, %v241
  %v278 = vpack.c.b16 %v246, %v244
  %v279 = vpack.c.b16 %v247, %v245
  %v344 = vunpack.c.l.b16 %v56
  %v345 = vunpack.c.l.b16 %v57
  %v346 = vunpack.c.l.b16 %v58
  %v347 = vunpack.c.l.b16 %v59
  %v348 = vunpack.c.l.b16 %v60
  %v349 = vunpack.c.l.b16 %v61
  %v350 = vunpack.c.l.b16 %v62
  %v351 = vunpack.c.l.b16 %v63
  %v352 = vunpack.c.l.b16 %v64
  %v353 = vunpack.c.l.b16 %v65
  %v354 = vunpack.c.l.b16 %v66
  %v355 = vunpack.c.l.b16 %v67
  %v356 = vunpack.c.l.b16 %v68
  %v357 = vunpack.c.l.b16 %v69
  %v358 = vunpack.c.l.b16 %v70
  %v359 = vunpack.c.l.b16 %v71
  %v360 = vunpack.c.l.b16 %v72
  %v361 = vunpack.c.l.b16 %v73
  %v362 = vunpack.c.l.b16 %v74
  %v363 = vunpack.c.l.b16 %v75
  %v364 = vunpack.c.l.b16 %v76
  %v365 = vunpack.c.l.b16 %v77
  %v366 = vunpack.c.l.b16 %v78
  %v367 = vunpack.c.l.b16 %v79
  %v368 = vunpack.c.l.b16 %v80
  %v369 = vunpack.c.l.b16 %v81
  %v370 = vunpack.c.l.b16 %v82
  %v371 = vunpack.c.l.b16 %v83
  %v372 = vunpack.c.l.b16 %v84
  %v373 = vunpack.c.l.b16 %v85
  %v374 = vunpack.c.l.b16 %v86
  %v375 = vunpack.c.l.b16 %v87
  %v376 = vpack.c.b16 %v345, %v344
  %v377 = vpack.c.b16 %v347, %v346
  %v378 = vpack.c.b16 %v349, %v348
  %v379 = vpack.c.b16 %v351, %v350
  %v380 = vpack.c.b16 %v353, %v352
  %v381 = vpack.c.b16 %v355, %v354
  %v382 = vpack.c.b16 %v357, %v356
  %v383 = vpack.c.b16 %v359, %v358
  %v384 = vpack.c.b16 %v361, %v360
  %v385 = vpack.c.b16 %v363, %v362
  %v386 = vpack.c.b16 %v365, %v364
  %v387 = vpack.c.b16 %v367, %v366
  %v388 = vpack.c.b16 %v369, %v368
  %v389 = vpack.c.b16 %v371, %v370
  %v390 = vpack.c.b16 %v373, %v372
  %v391 = vpack.c.b16 %v375, %v374
  %408 = vmatprep.subr.bf16.mxu0 0
  %409 = vmatpush1.bf16.msra.mxu0 %v376
  %410 = vmatprep.subr.bf16.mxu0 0
  %411 = vmatpush1.bf16.msra.mxu0 %v377
  %412 = vmatprep.subr.bf16.mxu0 0
  %413 = vmatpush1.bf16.msra.mxu0 %v378
  %414 = vmatprep.subr.bf16.mxu0 0
  %415 = vmatpush1.bf16.msra.mxu0 %v379
  %416 = vmatprep.subr.bf16.mxu0 0
  %417 = vmatpush1.bf16.msra.mxu0 %v380
  %418 = vmatprep.subr.bf16.mxu0 0
  %419 = vmatpush1.bf16.msra.mxu0 %v381
  %420 = vmatprep.subr.bf16.mxu0 0
  %421 = vmatpush1.bf16.msra.mxu0 %v382
  %422 = vmatprep.subr.bf16.mxu0 0
  %423 = vmatpush1.bf16.msra.mxu0 %v383
  %424 = vmatprep.subr.bf16.mxu0 0
  %425 = vmatpush1.bf16.msra.mxu0 %v384
  %426 = vmatprep.subr.bf16.mxu0 0
  %427 = vmatpush1.bf16.msra.mxu0 %v385
  %428 = vmatprep.subr.bf16.mxu0 0
  %429 = vmatpush1.bf16.msra.mxu0 %v386
  %430 = vmatprep.subr.bf16.mxu0 0
  %431 = vmatpush1.bf16.msra.mxu0 %v387
  %432 = vmatprep.subr.bf16.mxu0 0
  %433 = vmatpush1.bf16.msra.mxu0 %v388
  %434 = vmatprep.subr.bf16.mxu0 0
  %435 = vmatpush1.bf16.msra.mxu0 %v389
  %436 = vmatprep.subr.bf16.mxu0 0
  %437 = vmatpush1.bf16.msra.mxu0 %v390
  %438 = vmatprep.subr.bf16.mxu0 0
  %439 = vmatpush1.bf16.msra.mxu0 %v391
  %440 = vmatprep.mubr.bf16.mxu0 %v249
  %441 = vmatmul.mubr.bf16.gmra.mrb[0].mxu0 %v248
  %v442 = vpop.f32.mrb[0].mxu0
  %v443 = vadd.f32 0.0, %v442
  %v444 = vpop.f32.mrb[0].mxu0
  %v445 = vpop.f32.mrb[0].mxu0
  %v446 = vadd.f32 0.0, %v445
  %v447 = vpop.f32.mrb[0].mxu0
  %448 = vmatprep.mubr.bf16.mxu0 %v251
  %449 = vmatmul.mubr.bf16.gmra.mrb[0].mxu0 %v250
  %v450 = vpop.f32.mrb[0].mxu0
  %v451 = vadd.f32 0.0, %v450
  %v452 = vpop.f32.mrb[0].mxu0
  %v453 = vpop.f32.mrb[0].mxu0
  %v454 = vadd.f32 0.0, %v453
  %v455 = vpop.f32.mrb[0].mxu0
  %456 = vmatprep.mubr.bf16.mxu0 %v253
  %457 = vmatmul.mubr.bf16.gmra.mrb[0].mxu0 %v252
  %v458 = vpop.f32.mrb[0].mxu0
  %v459 = vadd.f32 0.0, %v458
  %v460 = vpop.f32.mrb[0].mxu0
  %v461 = vpop.f32.mrb[0].mxu0
  %v462 = vadd.f32 0.0, %v461
  %v463 = vpop.f32.mrb[0].mxu0
  %464 = vmatprep.mubr.bf16.mxu0 %v255
  %465 = vmatmul.mubr.bf16.gmra.mrb[0].mxu0 %v254
  %v466 = vpop.f32.mrb[0].mxu0
  %v467 = vadd.f32 0.0, %v466
  %v468 = vpop.f32.mrb[0].mxu0
  %v469 = vpop.f32.mrb[0].mxu0
  %v470 = vadd.f32 0.0, %v469
  %v471 = vpop.f32.mrb[0].mxu0
  %472 = vmatprep.mubr.bf16.mxu0 %v257
  %473 = vmatmul.mubr.bf16.gmra.mrb[0].mxu0 %v256
  %v474 = vpop.f32.mrb[0].mxu0
  %v475 = vadd.f32 0.0, %v474
  %v476 = vpop.f32.mrb[0].mxu0
  %v477 = vpop.f32.mrb[0].mxu0
  %v478 = vadd.f32 0.0, %v477
  %v479 = vpop.f32.mrb[0].mxu0
  %480 = vmatprep.mubr.bf16.mxu0 %v259
  %481 = vmatmul.mubr.bf16.gmra.mrb[0].mxu0 %v258
  %v482 = vpop.f32.mrb[0].mxu0
  %v483 = vadd.f32 0.0, %v482
  %v484 = vpop.f32.mrb[0].mxu0
  %v485 = vpop.f32.mrb[0].mxu0
  %v486 = vadd.f32 0.0, %v485
  %v487 = vpop.f32.mrb[0].mxu0
  %488 = vmatprep.mubr.bf16.mxu0 %v261
  %489 = vmatmul.mubr.bf16.gmra.mrb[0].mxu0 %v260
  %v490 = vpop.f32.mrb[0].mxu0
  %v491 = vadd.f32 0.0, %v490
  %v492 = vpop.f32.mrb[0].mxu0
  %v493 = vpop.f32.mrb[0].mxu0
  %v494 = vadd.f32 0.0, %v493
  %v495 = vpop.f32.mrb[0].mxu0
  %496 = vmatprep.mubr.bf16.mxu0 %v263
  %497 = vmatmul.mubr.bf16.gmra.mrb[0].mxu0 %v262
  %v498 = vpop.f32.mrb[0].mxu0
  %v499 = vadd.f32 0.0, %v498
  %v500 = vpop.f32.mrb[0].mxu0
  %v501 = vpop.f32.mrb[0].mxu0
  %v502 = vadd.f32 0.0, %v501
  %v503 = vpop.f32.mrb[0].mxu0
  %504 = vmatprep.mubr.bf16.mxu0 %v265
  %505 = vmatmul.mubr.bf16.gmra.mrb[0].mxu0 %v264
  %v506 = vpop.f32.mrb[0].mxu0
  %v507 = vadd.f32 0.0, %v506
  %v508 = vpop.f32.mrb[0].mxu0
  %v509 = vpop.f32.mrb[0].mxu0
  %v510 = vadd.f32 0.0, %v509
  %v511 = vpop.f32.mrb[0].mxu0
  %512 = vmatprep.mubr.bf16.mxu0 %v267
  %513 = vmatmul.mubr.bf16.gmra.mrb[0].mxu0 %v266
  %v514 = vpop.f32.mrb[0].mxu0
  %v515 = vadd.f32 0.0, %v514
  %v516 = vpop.f32.mrb[0].mxu0
  %v517 = vpop.f32.mrb[0].mxu0
  %v518 = vadd.f32 0.0, %v517
  %v519 = vpop.f32.mrb[0].mxu0
  %520 = vmatprep.mubr.bf16.mxu0 %v269
  %521 = vmatmul.mubr.bf16.gmra.mrb[0].mxu0 %v268
  %v522 = vpop.f32.mrb[0].mxu0
  %v523 = vadd.f32 0.0, %v522
  %v524 = vpop.f32.mrb[0].mxu0
  %v525 = vpop.f32.mrb[0].mxu0
  %v526 = vadd.f32 0.0, %v525
  %v527 = vpop.f32.mrb[0].mxu0
  %528 = vmatprep.mubr.bf16.mxu0 %v271
  %529 = vmatmul.mubr.bf16.gmra.mrb[0].mxu0 %v270
  %v530 = vpop.f32.mrb[0].mxu0
  %v531 = vadd.f32 0.0, %v530
  %v532 = vpop.f32.mrb[0].mxu0
  %v533 = vpop.f32.mrb[0].mxu0
  %v534 = vadd.f32 0.0, %v533
  %v535 = vpop.f32.mrb[0].mxu0
  %536 = vmatprep.mubr.bf16.mxu0 %v273
  %537 = vmatmul.mubr.bf16.gmra.mrb[0].mxu0 %v272
  %v538 = vpop.f32.mrb[0].mxu0
  %v539 = vadd.f32 0.0, %v538
  %v540 = vpop.f32.mrb[0].mxu0
  %v541 = vpop.f32.mrb[0].mxu0
  %v542 = vadd.f32 0.0, %v541
  %v543 = vpop.f32.mrb[0].mxu0
  %544 = vmatprep.mubr.bf16.mxu0 %v275
  %545 = vmatmul.mubr.bf16.gmra.mrb[0].mxu0 %v274
  %v546 = vpop.f32.mrb[0].mxu0
  %v547 = vadd.f32 0.0, %v546
  %v548 = vpop.f32.mrb[0].mxu0
  %v549 = vpop.f32.mrb[0].mxu0
  %v550 = vadd.f32 0.0, %v549
  %v551 = vpop.f32.mrb[0].mxu0
  %552 = vmatprep.mubr.bf16.mxu0 %v277
  %553 = vmatmul.mubr.bf16.gmra.mrb[0].mxu0 %v276
  %v554 = vpop.f32.mrb[0].mxu0
  %v555 = vadd.f32 0.0, %v554
  %v556 = vpop.f32.mrb[0].mxu0
  %v557 = vpop.f32.mrb[0].mxu0
  %v558 = vadd.f32 0.0, %v557
  %v559 = vpop.f32.mrb[0].mxu0
  %560 = vmatprep.mubr.bf16.mxu0 %v279
  %561 = vmatmul.mubr.bf16.gmra.mrb[0].mxu0 %v278
  %v562 = vpop.f32.mrb[0].mxu0
  %v563 = vadd.f32 0.0, %v562
  %v564 = vpop.f32.mrb[0].mxu0
  %v565 = vpop.f32.mrb[0].mxu0
  %v566 = vadd.f32 0.0, %v565
  %v567 = vpop.f32.mrb[0].mxu0
  %568 = vdwg.mxu0
  %v569 = vadd.f32 %v88, %v443
  %v570 = vadd.f32 %v89, %v446
  %v571 = vadd.f32 %v90, %v451
  %v572 = vadd.f32 %v91, %v454
  %v573 = vadd.f32 %v92, %v459
  %v574 = vadd.f32 %v93, %v462
  %v575 = vadd.f32 %v94, %v467
  %v576 = vadd.f32 %v95, %v470
  %v577 = vadd.f32 %v96, %v475
  %v578 = vadd.f32 %v97, %v478
  %v579 = vadd.f32 %v98, %v483
  %v580 = vadd.f32 %v99, %v486
  %v581 = vadd.f32 %v100, %v491
  %v582 = vadd.f32 %v101, %v494
  %v583 = vadd.f32 %v102, %v499
  %v584 = vadd.f32 %v103, %v502
  %v585 = vadd.f32 %v104, %v507
  %v586 = vadd.f32 %v105, %v510
  %v587 = vadd.f32 %v106, %v515
  %v588 = vadd.f32 %v107, %v518
  %v589 = vadd.f32 %v108, %v523
  %v590 = vadd.f32 %v109, %v526
  %v591 = vadd.f32 %v110, %v531
  %v592 = vadd.f32 %v111, %v534
  %v593 = vadd.f32 %v112, %v539
  %v594 = vadd.f32 %v113, %v542
  %v595 = vadd.f32 %v114, %v547
  %v596 = vadd.f32 %v115, %v550
  %v597 = vadd.f32 %v116, %v555
  %v598 = vadd.f32 %v117, %v558
  %v599 = vadd.f32 %v118, %v563
  %v600 = vadd.f32 %v119, %v566
  %601 = vst [vmem:[#allocation2] sm:$0xff] %v569
  %602 = vst [vmem:[#allocation2 + $0x8] sm:$0xff] %v570
  %603 = vst [vmem:[#allocation2 + $0x10] sm:$0xff] %v571
  %604 = vst [vmem:[#allocation2 + $0x18] sm:$0xff] %v572
  %605 = vst [vmem:[#allocation2 + $0x20] sm:$0xff] %v573
  %606 = vst [vmem:[#allocation2 + $0x28] sm:$0xff] %v574
  %607 = vst [vmem:[#allocation2 + $0x30] sm:$0xff] %v575
  %608 = vst [vmem:[#allocation2 + $0x38] sm:$0xff] %v576
  %609 = vst [vmem:[#allocation2 + $0x40] sm:$0xff] %v577
  %610 = vst [vmem:[#allocation2 + $0x48] sm:$0xff] %v578
  %611 = vst [vmem:[#allocation2 + $0x50] sm:$0xff] %v579
  %612 = vst [vmem:[#allocation2 + $0x58] sm:$0xff] %v580
  %613 = vst [vmem:[#allocation2 + $0x60] sm:$0xff] %v581
  %614 = vst [vmem:[#allocation2 + $0x68] sm:$0xff] %v582
  %615 = vst [vmem:[#allocation2 + $0x70] sm:$0xff] %v583
  %616 = vst [vmem:[#allocation2 + $0x78] sm:$0xff] %v584
  %617 = vst [vmem:[#allocation2 + $0x80] sm:$0xff] %v585
  %618 = vst [vmem:[#allocation2 + $0x88] sm:$0xff] %v586
  %619 = vst [vmem:[#allocation2 + $0x90] sm:$0xff] %v587
  %620 = vst [vmem:[#allocation2 + $0x98] sm:$0xff] %v588
  %621 = vst [vmem:[#allocation2 + $0xa0] sm:$0xff] %v589
  %622 = vst [vmem:[#allocation2 + $0xa8] sm:$0xff] %v590
  %623 = vst [vmem:[#allocation2 + $0xb0] sm:$0xff] %v591
  %624 = vst [vmem:[#allocation2 + $0xb8] sm:$0xff] %v592
  %625 = vst [vmem:[#allocation2 + $0xc0] sm:$0xff] %v593
  %626 = vst [vmem:[#allocation2 + $0xc8] sm:$0xff] %v594
  %627 = vst [vmem:[#allocation2 + $0xd0] sm:$0xff] %v595
  %628 = vst [vmem:[#allocation2 + $0xd8] sm:$0xff] %v596
  %629 = vst [vmem:[#allocation2 + $0xe0] sm:$0xff] %v597
  %630 = vst [vmem:[#allocation2 + $0xe8] sm:$0xff] %v598
  %631 = vst [vmem:[#allocation2 + $0xf0] sm:$0xff] %v599
  %632 = vst [vmem:[#allocation2 + $0xf8] sm:$0xff] %v600
  // Predicated region
  $region18: #{gcn2_forward.7} parent=0 // pred_check
    %p633 = pneg %p15
  $region19: #{gcn2_forward.7} parent=0 // pred_check_branch
    %635 = sbr.rel (%p633) target = $region21
  $region20: #{gcn2_forward.7} parent=0 // pred_region
    %v636 = vld [vmem:[#allocation2] sm:$0xff]
    %v637 = vld [vmem:[#allocation2 + $0x8] sm:$0xff]
    %v638 = vld [vmem:[#allocation2 + $0x10] sm:$0xff]
    %v639 = vld [vmem:[#allocation2 + $0x18] sm:$0xff]
    %v640 = vld [vmem:[#allocation2 + $0x20] sm:$0xff]
    %v641 = vld [vmem:[#allocation2 + $0x28] sm:$0xff]
    %v642 = vld [vmem:[#allocation2 + $0x30] sm:$0xff]
    %v643 = vld [vmem:[#allocation2 + $0x38] sm:$0xff]
    %v644 = vld [vmem:[#allocation2 + $0x40] sm:$0xff]
    %v645 = vld [vmem:[#allocation2 + $0x48] sm:$0xff]
    %v646 = vld [vmem:[#allocation2 + $0x50] sm:$0xff]
    %v647 = vld [vmem:[#allocation2 + $0x58] sm:$0xff]
    %v648 = vld [vmem:[#allocation2 + $0x60] sm:$0xff]
    %v649 = vld [vmem:[#allocation2 + $0x68] sm:$0xff]
    %v650 = vld [vmem:[#allocation2 + $0x70] sm:$0xff]
    %v651 = vld [vmem:[#allocation2 + $0x78] sm:$0xff]
    %v652 = vld [vmem:[#allocation2 + $0x80] sm:$0xff]
    %v653 = vld [vmem:[#allocation2 + $0x88] sm:$0xff]
    %v654 = vld [vmem:[#allocation2 + $0x90] sm:$0xff]
    %v655 = vld [vmem:[#allocation2 + $0x98] sm:$0xff]
    %v656 = vld [vmem:[#allocation2 + $0xa0] sm:$0xff]
    %v657 = vld [vmem:[#allocation2 + $0xa8] sm:$0xff]
    %v658 = vld [vmem:[#allocation2 + $0xb0] sm:$0xff]
    %v659 = vld [vmem:[#allocation2 + $0xb8] sm:$0xff]
    %v660 = vld [vmem:[#allocation2 + $0xc0] sm:$0xff]
    %v661 = vld [vmem:[#allocation2 + $0xc8] sm:$0xff]
    %v662 = vld [vmem:[#allocation2 + $0xd0] sm:$0xff]
    %v663 = vld [vmem:[#allocation2 + $0xd8] sm:$0xff]
    %v664 = vld [vmem:[#allocation2 + $0xe0] sm:$0xff]
    %v665 = vld [vmem:[#allocation2 + $0xe8] sm:$0xff]
    %v666 = vld [vmem:[#allocation2 + $0xf0] sm:$0xff]
    %v667 = vld [vmem:[#allocation2 + $0xf8] sm:$0xff]
    %v668 = vld [vmem:[%s2] sm:$0x1]
    %v670 = vlaneseq
    %v671 = vshrl.u32 %v670, 7
    %v672 = vsub.s32 0, %v671
    %v673 = vrot.slane %v668, %v672
    %v675 = vadd.f32 %v636, %v673
    %v676 = vadd.f32 %v637, %v673
    %v677 = vadd.f32 %v638, %v673
    %v678 = vadd.f32 %v639, %v673
    %v679 = vadd.f32 %v640, %v673
    %v680 = vadd.f32 %v641, %v673
    %v681 = vadd.f32 %v642, %v673
    %v682 = vadd.f32 %v643, %v673
    %v683 = vadd.f32 %v644, %v673
    %v684 = vadd.f32 %v645, %v673
    %v685 = vadd.f32 %v646, %v673
    %v686 = vadd.f32 %v647, %v673
    %v687 = vadd.f32 %v648, %v673
    %v688 = vadd.f32 %v649, %v673
    %v689 = vadd.f32 %v650, %v673
    %v690 = vadd.f32 %v651, %v673
    %v691 = vadd.f32 %v652, %v673
    %v692 = vadd.f32 %v653, %v673
    %v693 = vadd.f32 %v654, %v673
    %v694 = vadd.f32 %v655, %v673
    %v695 = vadd.f32 %v656, %v673
    %v696 = vadd.f32 %v657, %v673
    %v697 = vadd.f32 %v658, %v673
    %v698 = vadd.f32 %v659, %v673
    %v699 = vadd.f32 %v660, %v673
    %v700 = vadd.f32 %v661, %v673
    %v701 = vadd.f32 %v662, %v673
    %v702 = vadd.f32 %v663, %v673
    %v703 = vadd.f32 %v664, %v673
    %v704 = vadd.f32 %v665, %v673
    %v705 = vadd.f32 %v666, %v673
    %v706 = vadd.f32 %v667, %v673
    %707 = vst [vmem:[%s3] sm:$0xff] %v675
    %708 = vst [vmem:[%s3 + $0x8] sm:$0xff] %v676
    %709 = vst [vmem:[%s3 + $0x10] sm:$0xff] %v677
    %710 = vst [vmem:[%s3 + $0x18] sm:$0xff] %v678
    %711 = vst [vmem:[%s3 + $0x20] sm:$0xff] %v679
    %712 = vst [vmem:[%s3 + $0x28] sm:$0xff] %v680
    %713 = vst [vmem:[%s3 + $0x30] sm:$0xff] %v681
    %714 = vst [vmem:[%s3 + $0x38] sm:$0xff] %v682
    %715 = vst [vmem:[%s3 + $0x40] sm:$0xff] %v683
    %716 = vst [vmem:[%s3 + $0x48] sm:$0xff] %v684
    %717 = vst [vmem:[%s3 + $0x50] sm:$0xff] %v685
    %718 = vst [vmem:[%s3 + $0x58] sm:$0xff] %v686
    %719 = vst [vmem:[%s3 + $0x60] sm:$0xff] %v687
    %720 = vst [vmem:[%s3 + $0x68] sm:$0xff] %v688
    %721 = vst [vmem:[%s3 + $0x70] sm:$0xff] %v689
    %722 = vst [vmem:[%s3 + $0x78] sm:$0xff] %v690
    %723 = vst [vmem:[%s3 + $0x80] sm:$0xff] %v691
    %724 = vst [vmem:[%s3 + $0x88] sm:$0xff] %v692
    %725 = vst [vmem:[%s3 + $0x90] sm:$0xff] %v693
    %726 = vst [vmem:[%s3 + $0x98] sm:$0xff] %v694
    %727 = vst [vmem:[%s3 + $0xa0] sm:$0xff] %v695
    %728 = vst [vmem:[%s3 + $0xa8] sm:$0xff] %v696
    %729 = vst [vmem:[%s3 + $0xb0] sm:$0xff] %v697
    %730 = vst [vmem:[%s3 + $0xb8] sm:$0xff] %v698
    %731 = vst [vmem:[%s3 + $0xc0] sm:$0xff] %v699
    %732 = vst [vmem:[%s3 + $0xc8] sm:$0xff] %v700
    %733 = vst [vmem:[%s3 + $0xd0] sm:$0xff] %v701
    %734 = vst [vmem:[%s3 + $0xd8] sm:$0xff] %v702
    %735 = vst [vmem:[%s3 + $0xe0] sm:$0xff] %v703
    %736 = vst [vmem:[%s3 + $0xe8] sm:$0xff] %v704
    %737 = vst [vmem:[%s3 + $0xf0] sm:$0xff] %v705
    %738 = vst [vmem:[%s3 + $0xf8] sm:$0xff] %v706
  $region21: #{gcn2_forward.7} parent=0 // pred_fallthru
    _
  // Predicated region
  $region22: #{gcn2_forward.7} parent=0 // pred_check
    _
  $region23: #{gcn2_forward.7} parent=0 // pred_check_branch
    %740 = sbr.rel (0) target = $region25
  $region24: #{gcn2_forward.7} parent=0 // pred_region
    _
  $region25: #{gcn2_forward.7} parent=0 // pred_fallthru
    _
  // Predicated region
  $region26: #{gcn2_forward.7} parent=0 // pred_check
    _
  $region27: #{gcn2_forward.7} parent=0 // pred_check_branch
    %742 = sbr.rel (0) target = $region29
  $region28: #{gcn2_forward.7} parent=0 // pred_region
    _
  $region29: #{gcn2_forward.7} parent=0 // pred_fallthru
    _

</llo_original>
